<compile_context>
chip_gen: v7x
topology: tpu7x:2x2x1
jax: 0.10.0
libtpu: 0.0.40
codegen_flags: <defaults>
</compile_context>

<pallas_src>
import functools

import jax
import jax.numpy as jnp
from jax.experimental import pallas as pl
from jax.experimental.pallas import tpu as pltpu


# ----------------------------- helpers --------------------------------------

_TM_MAX = 512                    # max M (row) tile
_TK_SINGLE = 2048                # K <= this -> single K tile (no accumulator)
_SMALL_M = 64                    # M <= this -> plain jnp (overhead dominated)
_SMALL_BN = 4096                 # elements below this -> BN apply in plain jnp
_VMEM_LIMIT = 32 * 1024 * 1024   # safe on v5e/v6e/v7x


def _round_up(x, m):
    return ((x + m - 1) // m) * m


def _pick_tm(m):
    """Row tile: whole array when small; otherwise >= 2 tiles so both v7x
    TensorCores get work on the 'parallel' grid axis."""
    if m <= 256:
        return _round_up(m, 8)
    return min(_TM_MAX, max(256, _round_up((m + 1) // 2, 8)))


def _pick_tk(k):
    for t in (2048, 1024, 512, 256, 128):
        if k % t == 0:
            return t
    return k


def _apply_pre_act(a, pre_act):
    # Computed directly in the A dtype (bf16 VALU on v6e/v7x; emulated on v5e).
    if pre_act == "lrelu":
        return jnp.where(a >= 0, a, a * 0.2)       # LeakyReLU(0.2)
    if pre_act == "relu":
        return jnp.maximum(a, 0)
    return a


def _apply_post_act(y, post_act):
    if post_act == "tanh":
        return jnp.tanh(y)
    if post_act == "tanh_sigmoid":                 # nn.Tanh() then torch.sigmoid()
        return jax.nn.sigmoid(jnp.tanh(y))
    return y


def _emit_stats(y, psum_ref, psq_ref, ragged, row_base, m_total):
    if ragged:  # mask garbage rows of a partial last M tile
        rows = jax.lax.broadcasted_iota(jnp.int32, y.shape, 0) + row_base
        y = jnp.where(rows < m_total, y, 0.0)
    psum_ref[...] = jnp.broadcast_to(
        jnp.sum(y, axis=0, keepdims=True), psum_ref.shape)
    psq_ref[...] = jnp.broadcast_to(
        jnp.sum(y * y, axis=0, keepdims=True), psq_ref.shape)


# ----------------------- fused conv matmul kernels ---------------------------

def _mm_kernel_single_k(a_ref, b_ref, bias_ref, *out_refs, pre_act, post_act,
                        with_stats, m_total, tm, ragged):
    """Whole-K tile: compute and store directly (no scratch accumulator)."""
    if with_stats:
        o_ref, psum_ref, psq_ref = out_refs
    else:
        (o_ref,) = out_refs
    # program_id only at the kernel top level (never inside pl.when bodies).
    row_base = pl.program_id(0) * tm if ragged else 0
    a = _apply_pre_act(a_ref[...], pre_act)
    y = jnp.dot(a, b_ref[...], preferred_element_type=jnp.float32)
    y = y + bias_ref[...]
    y = _apply_post_act(y, post_act)
    o_ref[...] = y.astype(o_ref.dtype)
    if with_stats:
        _emit_stats(y, psum_ref, psq_ref, ragged, row_base, m_total)


def _mm_kernel_multi_k(a_ref, b_ref, bias_ref, *rest, pre_act, post_act,
                       with_stats, m_total, tm, tk, ragged, b_resident):
    """K-tiled matmul with an f32 VMEM accumulator (K > _TK_SINGLE)."""
    if with_stats:
        o_ref, psum_ref, psq_ref, acc_ref = rest
    else:
        o_ref, acc_ref = rest
        psum_ref = psq_ref = None
    # All program_id / num_programs hoisted to the top level of the kernel.
    k = pl.program_id(1)
    nk = pl.num_programs(1)
    row_base = pl.program_id(0) * tm if ragged else 0

    @pl.when(k == 0)
    def _init():
        acc_ref[...] = jnp.zeros_like(acc_ref)

    a = _apply_pre_act(a_ref[...], pre_act)
    if b_resident:   # full-K weight block kept resident; slice the K tile
        b = b_ref[pl.ds(pl.multiple_of(k * tk, tk), tk), :]
    else:
        b = b_ref[...]
    acc_ref[...] += jnp.dot(a, b, preferred_element_type=jnp.float32)

    @pl.when(k == nk - 1)
    def _finalize():
        y = acc_ref[...] + bias_ref[...]
        y = _apply_post_act(y, post_act)
        o_ref[...] = y.astype(o_ref.dtype)
        if with_stats:
            _emit_stats(y, psum_ref, psq_ref, ragged, row_base, m_total)


def _dense_ref(a, b, bias, pre_act, post_act, with_stats, out_dtype):
    """Plain-jnp fallback for tiny bottleneck layers (same fused semantics)."""
    a = _apply_pre_act(a.astype(jnp.float32), pre_act)
    y = jnp.dot(a.astype(jnp.bfloat16), b, preferred_element_type=jnp.float32)
    y = _apply_post_act(y + bias[None, :], post_act)
    out = y.astype(out_dtype)
    if with_stats:
        return out, jnp.sum(y, axis=0), jnp.sum(y * y, axis=0)
    return out, None, None


def pallas_matmul_fused(a_bf16, b_bf16, bias_f32, *, pre_act="none",
                        post_act="none", with_stats=False,
                        out_dtype=jnp.bfloat16):
    """(M,K)@(K,N)+bias with fused pre/post activation and optional BN stats.

    Returns (out[M,N] out_dtype, sum_c[N] f32 | None, sumsq_c[N] f32 | None)."""
    M, K = a_bf16.shape
    Kb, Nc = b_bf16.shape
    assert K == Kb

    if M <= _SMALL_M:          # deep bottleneck layers: launch overhead wins
        return _dense_ref(a_bf16, b_bf16, bias_f32, pre_act, post_act,
                          with_stats, out_dtype)

    TM = _pick_tm(M)
    nm = pl.cdiv(M, TM)
    ragged = (M % TM) != 0
    single_k = (K <= _TK_SINGLE) or (K % 128 != 0)

    out_shapes = [jax.ShapeDtypeStruct((M, Nc), out_dtype)]
    if with_stats:   # 8 identical rows per M tile keep the sublane dim legal
        out_shapes += [jax.ShapeDtypeStruct((nm * 8, Nc), jnp.float32)] * 2

    if single_k:
        kernel = functools.partial(
            _mm_kernel_single_k, pre_act=pre_act, post_act=post_act,
            with_stats=with_stats, m_total=M, tm=TM, ragged=ragged)
        grid = (nm,)
        in_specs = [pl.BlockSpec((TM, K), lambda i: (i, 0)),
                    pl.BlockSpec((K, Nc), lambda i: (0, 0)),
                    pl.BlockSpec((1, Nc), lambda i: (0, 0))]
        out_specs = [pl.BlockSpec((TM, Nc), lambda i: (i, 0))]
        if with_stats:
            out_specs += [pl.BlockSpec((8, Nc), lambda i: (i, 0))] * 2
        scratch = []
        dims = ("parallel",)
    else:
        tk = _pick_tk(K)
        nk = K // tk
        b_resident = (K * Nc * 2) <= (4 * 1024 * 1024)
        kernel = functools.partial(
            _mm_kernel_multi_k, pre_act=pre_act, post_act=post_act,
            with_stats=with_stats, m_total=M, tm=TM, tk=tk, ragged=ragged,
            b_resident=b_resident)
        grid = (nm, nk)
        b_spec = (pl.BlockSpec((K, Nc), lambda i, k: (0, 0)) if b_resident
                  else pl.BlockSpec((tk, Nc), lambda i, k: (k, 0)))
        in_specs = [pl.BlockSpec((TM, tk), lambda i, k: (i, k)),
                    b_spec,
                    pl.BlockSpec((1, Nc), lambda i, k: (0, 0))]
        out_specs = [pl.BlockSpec((TM, Nc), lambda i, k: (i, 0))]
        if with_stats:
            out_specs += [pl.BlockSpec((8, Nc), lambda i, k: (i, 0))] * 2
        scratch = [pltpu.VMEM((TM, Nc), jnp.float32)]
        dims = ("parallel", "arbitrary")

    outs = pl.pallas_call(
        kernel,
        out_shape=tuple(out_shapes),
        grid=grid,
        in_specs=in_specs,
        out_specs=tuple(out_specs),
        scratch_shapes=scratch,
        compiler_params=pltpu.CompilerParams(
            dimension_semantics=dims, vmem_limit_bytes=_VMEM_LIMIT),
    )(a_bf16, b_bf16, bias_f32.reshape(1, Nc))

    if with_stats:
        o, ps8, pq8 = outs
        sum_c = ps8.reshape(nm, 8, Nc)[:, 0, :].sum(axis=0)
        sq_c = pq8.reshape(nm, 8, Nc)[:, 0, :].sum(axis=0)
        return o, sum_c, sq_c
    return outs[0], None, None


# ------------------------ tiled BatchNorm apply kernel -----------------------

def _scale_shift_kernel(x_ref, sc_ref, sh_ref, o_ref):
    y = x_ref[...].astype(jnp.float32) * sc_ref[...] + sh_ref[...]
    o_ref[...] = y.astype(o_ref.dtype)


def pallas_scale_shift(x_nhwc, scale, shift, out_dtype=jnp.bfloat16):
    N, H, W, C = x_nhwc.shape
    M = N * H * W
    if M * C < _SMALL_BN or M % 8 != 0:   # tiny deep layers: plain jnp
        return (x_nhwc.astype(jnp.float32) * scale + shift).astype(out_dtype)
    # lane-dense repack: (M, C) -> (M//g, g*C) with g*C a 128-multiple if possible
    g = 1
    if C < 128 and 128 % C == 0 and M % (128 // C) == 0:
        g = 128 // C
    Mg, Cg = M // g, g * C
    x2 = x_nhwc.reshape(Mg, Cg)
    sc = jnp.tile(scale, g).reshape(1, Cg)
    sh = jnp.tile(shift, g).reshape(1, Cg)
    TR = _pick_tm(Mg)
    out = pl.pallas_call(
        _scale_shift_kernel,
        out_shape=jax.ShapeDtypeStruct((Mg, Cg), out_dtype),
        grid=(pl.cdiv(Mg, TR),),
        in_specs=[pl.BlockSpec((TR, Cg), lambda i: (i, 0)),
                  pl.BlockSpec((1, Cg), lambda i: (0, 0)),
                  pl.BlockSpec((1, Cg), lambda i: (0, 0))],
        out_specs=pl.BlockSpec((TR, Cg), lambda i: (i, 0)),
        compiler_params=pltpu.CompilerParams(
            dimension_semantics=("parallel",), vmem_limit_bytes=_VMEM_LIMIT),
    )(x2, sc, sh)
    return out.reshape(N, H, W, C)


def apply_batchnorm(h_nhwc, sum_c, sumsq_c, count, gamma, beta):
    """BatchNorm2d, training-mode (batch statistics, biased var, eps=1e-5)."""
    mean = sum_c / count
    var = jnp.maximum(sumsq_c / count - mean * mean, 0.0)
    scale = gamma * jax.lax.rsqrt(var + 1e-5)
    shift = beta - mean * scale
    return pallas_scale_shift(h_nhwc, scale, shift)


# ----------------------- conv glue (im2col in plain JAX) ---------------------

def conv2d_s2_fused(x, w_oihw, bias, *, pre_act, with_stats,
                    out_dtype=jnp.bfloat16):
    """Conv2d(k=4,s=2,p=1). x: NHWC, w: (Cout,Cin,4,4). pre_act fused."""
    N, H, W, Cin = x.shape
    Cout = w_oihw.shape[0]
    Ho, Wo = H // 2, W // 2
    xp = jnp.pad(x, ((0, 0), (1, 1), (1, 1), (0, 0)))
    cols = [xp[:, kh:kh + 2 * Ho:2, kw:kw + 2 * Wo:2, :]
            for kh in range(4) for kw in range(4)]
    A = (jnp.stack(cols, axis=3)
         .reshape(N * Ho * Wo, 16 * Cin).astype(jnp.bfloat16))
    Wm = (jnp.transpose(w_oihw, (2, 3, 1, 0))
          .reshape(16 * Cin, Cout).astype(jnp.bfloat16))
    o, ps, pq = pallas_matmul_fused(A, Wm, bias, pre_act=pre_act,
                                    post_act="none", with_stats=with_stats,
                                    out_dtype=out_dtype)
    return o.reshape(N, Ho, Wo, Cout), ps, pq


# (offset-in-padded-input, kernel-tap) pairs per output-row/col parity for the
# sub-pixel decomposition of ConvTranspose2d(k=4, s=2, p=1).
_PHASE_TAPS = {0: ((0, 3), (1, 1)), 1: ((1, 2), (2, 0))}


def conv_transpose2d_s2_fused(x, w_iohw, bias, *, pre_act, post_act,
                              with_stats, out_dtype=jnp.bfloat16):
    """ConvTranspose2d(k=4,s=2,p=1) as ONE matmul: shared 9-offset im2col A,
    the 4 sub-pixel phases packed along N (zero taps for unused offsets),
    followed by an XLA pixel-shuffle. x: NHWC, w: (Cin,Cout,4,4)."""
    N, H, W, Cin = x.shape
    Cout = w_iohw.shape[1]
    xp = jnp.pad(x, ((0, 0), (1, 1), (1, 1), (0, 0)))
    cols = [xp[:, dr:dr + H, dc:dc + W, :] for dr in range(3) for dc in range(3)]
    A = (jnp.stack(cols, axis=3)
         .reshape(N * H * W, 9 * Cin).astype(jnp.bfloat16))

    B = jnp.zeros((3, 3, Cin, 4, Cout), jnp.float32)
    for ph in range(2):
        for pw in range(2):
            p = ph * 2 + pw
            for (dr, ka) in _PHASE_TAPS[ph]:
                for (dc, kb) in _PHASE_TAPS[pw]:
                    B = B.at[dr, dc, :, p, :].set(w_iohw[:, :, ka, kb])
    Bm = B.reshape(9 * Cin, 4 * Cout).astype(jnp.bfloat16)
    bias4 = jnp.tile(bias, 4)

    o, ps, pq = pallas_matmul_fused(A, Bm, bias4, pre_act=pre_act,
                                    post_act=post_act, with_stats=with_stats,
                                    out_dtype=out_dtype)
    # de-interleave phases: (M, 4*Cout) -> (N, 2H, 2W, Cout)
    y = o.reshape(N, H, W, 2, 2, Cout)
    y = jnp.transpose(y, (0, 1, 3, 2, 4, 5)).reshape(N, 2 * H, 2 * W, Cout)
    if with_stats:
        return y, ps.reshape(4, Cout).sum(axis=0), pq.reshape(4, Cout).sum(axis=0)
    return y, None, None


# ------------------------- parameters & forward ------------------------------

def _init_block(key, input_nc, inner_nc, outer_nc, outermost, innermost, sub):
    ks = jax.random.split(key, 3)
    up_in = inner_nc if innermost else inner_nc * 2
    p = dict(outermost=outermost, innermost=innermost, sub=sub)
    # downconv: Conv2d(input_nc, inner_nc, 4, 2, 1, bias=False)  (BatchNorm norm)
    p["dw"] = 0.05 * jax.random.normal(ks[0], (inner_nc, input_nc, 4, 4), jnp.float32)
    p["db"] = jnp.zeros((inner_nc,), jnp.float32)
    # upconv: ConvTranspose2d(up_in, outer_nc, 4, 2, 1, bias=outermost)
    p["uw"] = 0.05 * jax.random.normal(ks[1], (up_in, outer_nc, 4, 4), jnp.float32)
    if outermost:
        p["ub"] = 0.05 * jax.random.normal(ks[2], (outer_nc,), jnp.float32)
    else:
        p["ub"] = jnp.zeros((outer_nc,), jnp.float32)
    # norms (PyTorch BatchNorm2d default affine init: weight=1, bias=0)
    if (not outermost) and (not innermost):
        p["dng"] = jnp.ones((inner_nc,), jnp.float32)
        p["dnb"] = jnp.zeros((inner_nc,), jnp.float32)
    if not outermost:
        p["ung"] = jnp.ones((outer_nc,), jnp.float32)
        p["unb"] = jnp.zeros((outer_nc,), jnp.float32)
    return p


def build_unet_params(key, input_nc, output_nc, num_downs, ngf):
    key, k = jax.random.split(key)
    blk = _init_block(k, ngf * 8, ngf * 8, ngf * 8, False, True, None)   # innermost
    for _ in range(num_downs - 5):
        key, k = jax.random.split(key)
        blk = _init_block(k, ngf * 8, ngf * 8, ngf * 8, False, False, blk)
    for mult in (4, 2, 1):
        key, k = jax.random.split(key)
        blk = _init_block(k, ngf * mult, ngf * mult * 2, ngf * mult, False, False, blk)
    key, k = jax.random.split(key)
    blk = _init_block(k, input_nc, ngf, output_nc, True, False, blk)     # outermost
    return blk


def block_forward(p, x, final_post):
    # --- down path (LeakyReLU fused into the conv matmul as pre-act) ---
    if p["outermost"]:
        h, _, _ = conv2d_s2_fused(x, p["dw"], p["db"],
                                  pre_act="none", with_stats=False)
    elif p["innermost"]:
        h, _, _ = conv2d_s2_fused(x, p["dw"], p["db"],
                                  pre_act="lrelu", with_stats=False)
    else:
        h, ps, pq = conv2d_s2_fused(x, p["dw"], p["db"],
                                    pre_act="lrelu", with_stats=True)
        cnt = h.shape[0] * h.shape[1] * h.shape[2]
        h = apply_batchnorm(h, ps, pq, cnt, p["dng"], p["dnb"])
    # --- submodule ---
    if not p["innermost"]:
        h = block_forward(p["sub"], h, final_post)
    # --- up path (ReLU fused as pre-act; Tanh/Sigmoid fused as epilogue) ---
    if p["outermost"]:
        y, _, _ = conv_transpose2d_s2_fused(h, p["uw"], p["ub"],
                                            pre_act="relu", post_act=final_post,
                                            with_stats=False,
                                            out_dtype=jnp.float32)
        return y
    y, ps, pq = conv_transpose2d_s2_fused(h, p["uw"], p["ub"],
                                          pre_act="relu", post_act="none",
                                          with_stats=True)
    cnt = y.shape[0] * y.shape[1] * y.shape[2]
    y = apply_batchnorm(y, ps, pq, cnt, p["ung"], p["unb"])
    return jnp.concatenate([x, y], axis=-1)          # skip connection


def unet_generator_forward(params, x_nchw, use_sigmoid_output=False):
    x = jnp.transpose(x_nchw, (0, 2, 3, 1))          # NCHW -> NHWC
    final_post = "tanh_sigmoid" if use_sigmoid_output else "tanh"
    y = block_forward(params, x, final_post)
    return jnp.transpose(y, (0, 3, 1, 2))            # NHWC -> NCHW


# --------------------------------- main ---------------------------------------

if __name__ == "__main__":
    key = jax.random.PRNGKey(0)
    kx, kp = jax.random.split(key)

    input_nc, output_nc, num_downs, ngf = 4, 4, 5, 8
    N, H, W = 2, 32, 32                              # 2**num_downs -> 1x1 bottleneck

    x = jax.random.normal(kx, (N, input_nc, H, W), jnp.float32)
    params = build_unet_params(kp, input_nc, output_nc, num_downs, ngf)

    fwd = jax.jit(lambda xin: unet_generator_forward(params, xin,
                                                     use_sigmoid_output=False))
    out = jax.block_until_ready(fwd(x))

    assert out.shape == (N, output_nc, H, W), out.shape
    assert bool(jnp.all(jnp.isfinite(out)))
    print("KERNEL_OK")
</pallas_src>

<mosaic_0001>
module attributes {stable_mosaic.version = 11 : i64} {
  func.func @_mm_kernel_single_k(%arg0: i32, %arg1: memref<256x64xbf16, #tpu.memory_space<vmem>>, %arg2: memref<64x8xbf16, #tpu.memory_space<vmem>>, %arg3: memref<1x8xf32, #tpu.memory_space<vmem>>, %arg4: memref<256x8xbf16, #tpu.memory_space<vmem>>) attributes {dimension_semantics = [#tpu.dimension_semantics<parallel>], iteration_bounds = array<i64: 2>, scalar_prefetch = 0 : i64, scratch_operands = 0 : i64, tpu.core_type = #tpu.core_type<tc>, window_params = [{transform_indices = @transform_0, window_bounds = array<i64: 256, 64>}, {pipeline_mode = #tpu.pipeline_mode<synchronous>, transform_indices = @transform_1, window_bounds = array<i64: 64, 8>}, {pipeline_mode = #tpu.pipeline_mode<synchronous>, transform_indices = @transform_2, window_bounds = array<i64: 1, 8>}, {transform_indices = @transform_3, window_bounds = array<i64: 256, 8>}]} {
    %c0 = arith.constant 0 : index
    %c0_0 = arith.constant 0 : index
    %0 = vector.load %arg1[%c0, %c0_0] : memref<256x64xbf16, #tpu.memory_space<vmem>>, vector<256x64xbf16>
    %c0_1 = arith.constant 0 : index
    %c0_2 = arith.constant 0 : index
    %1 = vector.load %arg2[%c0_1, %c0_2] : memref<64x8xbf16, #tpu.memory_space<vmem>>, vector<64x8xbf16>
    %cst = arith.constant dense<0.000000e+00> : vector<256x8xf32>
    %2 = tpu.matmul %0, %1, %cst {dimension_numbers = #tpu.dot_dimension_numbers<[1], [0], [0], [1], [0, 0, 1, 1], [], []>} : vector<256x64xbf16>, vector<64x8xbf16>, vector<256x8xf32> -> vector<256x8xf32>
    %c0_3 = arith.constant 0 : index
    %c0_4 = arith.constant 0 : index
    %3 = vector.load %arg3[%c0_3, %c0_4] : memref<1x8xf32, #tpu.memory_space<vmem>>, vector<1x8xf32>
    %4 = vector.broadcast %3 : vector<1x8xf32> to vector<256x8xf32>
    %5 = arith.addf %2, %4 : vector<256x8xf32>
    %6 = arith.truncf %5 : vector<256x8xf32> to vector<256x8xbf16>
    %c0_5 = arith.constant 0 : index
    %c0_6 = arith.constant 0 : index
    %7 = vector.load %arg4[%c0_5, %c0_6] : memref<256x8xbf16, #tpu.memory_space<vmem>>, vector<256x8xbf16>
    tpu.vector_store %arg4[%c0_5, %c0_6], %6 {strides = array<i32>} : memref<256x8xbf16, #tpu.memory_space<vmem>>, vector<256x8xbf16>,
    return
  }
  func.func @transform_0(%arg0: i32) -> (i32, i32) {
    %c0_i32 = arith.constant 0 : i32
    %c0_i32_0 = arith.constant 0 : i32
    return %arg0, %c0_i32 : i32, i32
  }
  func.func @transform_1(%arg0: i32) -> (i32, i32) {
    %c0_i32 = arith.constant 0 : i32
    %c0_i32_0 = arith.constant 0 : i32
    %c0_i32_1 = arith.constant 0 : i32
    return %c0_i32, %c0_i32_0 : i32, i32
  }
  func.func @transform_2(%arg0: i32) -> (i32, i32) {
    %c0_i32 = arith.constant 0 : i32
    %c0_i32_0 = arith.constant 0 : i32
    %c0_i32_1 = arith.constant 0 : i32
    return %c0_i32, %c0_i32_0 : i32, i32
  }
  func.func @transform_3(%arg0: i32) -> (i32, i32) {
    %c0_i32 = arith.constant 0 : i32
    %c0_i32_0 = arith.constant 0 : i32
    return %arg0, %c0_i32 : i32, i32
  }
}

module attributes {stable_mosaic.version = 11 : i64} {
  func.func @_mm_kernel_single_k(%arg0: i32, %arg1: memref<128x128xbf16, #tpu.memory_space<vmem>>, %arg2: memref<128x16xbf16, #tpu.memory_space<vmem>>, %arg3: memref<1x16xf32, #tpu.memory_space<vmem>>, %arg4: memref<128x16xbf16, #tpu.memory_space<vmem>>, %arg5: memref<8x16xf32, #tpu.memory_space<vmem>>, %arg6: memref<8x16xf32, #tpu.memory_space<vmem>>) attributes {dimension_semantics = [#tpu.dimension_semantics<parallel>], iteration_bounds = array<i64: 1>, scalar_prefetch = 0 : i64, scratch_operands = 0 : i64, tpu.core_type = #tpu.core_type<tc>, window_params = [{transform_indices = @transform_0, window_bounds = array<i64: 128, 128>}, {pipeline_mode = #tpu.pipeline_mode<synchronous>, transform_indices = @transform_1, window_bounds = array<i64: 128, 16>}, {pipeline_mode = #tpu.pipeline_mode<synchronous>, transform_indices = @transform_2, window_bounds = array<i64: 1, 16>}, {transform_indices = @transform_3, window_bounds = array<i64: 128, 16>}, {transform_indices = @transform_4, window_bounds = array<i64: 8, 16>}, {transform_indices = @transform_5, window_bounds = array<i64: 8, 16>}]} {
    %c0 = arith.constant 0 : index
    %c0_0 = arith.constant 0 : index
    %0 = vector.load %arg1[%c0, %c0_0] : memref<128x128xbf16, #tpu.memory_space<vmem>>, vector<128x128xbf16>
    %cst = arith.constant 0.000000e+00 : bf16
    %1 = vector.broadcast %cst : bf16 to vector<128x128xbf16>
    %2 = arith.cmpf oge, %0, %1 : vector<128x128xbf16>
    %cst_1 = arith.constant 2.001950e-01 : bf16
    %3 = vector.broadcast %cst_1 : bf16 to vector<128x128xbf16>
    %4 = arith.mulf %0, %3 : vector<128x128xbf16>
    %5 = arith.select %2, %0, %4 : vector<128x128xi1>, vector<128x128xbf16>
    %c0_2 = arith.constant 0 : index
    %c0_3 = arith.constant 0 : index
    %6 = vector.load %arg2[%c0_2, %c0_3] : memref<128x16xbf16, #tpu.memory_space<vmem>>, vector<128x16xbf16>
    %cst_4 = arith.constant dense<0.000000e+00> : vector<128x16xf32>
    %7 = tpu.matmul %5, %6, %cst_4 {dimension_numbers = #tpu.dot_dimension_numbers<[1], [0], [0], [1], [0, 0, 1, 1], [], []>} : vector<128x128xbf16>, vector<128x16xbf16>, vector<128x16xf32> -> vector<128x16xf32>
    %c0_5 = arith.constant 0 : index
    %c0_6 = arith.constant 0 : index
    %8 = vector.load %arg3[%c0_5, %c0_6] : memref<1x16xf32, #tpu.memory_space<vmem>>, vector<1x16xf32>
    %9 = vector.broadcast %8 : vector<1x16xf32> to vector<128x16xf32>
    %10 = arith.addf %7, %9 : vector<128x16xf32>
    %11 = arith.truncf %10 : vector<128x16xf32> to vector<128x16xbf16>
    %c0_7 = arith.constant 0 : index
    %c0_8 = arith.constant 0 : index
    %12 = vector.load %arg4[%c0_7, %c0_8] : memref<128x16xbf16, #tpu.memory_space<vmem>>, vector<128x16xbf16>
    tpu.vector_store %arg4[%c0_7, %c0_8], %11 {strides = array<i32>} : memref<128x16xbf16, #tpu.memory_space<vmem>>, vector<128x16xbf16>,
    %cst_9 = arith.constant dense<0.000000e+00> : vector<16xf32>
    %13 = vector.multi_reduction <add>, %10, %cst_9 [0] : vector<128x16xf32> to vector<16xf32>
    %14 = vector.shape_cast %13 : vector<16xf32> to vector<1x16xf32>
    %15 = vector.shape_cast %14 : vector<1x16xf32> to vector<1x16xf32>
    %16 = vector.broadcast %15 : vector<1x16xf32> to vector<8x16xf32>
    %c0_10 = arith.constant 0 : index
    %c0_11 = arith.constant 0 : index
    %17 = vector.load %arg5[%c0_10, %c0_11] : memref<8x16xf32, #tpu.memory_space<vmem>>, vector<8x16xf32>
    tpu.vector_store %arg5[%c0_10, %c0_11], %16 {strides = array<i32>} : memref<8x16xf32, #tpu.memory_space<vmem>>, vector<8x16xf32>,
    %18 = arith.mulf %10, %10 : vector<128x16xf32>
    %cst_12 = arith.constant dense<0.000000e+00> : vector<16xf32>
    %19 = vector.multi_reduction <add>, %18, %cst_12 [0] : vector<128x16xf32> to vector<16xf32>
    %20 = vector.shape_cast %19 : vector<16xf32> to vector<1x16xf32>
    %21 = vector.shape_cast %20 : vector<1x16xf32> to vector<1x16xf32>
    %22 = vector.broadcast %21 : vector<1x16xf32> to vector<8x16xf32>
    %c0_13 = arith.constant 0 : index
    %c0_14 = arith.constant 0 : index
    %23 = vector.load %arg6[%c0_13, %c0_14] : memref<8x16xf32, #tpu.memory_space<vmem>>, vector<8x16xf32>
    tpu.vector_store %arg6[%c0_13, %c0_14], %22 {strides = array<i32>} : memref<8x16xf32, #tpu.memory_space<vmem>>, vector<8x16xf32>,
    return
  }
  func.func @transform_0(%arg0: i32) -> (i32, i32) {
    %c0_i32 = arith.constant 0 : i32
    %c0_i32_0 = arith.constant 0 : i32
    return %arg0, %c0_i32 : i32, i32
  }
  func.func @transform_1(%arg0: i32) -> (i32, i32) {
    %c0_i32 = arith.constant 0 : i32
    %c0_i32_0 = arith.constant 0 : i32
    %c0_i32_1 = arith.constant 0 : i32
    return %c0_i32, %c0_i32_0 : i32, i32
  }
  func.func @transform_2(%arg0: i32) -> (i32, i32) {
    %c0_i32 = arith.constant 0 : i32
    %c0_i32_0 = arith.constant 0 : i32
    %c0_i32_1 = arith.constant 0 : i32
    return %c0_i32, %c0_i32_0 : i32, i32
  }
  func.func @transform_3(%arg0: i32) -> (i32, i32) {
    %c0_i32 = arith.constant 0 : i32
    %c0_i32_0 = arith.constant 0 : i32
    return %arg0, %c0_i32 : i32, i32
  }
  func.func @transform_4(%arg0: i32) -> (i32, i32) {
    %c0_i32 = arith.constant 0 : i32
    %c0_i32_0 = arith.constant 0 : i32
    return %arg0, %c0_i32 : i32, i32
  }
  func.func @transform_5(%arg0: i32) -> (i32, i32) {
    %c0_i32 = arith.constant 0 : i32
    %c0_i32_0 = arith.constant 0 : i32
    return %arg0, %c0_i32 : i32, i32
  }
}

module attributes {stable_mosaic.version = 11 : i64} {
  func.func @_mm_kernel_single_k(%arg0: i32, %arg1: memref<128x288xbf16, #tpu.memory_space<vmem>>, %arg2: memref<288x32xbf16, #tpu.memory_space<vmem>>, %arg3: memref<1x32xf32, #tpu.memory_space<vmem>>, %arg4: memref<128x32xbf16, #tpu.memory_space<vmem>>, %arg5: memref<8x32xf32, #tpu.memory_space<vmem>>, %arg6: memref<8x32xf32, #tpu.memory_space<vmem>>) attributes {dimension_semantics = [#tpu.dimension_semantics<parallel>], iteration_bounds = array<i64: 1>, scalar_prefetch = 0 : i64, scratch_operands = 0 : i64, tpu.core_type = #tpu.core_type<tc>, window_params = [{transform_indices = @transform_0, window_bounds = array<i64: 128, 288>}, {pipeline_mode = #tpu.pipeline_mode<synchronous>, transform_indices = @transform_1, window_bounds = array<i64: 288, 32>}, {pipeline_mode = #tpu.pipeline_mode<synchronous>, transform_indices = @transform_2, window_bounds = array<i64: 1, 32>}, {transform_indices = @transform_3, window_bounds = array<i64: 128, 32>}, {transform_indices = @transform_4, window_bounds = array<i64: 8, 32>}, {transform_indices = @transform_5, window_bounds = array<i64: 8, 32>}]} {
    %c0 = arith.constant 0 : index
    %c0_0 = arith.constant 0 : index
    %0 = vector.load %arg1[%c0, %c0_0] : memref<128x288xbf16, #tpu.memory_space<vmem>>, vector<128x288xbf16>
    %cst = arith.constant 0.000000e+00 : bf16
    %1 = vector.broadcast %cst : bf16 to vector<128x288xbf16>
    %2 = arith.maximumf %0, %1 : vector<128x288xbf16>
    %c0_1 = arith.constant 0 : index
    %c0_2 = arith.constant 0 : index
    %3 = vector.load %arg2[%c0_1, %c0_2] : memref<288x32xbf16, #tpu.memory_space<vmem>>, vector<288x32xbf16>
    %cst_3 = arith.constant dense<0.000000e+00> : vector<128x32xf32>
    %4 = tpu.matmul %2, %3, %cst_3 {dimension_numbers = #tpu.dot_dimension_numbers<[1], [0], [0], [1], [0, 0, 1, 1], [], []>} : vector<128x288xbf16>, vector<288x32xbf16>, vector<128x32xf32> -> vector<128x32xf32>
    %c0_4 = arith.constant 0 : index
    %c0_5 = arith.constant 0 : index
    %5 = vector.load %arg3[%c0_4, %c0_5] : memref<1x32xf32, #tpu.memory_space<vmem>>, vector<1x32xf32>
    %6 = vector.broadcast %5 : vector<1x32xf32> to vector<128x32xf32>
    %7 = arith.addf %4, %6 : vector<128x32xf32>
    %8 = arith.truncf %7 : vector<128x32xf32> to vector<128x32xbf16>
    %c0_6 = arith.constant 0 : index
    %c0_7 = arith.constant 0 : index
    %9 = vector.load %arg4[%c0_6, %c0_7] : memref<128x32xbf16, #tpu.memory_space<vmem>>, vector<128x32xbf16>
    tpu.vector_store %arg4[%c0_6, %c0_7], %8 {strides = array<i32>} : memref<128x32xbf16, #tpu.memory_space<vmem>>, vector<128x32xbf16>,
    %cst_8 = arith.constant dense<0.000000e+00> : vector<32xf32>
    %10 = vector.multi_reduction <add>, %7, %cst_8 [0] : vector<128x32xf32> to vector<32xf32>
    %11 = vector.shape_cast %10 : vector<32xf32> to vector<1x32xf32>
    %12 = vector.shape_cast %11 : vector<1x32xf32> to vector<1x32xf32>
    %13 = vector.broadcast %12 : vector<1x32xf32> to vector<8x32xf32>
    %c0_9 = arith.constant 0 : index
    %c0_10 = arith.constant 0 : index
    %14 = vector.load %arg5[%c0_9, %c0_10] : memref<8x32xf32, #tpu.memory_space<vmem>>, vector<8x32xf32>
    tpu.vector_store %arg5[%c0_9, %c0_10], %13 {strides = array<i32>} : memref<8x32xf32, #tpu.memory_space<vmem>>, vector<8x32xf32>,
    %15 = arith.mulf %7, %7 : vector<128x32xf32>
    %cst_11 = arith.constant dense<0.000000e+00> : vector<32xf32>
    %16 = vector.multi_reduction <add>, %15, %cst_11 [0] : vector<128x32xf32> to vector<32xf32>
    %17 = vector.shape_cast %16 : vector<32xf32> to vector<1x32xf32>
    %18 = vector.shape_cast %17 : vector<1x32xf32> to vector<1x32xf32>
    %19 = vector.broadcast %18 : vector<1x32xf32> to vector<8x32xf32>
    %c0_12 = arith.constant 0 : index
    %c0_13 = arith.constant 0 : index
    %20 = vector.load %arg6[%c0_12, %c0_13] : memref<8x32xf32, #tpu.memory_space<vmem>>, vector<8x32xf32>
    tpu.vector_store %arg6[%c0_12, %c0_13], %19 {strides = array<i32>} : memref<8x32xf32, #tpu.memory_space<vmem>>, vector<8x32xf32>,
    return
  }
  func.func @transform_0(%arg0: i32) -> (i32, i32) {
    %c0_i32 = arith.constant 0 : i32
    %c0_i32_0 = arith.constant 0 : i32
    return %arg0, %c0_i32 : i32, i32
  }
  func.func @transform_1(%arg0: i32) -> (i32, i32) {
    %c0_i32 = arith.constant 0 : i32
    %c0_i32_0 = arith.constant 0 : i32
    %c0_i32_1 = arith.constant 0 : i32
    return %c0_i32, %c0_i32_0 : i32, i32
  }
  func.func @transform_2(%arg0: i32) -> (i32, i32) {
    %c0_i32 = arith.constant 0 : i32
    %c0_i32_0 = arith.constant 0 : i32
    %c0_i32_1 = arith.constant 0 : i32
    return %c0_i32, %c0_i32_0 : i32, i32
  }
  func.func @transform_3(%arg0: i32) -> (i32, i32) {
    %c0_i32 = arith.constant 0 : i32
    %c0_i32_0 = arith.constant 0 : i32
    return %arg0, %c0_i32 : i32, i32
  }
  func.func @transform_4(%arg0: i32) -> (i32, i32) {
    %c0_i32 = arith.constant 0 : i32
    %c0_i32_0 = arith.constant 0 : i32
    return %arg0, %c0_i32 : i32, i32
  }
  func.func @transform_5(%arg0: i32) -> (i32, i32) {
    %c0_i32 = arith.constant 0 : i32
    %c0_i32_0 = arith.constant 0 : i32
    return %arg0, %c0_i32 : i32, i32
  }
}

module attributes {stable_mosaic.version = 11 : i64} {
  func.func @_scale_shift_kernel(%arg0: i32, %arg1: memref<32x128xbf16, #tpu.memory_space<vmem>>, %arg2: memref<1x128xf32, #tpu.memory_space<vmem>>, %arg3: memref<1x128xf32, #tpu.memory_space<vmem>>, %arg4: memref<32x128xbf16, #tpu.memory_space<vmem>>) attributes {dimension_semantics = [#tpu.dimension_semantics<parallel>], iteration_bounds = array<i64: 1>, scalar_prefetch = 0 : i64, scratch_operands = 0 : i64, tpu.core_type = #tpu.core_type<tc>, window_params = [{transform_indices = @transform_0, window_bounds = array<i64: 32, 128>}, {pipeline_mode = #tpu.pipeline_mode<synchronous>, transform_indices = @transform_1, window_bounds = array<i64: 1, 128>}, {pipeline_mode = #tpu.pipeline_mode<synchronous>, transform_indices = @transform_2, window_bounds = array<i64: 1, 128>}, {transform_indices = @transform_3, window_bounds = array<i64: 32, 128>}]} {
    %c0 = arith.constant 0 : index
    %c0_0 = arith.constant 0 : index
    %0 = vector.load %arg1[%c0, %c0_0] : memref<32x128xbf16, #tpu.memory_space<vmem>>, vector<32x128xbf16>
    %1 = arith.extf %0 : vector<32x128xbf16> to vector<32x128xf32>
    %c0_1 = arith.constant 0 : index
    %c0_2 = arith.constant 0 : index
    %2 = vector.load %arg2[%c0_1, %c0_2] : memref<1x128xf32, #tpu.memory_space<vmem>>, vector<1x128xf32>
    %3 = vector.broadcast %2 : vector<1x128xf32> to vector<32x128xf32>
    %4 = arith.mulf %1, %3 : vector<32x128xf32>
    %c0_3 = arith.constant 0 : index
    %c0_4 = arith.constant 0 : index
    %5 = vector.load %arg3[%c0_3, %c0_4] : memref<1x128xf32, #tpu.memory_space<vmem>>, vector<1x128xf32>
    %6 = vector.broadcast %5 : vector<1x128xf32> to vector<32x128xf32>
    %7 = arith.addf %4, %6 : vector<32x128xf32>
    %8 = arith.truncf %7 : vector<32x128xf32> to vector<32x128xbf16>
    %c0_5 = arith.constant 0 : index
    %c0_6 = arith.constant 0 : index
    %9 = vector.load %arg4[%c0_5, %c0_6] : memref<32x128xbf16, #tpu.memory_space<vmem>>, vector<32x128xbf16>
    tpu.vector_store %arg4[%c0_5, %c0_6], %8 {strides = array<i32>} : memref<32x128xbf16, #tpu.memory_space<vmem>>, vector<32x128xbf16>,
    return
  }
  func.func @transform_0(%arg0: i32) -> (i32, i32) {
    %c0_i32 = arith.constant 0 : i32
    %c0_i32_0 = arith.constant 0 : i32
    return %arg0, %c0_i32 : i32, i32
  }
  func.func @transform_1(%arg0: i32) -> (i32, i32) {
    %c0_i32 = arith.constant 0 : i32
    %c0_i32_0 = arith.constant 0 : i32
    %c0_i32_1 = arith.constant 0 : i32
    return %c0_i32, %c0_i32_0 : i32, i32
  }
  func.func @transform_2(%arg0: i32) -> (i32, i32) {
    %c0_i32 = arith.constant 0 : i32
    %c0_i32_0 = arith.constant 0 : i32
    %c0_i32_1 = arith.constant 0 : i32
    return %c0_i32, %c0_i32_0 : i32, i32
  }
  func.func @transform_3(%arg0: i32) -> (i32, i32) {
    %c0_i32 = arith.constant 0 : i32
    %c0_i32_0 = arith.constant 0 : i32
    return %arg0, %c0_i32 : i32, i32
  }
}

module attributes {stable_mosaic.version = 11 : i64} {
  func.func @_mm_kernel_single_k(%arg0: i32, %arg1: memref<256x144xbf16, #tpu.memory_space<vmem>>, %arg2: memref<144x16xbf16, #tpu.memory_space<vmem>>, %arg3: memref<1x16xf32, #tpu.memory_space<vmem>>, %arg4: memref<256x16xf32, #tpu.memory_space<vmem>>) attributes {dimension_semantics = [#tpu.dimension_semantics<parallel>], iteration_bounds = array<i64: 2>, scalar_prefetch = 0 : i64, scratch_operands = 0 : i64, tpu.core_type = #tpu.core_type<tc>, window_params = [{transform_indices = @transform_0, window_bounds = array<i64: 256, 144>}, {pipeline_mode = #tpu.pipeline_mode<synchronous>, transform_indices = @transform_1, window_bounds = array<i64: 144, 16>}, {pipeline_mode = #tpu.pipeline_mode<synchronous>, transform_indices = @transform_2, window_bounds = array<i64: 1, 16>}, {transform_indices = @transform_3, window_bounds = array<i64: 256, 16>}]} {
    %c0 = arith.constant 0 : index
    %c0_0 = arith.constant 0 : index
    %0 = vector.load %arg1[%c0, %c0_0] : memref<256x144xbf16, #tpu.memory_space<vmem>>, vector<256x144xbf16>
    %cst = arith.constant 0.000000e+00 : bf16
    %1 = vector.broadcast %cst : bf16 to vector<256x144xbf16>
    %2 = arith.maximumf %0, %1 : vector<256x144xbf16>
    %c0_1 = arith.constant 0 : index
    %c0_2 = arith.constant 0 : index
    %3 = vector.load %arg2[%c0_1, %c0_2] : memref<144x16xbf16, #tpu.memory_space<vmem>>, vector<144x16xbf16>
    %cst_3 = arith.constant dense<0.000000e+00> : vector<256x16xf32>
    %4 = tpu.matmul %2, %3, %cst_3 {dimension_numbers = #tpu.dot_dimension_numbers<[1], [0], [0], [1], [0, 0, 1, 1], [], []>} : vector<256x144xbf16>, vector<144x16xbf16>, vector<256x16xf32> -> vector<256x16xf32>
    %c0_4 = arith.constant 0 : index
    %c0_5 = arith.constant 0 : index
    %5 = vector.load %arg3[%c0_4, %c0_5] : memref<1x16xf32, #tpu.memory_space<vmem>>, vector<1x16xf32>
    %6 = vector.broadcast %5 : vector<1x16xf32> to vector<256x16xf32>
    %7 = arith.addf %4, %6 : vector<256x16xf32>
    %8 = math.tanh %7 : vector<256x16xf32>
    %c0_6 = arith.constant 0 : index
    %c0_7 = arith.constant 0 : index
    %9 = vector.load %arg4[%c0_6, %c0_7] : memref<256x16xf32, #tpu.memory_space<vmem>>, vector<256x16xf32>
    tpu.vector_store %arg4[%c0_6, %c0_7], %8 {strides = array<i32>} : memref<256x16xf32, #tpu.memory_space<vmem>>, vector<256x16xf32>,
    return
  }
  func.func @transform_0(%arg0: i32) -> (i32, i32) {
    %c0_i32 = arith.constant 0 : i32
    %c0_i32_0 = arith.constant 0 : i32
    return %arg0, %c0_i32 : i32, i32
  }
  func.func @transform_1(%arg0: i32) -> (i32, i32) {
    %c0_i32 = arith.constant 0 : i32
    %c0_i32_0 = arith.constant 0 : i32
    %c0_i32_1 = arith.constant 0 : i32
    return %c0_i32, %c0_i32_0 : i32, i32
  }
  func.func @transform_2(%arg0: i32) -> (i32, i32) {
    %c0_i32 = arith.constant 0 : i32
    %c0_i32_0 = arith.constant 0 : i32
    %c0_i32_1 = arith.constant 0 : i32
    return %c0_i32, %c0_i32_0 : i32, i32
  }
  func.func @transform_3(%arg0: i32) -> (i32, i32) {
    %c0_i32 = arith.constant 0 : i32
    %c0_i32_0 = arith.constant 0 : i32
    return %arg0, %c0_i32 : i32, i32
  }
}

</mosaic_0001>

<llo_original>
// kernel: _lambda_.5
$region0: #{_lambda_.5}
  #allocation0 [shape = 'u32[]', space=smem, size = 0x4, offset = 0x4, fixed_abs, tag = 'smem constant byte address 0x4 - core index']
  #allocation1 [shape = 'u32[144,128]{1,0:T(1,128)}', space=vmem, size = 0x12000, scoped, tag = 'internal scratch']
  %s0 = inlined_call_operand.vmem [shape: bf16[512,64], index: 0, kind: input, shape index: {}]
  %s1 = inlined_call_operand.vmem [shape: bf16[64,8], index: 1, kind: input, shape index: {}]
  %s2 = inlined_call_operand.vmem [shape: f32[1,8], index: 2, kind: input, shape index: {}]
  %s3 = inlined_call_operand.vmem [shape: bf16[512,8], index: 3, kind: output, shape index: {}]
  %s4 = sld [smem:[#allocation0]]
  $region45: #{_lambda_.5} parent=0
    _
  %s6 = ssub.s32 1, %s4
  %s7 = scalar_select 0, %s6, %s4
  loop: start=0, step=1, limit=4
  $region2: #{_lambda_.5} parent=0 // loop_pre_header
    _
  $region3: #{_lambda_.5} parent=0 // loop_header
    %s9 = sphi 0, %s13
    %p10 = scmp.ge.s32.totalorder %s9, 4
    %s19 = sphi 0, %s21
    %s22 = sphi 0, %s19
    %s23 = sphi 0, %s22
    %s39 = sphi 0, %s23
    %s43 = sphi 0, %s43
    %s45 = sphi 0, %s43
    %s46 = sphi 0, %s45
    %s60 = sphi 0, %s46
    %s64 = sphi 0, %s64
    %s66 = sphi 0, %s64
    %s67 = sphi 0, %s66
    %s81 = sphi 0, %s67
    %s87 = sphi 0, %s89
    %s90 = sphi 0, %s87
    %s91 = sphi 0, %s90
    %s107 = sphi 0, %s91
  $region4: #{_lambda_.5} parent=0 // loop_header_branch
    %12 = sbr.rel (%p10) target = $region8
  $region5: #{_lambda_.5} parent=0 // loop_body
    %s14 = ssub.s32 %s9, 1
    %s15 = ssub.s32 %s9, 2
    %s16 = sadd.s32 %s9, 1
    %s17 = ssub.s32 %s9, %s16
    %p18 = scmp.eq.s32.totalorder %s17, 0
    %s20 = sadd.s32 %s19, 1
    %s21 = scalar_select %p18, %s19, %s20
    %p24 = pneg %p18
    %p25 = scmp.eq.s32.totalorder %s9, 1
    %p26 = por %p24, %p25
    %p27 = scmp.ne.s32.totalorder %s19, %s22
    %p28 = scmp.eq.s32.totalorder %s9, 0
    %p29 = por %p27, %p28
    %p30 = scmp.ne.s32.totalorder %s19, %s22
    %p31 = scmp.eq.s32.totalorder %s14, 1
    %p32 = por %p30, %p31
    %p33 = scmp.ne.s32.totalorder %s22, %s23
    %p34 = scmp.eq.s32.totalorder %s14, 0
    %p35 = por %p33, %p34
    %p36 = scmp.ne.s32.totalorder %s22, %s23
    %p37 = scmp.eq.s32.totalorder %s15, 1
    %p38 = por %p36, %p37
    %p40 = scmp.ne.s32.totalorder %s23, %s39
    %p41 = scmp.eq.s32.totalorder %s15, 0
    %p42 = por %p40, %p41
    %s44 = sadd.s32 %s43, 1
    %p47 = scmp.eq.s32.totalorder %s9, 1
    %p48 = scmp.ne.s32.totalorder %s43, %s45
    %p49 = scmp.eq.s32.totalorder %s9, 0
    %p50 = por %p48, %p49
    %p51 = scmp.ne.s32.totalorder %s43, %s45
    %p52 = scmp.eq.s32.totalorder %s14, 1
    %p53 = por %p51, %p52
    %p54 = scmp.ne.s32.totalorder %s45, %s46
    %p55 = scmp.eq.s32.totalorder %s14, 0
    %p56 = por %p54, %p55
    %p57 = scmp.ne.s32.totalorder %s45, %s46
    %p58 = scmp.eq.s32.totalorder %s15, 1
    %p59 = por %p57, %p58
    %p61 = scmp.ne.s32.totalorder %s46, %s60
    %p62 = scmp.eq.s32.totalorder %s15, 0
    %p63 = por %p61, %p62
    %s65 = sadd.s32 %s64, 1
    %p68 = scmp.eq.s32.totalorder %s9, 1
    %p69 = scmp.ne.s32.totalorder %s64, %s66
    %p70 = scmp.eq.s32.totalorder %s9, 0
    %p71 = por %p69, %p70
    %p72 = scmp.ne.s32.totalorder %s64, %s66
    %p73 = scmp.eq.s32.totalorder %s14, 1
    %p74 = por %p72, %p73
    %p75 = scmp.ne.s32.totalorder %s66, %s67
    %p76 = scmp.eq.s32.totalorder %s14, 0
    %p77 = por %p75, %p76
    %p78 = scmp.ne.s32.totalorder %s66, %s67
    %p79 = scmp.eq.s32.totalorder %s15, 1
    %p80 = por %p78, %p79
    %p82 = scmp.ne.s32.totalorder %s67, %s81
    %p83 = scmp.eq.s32.totalorder %s15, 0
    %p84 = por %p82, %p83
    %s85 = ssub.s32 %s9, %s16
    %p86 = scmp.eq.s32.totalorder %s85, 0
    %s88 = sadd.s32 %s87, 1
    %s89 = scalar_select %p86, %s87, %s88
    %p92 = pneg %p86
    %p93 = scmp.eq.s32.totalorder %s9, 1
    %p94 = por %p92, %p93
    %p95 = scmp.ne.s32.totalorder %s87, %s90
    %p96 = scmp.eq.s32.totalorder %s9, 0
    %p97 = por %p95, %p96
    %p98 = scmp.ne.s32.totalorder %s87, %s90
    %p99 = scmp.eq.s32.totalorder %s14, 1
    %p100 = por %p98, %p99
    %p101 = scmp.ne.s32.totalorder %s90, %s91
    %p102 = scmp.eq.s32.totalorder %s14, 0
    %p103 = por %p101, %p102
    %p104 = scmp.ne.s32.totalorder %s90, %s91
    %p105 = scmp.eq.s32.totalorder %s15, 1
    %p106 = por %p104, %p105
    %p108 = scmp.ne.s32.totalorder %s91, %s107
    %p109 = scmp.eq.s32.totalorder %s15, 0
    %p110 = por %p108, %p109
    %p111 = scmp.le.s32.totalorder 1, %s9
    %p112 = scmp.lt.s32.totalorder %s9, 3
    %p113 = pnand %p111, %p112
    %p114 = pneg %p113
    // Predicated region
    $region9: #{_lambda_.5} parent=5 // pred_check
      _
    $region10: #{_lambda_.5} parent=5 // pred_check_branch
      %116 = sbr.rel (%p113) target = $region12
    $region11: #{_lambda_.5} parent=5 // pred_region
      %s117 = ssub.s32 %s9, 1
      // Predicated region
      $region13: #{_lambda_.5} parent=11 // pred_check
        %p118 = pneg %p56
      $region14: #{_lambda_.5} parent=11 // pred_check_branch
        %120 = sbr.rel (%p118) target = $region16
      $region15: #{_lambda_.5} parent=11 // pred_region
        _
      $region16: #{_lambda_.5} parent=11 // pred_fallthru
        _
      // Predicated region
      $region17: #{_lambda_.5} parent=11 // pred_check
        %p121 = pneg %p77
      $region18: #{_lambda_.5} parent=11 // pred_check_branch
        %123 = sbr.rel (%p121) target = $region20
      $region19: #{_lambda_.5} parent=11 // pred_region
        _
      $region20: #{_lambda_.5} parent=11 // pred_fallthru
        _
    $region12: #{_lambda_.5} parent=5 // pred_fallthru
      _
    %p124 = scmp.lt.s32.totalorder %s9, 2
    // Predicated region
    $region21: #{_lambda_.5} parent=5 // pred_check
      %p125 = pneg %p124
    $region22: #{_lambda_.5} parent=5 // pred_check_branch
      %127 = sbr.rel (%p125) target = $region24
    $region23: #{_lambda_.5} parent=5 // pred_region
      // Predicated region
      $region25: #{_lambda_.5} parent=23 // pred_check
        %p128 = pneg %p29
      $region26: #{_lambda_.5} parent=23 // pred_check_branch
        %130 = sbr.rel (%p128) target = $region28
      $region27: #{_lambda_.5} parent=23 // pred_region
        %s131 = smul.u32 32, %s9
        %p132 = scmp.lt.s32.totalorder %s131, 63
        %s133 = scalar_select %p132, %s131, 63
        %s134 = smul.addr %s133, 4
        %s135 = scalar_lea.vmem %s0, %s134
        %s136 = smul.u32 32, %s9
      $region28: #{_lambda_.5} parent=23 // pred_fallthru
        _
    $region24: #{_lambda_.5} parent=5 // pred_fallthru
      _
    %p137 = scmp.le.s32.totalorder 1, %s9
    %p138 = scmp.lt.s32.totalorder %s9, 3
    %p139 = pnand %p137, %p138
    %p140 = pneg %p139
    // Predicated region
    $region29: #{_lambda_.5} parent=5 // pred_check
      _
    $region30: #{_lambda_.5} parent=5 // pred_check_branch
      %142 = sbr.rel (%p139) target = $region32
    $region31: #{_lambda_.5} parent=5 // pred_region
      %s143 = ssub.s32 %s9, 1
      %s144 = smul.u32 32, %s14
      %p145 = scmp.lt.s32.totalorder %s144, 63
      %s146 = scalar_select %p145, %s144, 63
      %s147 = smul.addr %s146, 4
      %s148 = scalar_lea.vmem %s0, %s147
      %p149 = pneg %p35
      %p150 = pneg %p32
      %p151 = pneg %p56
      %p152 = pneg %p53
      %p153 = pneg %p77
      %p154 = pneg %p74
      %p155 = pneg %p103
      %p156 = pneg %p100
      %s157 = smul.u32 32, %s14
      %p158 = scmp.lt.s32.totalorder %s157, 63
      %s159 = scalar_select %p158, %s157, 63
      %s160 = smul.addr %s159, 4
      %s161 = scalar_lea.vmem %s3, %s160
      %s162 = smul.u32 32, %s14
      %p163 = scmp.lt.s32.totalorder %s162, 63
      %s164 = scalar_select %p163, %s162, 63
      %s165 = smul.addr %s164, 4
      %s166 = scalar_lea.vmem %s0, %s165
      %s167 = smul.u32 32, %s14
      %s168 = smul.u32 32, %s14
      %p169 = scmp.lt.s32.totalorder %s168, 63
      %s170 = scalar_select %p169, %s168, 63
      %s171 = smul.addr %s170, 4
      %s172 = scalar_lea.vmem %s3, %s171
      %s173 = smul.u32 32, %s14
      %v175 = vld [vmem:[%s166] sm:$0xf]
      %v176 = vld [vmem:[%s166 + $0x4] sm:$0xf]
      %v177 = vld [vmem:[%s166 + $0x8] sm:$0xf]
      %v178 = vld [vmem:[%s166 + $0xc] sm:$0xf]
      %v179 = vld [vmem:[%s166 + $0x10] sm:$0xf]
      %v180 = vld [vmem:[%s166 + $0x14] sm:$0xf]
      %v181 = vld [vmem:[%s166 + $0x18] sm:$0xf]
      %v182 = vld [vmem:[%s166 + $0x1c] sm:$0xf]
      %v183 = vld [vmem:[%s166 + $0x20] sm:$0xf]
      %v184 = vld [vmem:[%s166 + $0x24] sm:$0xf]
      %v185 = vld [vmem:[%s166 + $0x28] sm:$0xf]
      %v186 = vld [vmem:[%s166 + $0x2c] sm:$0xf]
      %v187 = vld [vmem:[%s166 + $0x30] sm:$0xf]
      %v188 = vld [vmem:[%s166 + $0x34] sm:$0xf]
      %v189 = vld [vmem:[%s166 + $0x38] sm:$0xf]
      %v190 = vld [vmem:[%s166 + $0x3c] sm:$0xf]
      %v191 = vld [vmem:[%s166 + $0x40] sm:$0xf]
      %v192 = vld [vmem:[%s166 + $0x44] sm:$0xf]
      %v193 = vld [vmem:[%s166 + $0x48] sm:$0xf]
      %v194 = vld [vmem:[%s166 + $0x4c] sm:$0xf]
      %v195 = vld [vmem:[%s166 + $0x50] sm:$0xf]
      %v196 = vld [vmem:[%s166 + $0x54] sm:$0xf]
      %v197 = vld [vmem:[%s166 + $0x58] sm:$0xf]
      %v198 = vld [vmem:[%s166 + $0x5c] sm:$0xf]
      %v199 = vld [vmem:[%s166 + $0x60] sm:$0xf]
      %v200 = vld [vmem:[%s166 + $0x64] sm:$0xf]
      %v201 = vld [vmem:[%s166 + $0x68] sm:$0xf]
      %v202 = vld [vmem:[%s166 + $0x6c] sm:$0xf]
      %v203 = vld [vmem:[%s166 + $0x70] sm:$0xf]
      %v204 = vld [vmem:[%s166 + $0x74] sm:$0xf]
      %v205 = vld [vmem:[%s166 + $0x78] sm:$0xf]
      %v206 = vld [vmem:[%s166 + $0x7c] sm:$0xf]
      %v207 = vld [vmem:[%s1] sm:$0xf]
      %v208 = vld [vmem:[%s1 + $0x4] sm:$0xf]
      %v209 = vld [vmem:[%s1 + $0x8] sm:$0xf]
      %v210 = vld [vmem:[%s1 + $0xc] sm:$0xf]
      %v211 = vld [vmem:[%s1 + $0x10] sm:$0xf]
      %v212 = vld [vmem:[%s1 + $0x14] sm:$0xf]
      %v213 = vld [vmem:[%s1 + $0x18] sm:$0xf]
      %v214 = vld [vmem:[%s1 + $0x1c] sm:$0xf]
      %v215 = vld [vmem:[%s2] sm:$0x1]
      %v217 = vlaneseq
      %v218 = vshrl.u32 %v217, 7
      %v219 = vsub.s32 0, %v218
      %v220 = vrot.slane %v215, %v219
      %v254 = vunpack.c.l.b16 %v175
      %v255 = vunpack.c.l.b16 %v176
      %v256 = vunpack.c.l.b16 %v177
      %v257 = vunpack.c.l.b16 %v178
      %v258 = vunpack.c.l.b16 %v179
      %v259 = vunpack.c.l.b16 %v180
      %v260 = vunpack.c.l.b16 %v181
      %v261 = vunpack.c.l.b16 %v182
      %v262 = vunpack.c.l.b16 %v183
      %v263 = vunpack.c.l.b16 %v184
      %v264 = vunpack.c.l.b16 %v185
      %v265 = vunpack.c.l.b16 %v186
      %v266 = vunpack.c.l.b16 %v187
      %v267 = vunpack.c.l.b16 %v188
      %v268 = vunpack.c.l.b16 %v189
      %v269 = vunpack.c.l.b16 %v190
      %v270 = vunpack.c.l.b16 %v191
      %v271 = vunpack.c.l.b16 %v192
      %v272 = vunpack.c.l.b16 %v193
      %v273 = vunpack.c.l.b16 %v194
      %v274 = vunpack.c.l.b16 %v195
      %v275 = vunpack.c.l.b16 %v196
      %v276 = vunpack.c.l.b16 %v197
      %v277 = vunpack.c.l.b16 %v198
      %v278 = vunpack.c.l.b16 %v199
      %v279 = vunpack.c.l.b16 %v200
      %v280 = vunpack.c.l.b16 %v201
      %v281 = vunpack.c.l.b16 %v202
      %v282 = vunpack.c.l.b16 %v203
      %v283 = vunpack.c.l.b16 %v204
      %v284 = vunpack.c.l.b16 %v205
      %v285 = vunpack.c.l.b16 %v206
      %v286 = vpack.c.b16 %v255, %v254
      %v287 = vpack.c.b16 %v257, %v256
      %v288 = vpack.c.b16 %v259, %v258
      %v289 = vpack.c.b16 %v261, %v260
      %v290 = vpack.c.b16 %v263, %v262
      %v291 = vpack.c.b16 %v265, %v264
      %v292 = vpack.c.b16 %v267, %v266
      %v293 = vpack.c.b16 %v269, %v268
      %v294 = vpack.c.b16 %v271, %v270
      %v295 = vpack.c.b16 %v273, %v272
      %v296 = vpack.c.b16 %v275, %v274
      %v297 = vpack.c.b16 %v277, %v276
      %v298 = vpack.c.b16 %v279, %v278
      %v299 = vpack.c.b16 %v281, %v280
      %v300 = vpack.c.b16 %v283, %v282
      %v301 = vpack.c.b16 %v285, %v284
      %v310 = vunpack.c.l.b16 %v207
      %v311 = vunpack.c.l.b16 %v208
      %v312 = vunpack.c.l.b16 %v209
      %v313 = vunpack.c.l.b16 %v210
      %v314 = vunpack.c.l.b16 %v211
      %v315 = vunpack.c.l.b16 %v212
      %v316 = vunpack.c.l.b16 %v213
      %v317 = vunpack.c.l.b16 %v214
      %v318 = vpack.c.b16 %v311, %v310
      %v319 = vpack.c.b16 %v313, %v312
      %v320 = vpack.c.b16 %v315, %v314
      %v321 = vpack.c.b16 %v317, %v316
      %vm326 = vcmask 523264
      %v328 = vsel %vm326, %v286, 0
      %v331 = vsel %vm326, %v287, 0
      %v334 = vsel %vm326, %v288, 0
      %v337 = vsel %vm326, %v289, 0
      %v340 = vsel %vm326, %v290, 0
      %v343 = vsel %vm326, %v291, 0
      %v346 = vsel %vm326, %v292, 0
      %v349 = vsel %vm326, %v293, 0
      %v352 = vsel %vm326, %v294, 0
      %v355 = vsel %vm326, %v295, 0
      %v358 = vsel %vm326, %v296, 0
      %v361 = vsel %vm326, %v297, 0
      %v364 = vsel %vm326, %v298, 0
      %v367 = vsel %vm326, %v299, 0
      %v370 = vsel %vm326, %v300, 0
      %v373 = vsel %vm326, %v301, 0
      %375 = vmatprep.subr.bf16.mxu0 0
      %376 = vmatpush1.bf16.msra.mxu0 %v318
      %377 = vmatprep.subr.bf16.mxu0 0
      %378 = vmatpush1.bf16.msra.mxu0 %v319
      %379 = vmatprep.subr.bf16.mxu0 0
      %380 = vmatpush1.bf16.msra.mxu0 %v320
      %381 = vmatprep.subr.bf16.mxu0 0
      %382 = vmatpush1.bf16.msra.mxu0 %v321
      %383 = vmatprep.subr.bf16.mxu0 0
      %384 = vmatpush1.bf16.msra.mxu0 0
      %385 = vmatprep.subr.bf16.mxu0 0
      %386 = vmatpush1.bf16.msra.mxu0 0
      %387 = vmatprep.subr.bf16.mxu0 0
      %388 = vmatpush1.bf16.msra.mxu0 0
      %389 = vmatprep.subr.bf16.mxu0 0
      %390 = vmatpush1.bf16.msra.mxu0 0
      %391 = vmatprep.subr.bf16.mxu0 0
      %392 = vmatpush1.bf16.msra.mxu0 0
      %393 = vmatprep.subr.bf16.mxu0 0
      %394 = vmatpush1.bf16.msra.mxu0 0
      %395 = vmatprep.subr.bf16.mxu0 0
      %396 = vmatpush1.bf16.msra.mxu0 0
      %397 = vmatprep.subr.bf16.mxu0 0
      %398 = vmatpush1.bf16.msra.mxu0 0
      %399 = vmatprep.subr.bf16.mxu0 0
      %400 = vmatpush1.bf16.msra.mxu0 0
      %401 = vmatprep.subr.bf16.mxu0 0
      %402 = vmatpush1.bf16.msra.mxu0 0
      %403 = vmatprep.subr.bf16.mxu0 0
      %404 = vmatpush1.bf16.msra.mxu0 0
      %405 = vmatprep.subr.bf16.mxu0 0
      %406 = vmatpush1.bf16.msra.mxu0 0
      %407 = vmatprep.mubr.bf16.mxu0 0
      %408 = vmatmul.mubr.bf16.gmra.mrb[0].mxu0 %v328
      %v409 = vpop.f32.mrb[0].mxu0
      %v410 = vadd.f32 %v220, %v409
      %v411 = vpop.f32.mrb[0].mxu0
      %v412 = vpop.f32.mrb[0].mxu0
      %v413 = vadd.f32 %v220, %v412
      %v414 = vpop.f32.mrb[0].mxu0
      %415 = vmatprep.mubr.bf16.mxu0 0
      %416 = vmatmul.mubr.bf16.gmra.mrb[0].mxu0 %v331
      %v417 = vpop.f32.mrb[0].mxu0
      %v418 = vadd.f32 %v220, %v417
      %v419 = vpop.f32.mrb[0].mxu0
      %v420 = vpop.f32.mrb[0].mxu0
      %v421 = vadd.f32 %v220, %v420
      %v422 = vpop.f32.mrb[0].mxu0
      %423 = vmatprep.mubr.bf16.mxu0 0
      %424 = vmatmul.mubr.bf16.gmra.mrb[0].mxu0 %v334
      %v425 = vpop.f32.mrb[0].mxu0
      %v426 = vadd.f32 %v220, %v425
      %v427 = vpop.f32.mrb[0].mxu0
      %v428 = vpop.f32.mrb[0].mxu0
      %v429 = vadd.f32 %v220, %v428
      %v430 = vpop.f32.mrb[0].mxu0
      %431 = vmatprep.mubr.bf16.mxu0 0
      %432 = vmatmul.mubr.bf16.gmra.mrb[0].mxu0 %v337
      %v433 = vpop.f32.mrb[0].mxu0
      %v434 = vadd.f32 %v220, %v433
      %v435 = vpop.f32.mrb[0].mxu0
      %v436 = vpop.f32.mrb[0].mxu0
      %v437 = vadd.f32 %v220, %v436
      %v438 = vpop.f32.mrb[0].mxu0
      %439 = vmatprep.mubr.bf16.mxu0 0
      %440 = vmatmul.mubr.bf16.gmra.mrb[0].mxu0 %v340
      %v441 = vpop.f32.mrb[0].mxu0
      %v442 = vadd.f32 %v220, %v441
      %v443 = vpop.f32.mrb[0].mxu0
      %v444 = vpop.f32.mrb[0].mxu0
      %v445 = vadd.f32 %v220, %v444
      %v446 = vpop.f32.mrb[0].mxu0
      %447 = vmatprep.mubr.bf16.mxu0 0
      %448 = vmatmul.mubr.bf16.gmra.mrb[0].mxu0 %v343
      %v449 = vpop.f32.mrb[0].mxu0
      %v450 = vadd.f32 %v220, %v449
      %v451 = vpop.f32.mrb[0].mxu0
      %v452 = vpop.f32.mrb[0].mxu0
      %v453 = vadd.f32 %v220, %v452
      %v454 = vpop.f32.mrb[0].mxu0
      %455 = vmatprep.mubr.bf16.mxu0 0
      %456 = vmatmul.mubr.bf16.gmra.mrb[0].mxu0 %v346
      %v457 = vpop.f32.mrb[0].mxu0
      %v458 = vadd.f32 %v220, %v457
      %v459 = vpop.f32.mrb[0].mxu0
      %v460 = vpop.f32.mrb[0].mxu0
      %v461 = vadd.f32 %v220, %v460
      %v462 = vpop.f32.mrb[0].mxu0
      %463 = vmatprep.mubr.bf16.mxu0 0
      %464 = vmatmul.mubr.bf16.gmra.mrb[0].mxu0 %v349
      %v465 = vpop.f32.mrb[0].mxu0
      %v466 = vadd.f32 %v220, %v465
      %v467 = vpop.f32.mrb[0].mxu0
      %v468 = vpop.f32.mrb[0].mxu0
      %v469 = vadd.f32 %v220, %v468
      %v470 = vpop.f32.mrb[0].mxu0
      %471 = vmatprep.mubr.bf16.mxu0 0
      %472 = vmatmul.mubr.bf16.gmra.mrb[0].mxu0 %v352
      %v473 = vpop.f32.mrb[0].mxu0
      %v474 = vadd.f32 %v220, %v473
      %v475 = vpop.f32.mrb[0].mxu0
      %v476 = vpop.f32.mrb[0].mxu0
      %v477 = vadd.f32 %v220, %v476
      %v478 = vpop.f32.mrb[0].mxu0
      %479 = vmatprep.mubr.bf16.mxu0 0
      %480 = vmatmul.mubr.bf16.gmra.mrb[0].mxu0 %v355
      %v481 = vpop.f32.mrb[0].mxu0
      %v482 = vadd.f32 %v220, %v481
      %v483 = vpop.f32.mrb[0].mxu0
      %v484 = vpop.f32.mrb[0].mxu0
      %v485 = vadd.f32 %v220, %v484
      %v486 = vpop.f32.mrb[0].mxu0
      %487 = vmatprep.mubr.bf16.mxu0 0
      %488 = vmatmul.mubr.bf16.gmra.mrb[0].mxu0 %v358
      %v489 = vpop.f32.mrb[0].mxu0
      %v490 = vadd.f32 %v220, %v489
      %v491 = vpop.f32.mrb[0].mxu0
      %v492 = vpop.f32.mrb[0].mxu0
      %v493 = vadd.f32 %v220, %v492
      %v494 = vpop.f32.mrb[0].mxu0
      %495 = vmatprep.mubr.bf16.mxu0 0
      %496 = vmatmul.mubr.bf16.gmra.mrb[0].mxu0 %v361
      %v497 = vpop.f32.mrb[0].mxu0
      %v498 = vadd.f32 %v220, %v497
      %v499 = vpop.f32.mrb[0].mxu0
      %v500 = vpop.f32.mrb[0].mxu0
      %v501 = vadd.f32 %v220, %v500
      %v502 = vpop.f32.mrb[0].mxu0
      %503 = vmatprep.mubr.bf16.mxu0 0
      %504 = vmatmul.mubr.bf16.gmra.mrb[0].mxu0 %v364
      %v505 = vpop.f32.mrb[0].mxu0
      %v506 = vadd.f32 %v220, %v505
      %v507 = vpop.f32.mrb[0].mxu0
      %v508 = vpop.f32.mrb[0].mxu0
      %v509 = vadd.f32 %v220, %v508
      %v510 = vpop.f32.mrb[0].mxu0
      %511 = vmatprep.mubr.bf16.mxu0 0
      %512 = vmatmul.mubr.bf16.gmra.mrb[0].mxu0 %v367
      %v513 = vpop.f32.mrb[0].mxu0
      %v514 = vadd.f32 %v220, %v513
      %v515 = vpop.f32.mrb[0].mxu0
      %v516 = vpop.f32.mrb[0].mxu0
      %v517 = vadd.f32 %v220, %v516
      %v518 = vpop.f32.mrb[0].mxu0
      %519 = vmatprep.mubr.bf16.mxu0 0
      %520 = vmatmul.mubr.bf16.gmra.mrb[0].mxu0 %v370
      %v521 = vpop.f32.mrb[0].mxu0
      %v522 = vadd.f32 %v220, %v521
      %v523 = vpop.f32.mrb[0].mxu0
      %v524 = vpop.f32.mrb[0].mxu0
      %v525 = vadd.f32 %v220, %v524
      %v526 = vpop.f32.mrb[0].mxu0
      %527 = vmatprep.mubr.bf16.mxu0 0
      %528 = vmatmul.mubr.bf16.gmra.mrb[0].mxu0 %v373
      %v529 = vpop.f32.mrb[0].mxu0
      %v530 = vadd.f32 %v220, %v529
      %v531 = vpop.f32.mrb[0].mxu0
      %v532 = vpop.f32.mrb[0].mxu0
      %v533 = vadd.f32 %v220, %v532
      %v534 = vpop.f32.mrb[0].mxu0
      %535 = vdwg.mxu0
      %v536 = vpack.c.bf16 %v413, %v410
      %v537 = vpack.c.bf16 %v421, %v418
      %v538 = vpack.c.bf16 %v429, %v426
      %v539 = vpack.c.bf16 %v437, %v434
      %v540 = vpack.c.bf16 %v445, %v442
      %v541 = vpack.c.bf16 %v453, %v450
      %v542 = vpack.c.bf16 %v461, %v458
      %v543 = vpack.c.bf16 %v469, %v466
      %v544 = vpack.c.bf16 %v477, %v474
      %v545 = vpack.c.bf16 %v485, %v482
      %v546 = vpack.c.bf16 %v493, %v490
      %v547 = vpack.c.bf16 %v501, %v498
      %v548 = vpack.c.bf16 %v509, %v506
      %v549 = vpack.c.bf16 %v517, %v514
      %v550 = vpack.c.bf16 %v525, %v522
      %v551 = vpack.c.bf16 %v533, %v530
      %v568 = vunpack.c.l.b16 %v536
      %v569 = vunpack.c.h.b16 %v536
      %v570 = vunpack.c.l.b16 %v537
      %v571 = vunpack.c.h.b16 %v537
      %v572 = vunpack.c.l.b16 %v538
      %v573 = vunpack.c.h.b16 %v538
      %v574 = vunpack.c.l.b16 %v539
      %v575 = vunpack.c.h.b16 %v539
      %v576 = vunpack.c.l.b16 %v540
      %v577 = vunpack.c.h.b16 %v540
      %v578 = vunpack.c.l.b16 %v541
      %v579 = vunpack.c.h.b16 %v541
      %v580 = vunpack.c.l.b16 %v542
      %v581 = vunpack.c.h.b16 %v542
      %v582 = vunpack.c.l.b16 %v543
      %v583 = vunpack.c.h.b16 %v543
      %v584 = vunpack.c.l.b16 %v544
      %v585 = vunpack.c.h.b16 %v544
      %v586 = vunpack.c.l.b16 %v545
      %v587 = vunpack.c.h.b16 %v545
      %v588 = vunpack.c.l.b16 %v546
      %v589 = vunpack.c.h.b16 %v546
      %v590 = vunpack.c.l.b16 %v547
      %v591 = vunpack.c.h.b16 %v547
      %v592 = vunpack.c.l.b16 %v548
      %v593 = vunpack.c.h.b16 %v548
      %v594 = vunpack.c.l.b16 %v549
      %v595 = vunpack.c.h.b16 %v549
      %v596 = vunpack.c.l.b16 %v550
      %v597 = vunpack.c.h.b16 %v550
      %v598 = vunpack.c.l.b16 %v551
      %v599 = vunpack.c.h.b16 %v551
      %v600 = vpack.c.b16 %v568, %v568
      %v601 = vpack.c.b16 %v569, %v569
      %v602 = vpack.c.b16 %v570, %v570
      %v603 = vpack.c.b16 %v571, %v571
      %v604 = vpack.c.b16 %v572, %v572
      %v605 = vpack.c.b16 %v573, %v573
      %v606 = vpack.c.b16 %v574, %v574
      %v607 = vpack.c.b16 %v575, %v575
      %v608 = vpack.c.b16 %v576, %v576
      %v609 = vpack.c.b16 %v577, %v577
      %v610 = vpack.c.b16 %v578, %v578
      %v611 = vpack.c.b16 %v579, %v579
      %v612 = vpack.c.b16 %v580, %v580
      %v613 = vpack.c.b16 %v581, %v581
      %v614 = vpack.c.b16 %v582, %v582
      %v615 = vpack.c.b16 %v583, %v583
      %v616 = vpack.c.b16 %v584, %v584
      %v617 = vpack.c.b16 %v585, %v585
      %v618 = vpack.c.b16 %v586, %v586
      %v619 = vpack.c.b16 %v587, %v587
      %v620 = vpack.c.b16 %v588, %v588
      %v621 = vpack.c.b16 %v589, %v589
      %v622 = vpack.c.b16 %v590, %v590
      %v623 = vpack.c.b16 %v591, %v591
      %v624 = vpack.c.b16 %v592, %v592
      %v625 = vpack.c.b16 %v593, %v593
      %v626 = vpack.c.b16 %v594, %v594
      %v627 = vpack.c.b16 %v595, %v595
      %v628 = vpack.c.b16 %v596, %v596
      %v629 = vpack.c.b16 %v597, %v597
      %v630 = vpack.c.b16 %v598, %v598
      %v631 = vpack.c.b16 %v599, %v599
      %vm664 = vcmask 60416
      %665 = vst.msk [vmem:[%s172] sm:$0xf] %vm664, %v600
      %666 = vst.msk [vmem:[%s172 + $0x4] sm:$0xf] %vm664, %v601
      %667 = vst.msk [vmem:[%s172 + $0x8] sm:$0xf] %vm664, %v602
      %668 = vst.msk [vmem:[%s172 + $0xc] sm:$0xf] %vm664, %v603
      %669 = vst.msk [vmem:[%s172 + $0x10] sm:$0xf] %vm664, %v604
      %670 = vst.msk [vmem:[%s172 + $0x14] sm:$0xf] %vm664, %v605
      %671 = vst.msk [vmem:[%s172 + $0x18] sm:$0xf] %vm664, %v606
      %672 = vst.msk [vmem:[%s172 + $0x1c] sm:$0xf] %vm664, %v607
      %673 = vst.msk [vmem:[%s172 + $0x20] sm:$0xf] %vm664, %v608
      %674 = vst.msk [vmem:[%s172 + $0x24] sm:$0xf] %vm664, %v609
      %675 = vst.msk [vmem:[%s172 + $0x28] sm:$0xf] %vm664, %v610
      %676 = vst.msk [vmem:[%s172 + $0x2c] sm:$0xf] %vm664, %v611
      %677 = vst.msk [vmem:[%s172 + $0x30] sm:$0xf] %vm664, %v612
      %678 = vst.msk [vmem:[%s172 + $0x34] sm:$0xf] %vm664, %v613
      %679 = vst.msk [vmem:[%s172 + $0x38] sm:$0xf] %vm664, %v614
      %680 = vst.msk [vmem:[%s172 + $0x3c] sm:$0xf] %vm664, %v615
      %681 = vst.msk [vmem:[%s172 + $0x40] sm:$0xf] %vm664, %v616
      %682 = vst.msk [vmem:[%s172 + $0x44] sm:$0xf] %vm664, %v617
      %683 = vst.msk [vmem:[%s172 + $0x48] sm:$0xf] %vm664, %v618
      %684 = vst.msk [vmem:[%s172 + $0x4c] sm:$0xf] %vm664, %v619
      %685 = vst.msk [vmem:[%s172 + $0x50] sm:$0xf] %vm664, %v620
      %686 = vst.msk [vmem:[%s172 + $0x54] sm:$0xf] %vm664, %v621
      %687 = vst.msk [vmem:[%s172 + $0x58] sm:$0xf] %vm664, %v622
      %688 = vst.msk [vmem:[%s172 + $0x5c] sm:$0xf] %vm664, %v623
      %689 = vst.msk [vmem:[%s172 + $0x60] sm:$0xf] %vm664, %v624
      %690 = vst.msk [vmem:[%s172 + $0x64] sm:$0xf] %vm664, %v625
      %691 = vst.msk [vmem:[%s172 + $0x68] sm:$0xf] %vm664, %v626
      %692 = vst.msk [vmem:[%s172 + $0x6c] sm:$0xf] %vm664, %v627
      %693 = vst.msk [vmem:[%s172 + $0x70] sm:$0xf] %vm664, %v628
      %694 = vst.msk [vmem:[%s172 + $0x74] sm:$0xf] %vm664, %v629
      %695 = vst.msk [vmem:[%s172 + $0x78] sm:$0xf] %vm664, %v630
      %696 = vst.msk [vmem:[%s172 + $0x7c] sm:$0xf] %vm664, %v631
      %s697 = smul.u32 32, %s14
      %p698 = scmp.lt.s32.totalorder %s697, 63
      %s699 = scalar_select %p698, %s697, 63
      %s700 = smul.addr %s699, 4
      %s701 = scalar_lea.vmem %s3, %s700
      // Predicated region
      $region33: #{_lambda_.5} parent=31 // pred_check
        %p702 = pneg %p100
      $region34: #{_lambda_.5} parent=31 // pred_check_branch
        %704 = sbr.rel (%p702) target = $region36
      $region35: #{_lambda_.5} parent=31 // pred_region
        %s705 = smul.u32 32, %s14
      $region36: #{_lambda_.5} parent=31 // pred_fallthru
        _
    $region32: #{_lambda_.5} parent=5 // pred_fallthru
      _
    %p706 = scmp.le.s32.totalorder 2, %s9
    // Predicated region
    $region37: #{_lambda_.5} parent=5 // pred_check
      %p707 = pneg %p706
    $region38: #{_lambda_.5} parent=5 // pred_check_branch
      %709 = sbr.rel (%p707) target = $region40
    $region39: #{_lambda_.5} parent=5 // pred_region
      %s710 = ssub.s32 %s9, 2
      // Predicated region
      $region41: #{_lambda_.5} parent=39 // pred_check
        %p711 = pneg %p106
      $region42: #{_lambda_.5} parent=39 // pred_check_branch
        %713 = sbr.rel (%p711) target = $region44
      $region43: #{_lambda_.5} parent=39 // pred_region
        %s714 = smul.u32 32, %s15
        %p715 = scmp.lt.s32.totalorder %s714, 63
        %s716 = scalar_select %p715, %s714, 63
        %s717 = smul.addr %s716, 4
        %s718 = scalar_lea.vmem %s3, %s717
      $region44: #{_lambda_.5} parent=39 // pred_fallthru
        _
    $region40: #{_lambda_.5} parent=5 // pred_fallthru
      _
  $region6: #{_lambda_.5} parent=0 // loop_footer
    %s13 = sadd.s32 1, %s9
  $region7: #{_lambda_.5} parent=0 // loop_footer_branch
    %8 = sbr.rel target = $region3
  $region8: #{_lambda_.5} parent=0 // loop_exit
    _

// kernel: _lambda_.6
$region0: #{_lambda_.6}
  #allocation0 [shape = 'u32[]', space=smem, size = 0x4, offset = 0x4, fixed_abs, tag = 'smem constant byte address 0x4 - core index']
  #allocation1 [shape = 'u32[144,128]{1,0:T(1,128)}', space=vmem, size = 0x12000, scoped, tag = 'internal scratch']
  %s0 = inlined_call_operand.vmem [shape: bf16[128,128], index: 0, kind: input, shape index: {}]
  %s1 = inlined_call_operand.vmem [shape: bf16[128,16], index: 1, kind: input, shape index: {}]
  %s2 = inlined_call_operand.vmem [shape: f32[1,16], index: 2, kind: input, shape index: {}]
  %s3 = inlined_call_operand.vmem [shape: bf16[128,16], index: 3, kind: output, shape index: {0}]
  %s4 = inlined_call_operand.vmem [shape: f32[8,16], index: 4, kind: output, shape index: {1}]
  %s5 = inlined_call_operand.vmem [shape: f32[8,16], index: 5, kind: output, shape index: {2}]
  %6 = xla_tuple %s3, %s4, %s5
  %s7 = sld [smem:[#allocation0]]
  $region38: #{_lambda_.6} parent=0
    _
  %s9 = ssub.s32 1, %s7
  %s10 = scalar_select 0, %s9, %s7
  // Predicated region
  $region2: #{_lambda_.6} parent=0 // pred_check
    _
  $region3: #{_lambda_.6} parent=0 // pred_check_branch
    %12 = sbr.rel (0) target = $region5
  $region4: #{_lambda_.6} parent=0 // pred_region
    _
  $region5: #{_lambda_.6} parent=0 // pred_fallthru
    _
  // Predicated region
  $region6: #{_lambda_.6} parent=0 // pred_check
    _
  $region7: #{_lambda_.6} parent=0 // pred_check_branch
    %14 = sbr.rel (0) target = $region9
  $region8: #{_lambda_.6} parent=0 // pred_region
    _
  $region9: #{_lambda_.6} parent=0 // pred_fallthru
    _
  // Predicated region
  $region10: #{_lambda_.6} parent=0 // pred_check
    _
  $region11: #{_lambda_.6} parent=0 // pred_check_branch
    %16 = sbr.rel (0) target = $region13
  $region12: #{_lambda_.6} parent=0 // pred_region
    _
  $region13: #{_lambda_.6} parent=0 // pred_fallthru
    _
  %v19 = vld [vmem:[%s0] sm:$0xf]
  %v20 = vld [vmem:[%s0 + $0x4] sm:$0xf]
  %v21 = vld [vmem:[%s0 + $0x8] sm:$0xf]
  %v22 = vld [vmem:[%s0 + $0xc] sm:$0xf]
  %v23 = vld [vmem:[%s0 + $0x10] sm:$0xf]
  %v24 = vld [vmem:[%s0 + $0x14] sm:$0xf]
  %v25 = vld [vmem:[%s0 + $0x18] sm:$0xf]
  %v26 = vld [vmem:[%s0 + $0x1c] sm:$0xf]
  %v27 = vld [vmem:[%s0 + $0x20] sm:$0xf]
  %v28 = vld [vmem:[%s0 + $0x24] sm:$0xf]
  %v29 = vld [vmem:[%s0 + $0x28] sm:$0xf]
  %v30 = vld [vmem:[%s0 + $0x2c] sm:$0xf]
  %v31 = vld [vmem:[%s0 + $0x30] sm:$0xf]
  %v32 = vld [vmem:[%s0 + $0x34] sm:$0xf]
  %v33 = vld [vmem:[%s0 + $0x38] sm:$0xf]
  %v34 = vld [vmem:[%s0 + $0x3c] sm:$0xf]
  %vm35 = vcmp.ge.bf16.partialorder %v19, 0
  %vm36 = vcmp.ge.bf16.partialorder %v20, 0
  %vm37 = vcmp.ge.bf16.partialorder %v21, 0
  %vm38 = vcmp.ge.bf16.partialorder %v22, 0
  %vm39 = vcmp.ge.bf16.partialorder %v23, 0
  %vm40 = vcmp.ge.bf16.partialorder %v24, 0
  %vm41 = vcmp.ge.bf16.partialorder %v25, 0
  %vm42 = vcmp.ge.bf16.partialorder %v26, 0
  %vm43 = vcmp.ge.bf16.partialorder %v27, 0
  %vm44 = vcmp.ge.bf16.partialorder %v28, 0
  %vm45 = vcmp.ge.bf16.partialorder %v29, 0
  %vm46 = vcmp.ge.bf16.partialorder %v30, 0
  %vm47 = vcmp.ge.bf16.partialorder %v31, 0
  %vm48 = vcmp.ge.bf16.partialorder %v32, 0
  %vm49 = vcmp.ge.bf16.partialorder %v33, 0
  %vm50 = vcmp.ge.bf16.partialorder %v34, 0
  %v51 = vmul.bf16 %v19, 1045249613
  %v52 = vmul.bf16 %v20, 1045249613
  %v53 = vmul.bf16 %v21, 1045249613
  %v54 = vmul.bf16 %v22, 1045249613
  %v55 = vmul.bf16 %v23, 1045249613
  %v56 = vmul.bf16 %v24, 1045249613
  %v57 = vmul.bf16 %v25, 1045249613
  %v58 = vmul.bf16 %v26, 1045249613
  %v59 = vmul.bf16 %v27, 1045249613
  %v60 = vmul.bf16 %v28, 1045249613
  %v61 = vmul.bf16 %v29, 1045249613
  %v62 = vmul.bf16 %v30, 1045249613
  %v63 = vmul.bf16 %v31, 1045249613
  %v64 = vmul.bf16 %v32, 1045249613
  %v65 = vmul.bf16 %v33, 1045249613
  %v66 = vmul.bf16 %v34, 1045249613
  %v67 = vsel %vm35, %v19, %v51
  %v68 = vsel %vm36, %v20, %v52
  %v69 = vsel %vm37, %v21, %v53
  %v70 = vsel %vm38, %v22, %v54
  %v71 = vsel %vm39, %v23, %v55
  %v72 = vsel %vm40, %v24, %v56
  %v73 = vsel %vm41, %v25, %v57
  %v74 = vsel %vm42, %v26, %v58
  %v75 = vsel %vm43, %v27, %v59
  %v76 = vsel %vm44, %v28, %v60
  %v77 = vsel %vm45, %v29, %v61
  %v78 = vsel %vm46, %v30, %v62
  %v79 = vsel %vm47, %v31, %v63
  %v80 = vsel %vm48, %v32, %v64
  %v81 = vsel %vm49, %v33, %v65
  %v82 = vsel %vm50, %v34, %v66
  %v83 = vld [vmem:[%s1] sm:$0xf]
  %v84 = vld [vmem:[%s1 + $0x4] sm:$0xf]
  %v85 = vld [vmem:[%s1 + $0x8] sm:$0xf]
  %v86 = vld [vmem:[%s1 + $0xc] sm:$0xf]
  %v87 = vld [vmem:[%s1 + $0x10] sm:$0xf]
  %v88 = vld [vmem:[%s1 + $0x14] sm:$0xf]
  %v89 = vld [vmem:[%s1 + $0x18] sm:$0xf]
  %v90 = vld [vmem:[%s1 + $0x1c] sm:$0xf]
  %v91 = vld [vmem:[%s1 + $0x20] sm:$0xf]
  %v92 = vld [vmem:[%s1 + $0x24] sm:$0xf]
  %v93 = vld [vmem:[%s1 + $0x28] sm:$0xf]
  %v94 = vld [vmem:[%s1 + $0x2c] sm:$0xf]
  %v95 = vld [vmem:[%s1 + $0x30] sm:$0xf]
  %v96 = vld [vmem:[%s1 + $0x34] sm:$0xf]
  %v97 = vld [vmem:[%s1 + $0x38] sm:$0xf]
  %v98 = vld [vmem:[%s1 + $0x3c] sm:$0xf]
  %v99 = vld [vmem:[%s2] sm:$0x1]
  %v101 = vlaneseq
  %v102 = vshrl.u32 %v101, 7
  %v103 = vsub.s32 0, %v102
  %v104 = vrot.slane %v99, %v103
  %v122 = vunpack.c.l.b16 %v67
  %v123 = vunpack.c.l.b16 %v68
  %v124 = vunpack.c.l.b16 %v69
  %v125 = vunpack.c.l.b16 %v70
  %v126 = vunpack.c.l.b16 %v71
  %v127 = vunpack.c.l.b16 %v72
  %v128 = vunpack.c.l.b16 %v73
  %v129 = vunpack.c.l.b16 %v74
  %v130 = vunpack.c.l.b16 %v75
  %v131 = vunpack.c.l.b16 %v76
  %v132 = vunpack.c.l.b16 %v77
  %v133 = vunpack.c.l.b16 %v78
  %v134 = vunpack.c.l.b16 %v79
  %v135 = vunpack.c.l.b16 %v80
  %v136 = vunpack.c.l.b16 %v81
  %v137 = vunpack.c.l.b16 %v82
  %v138 = vpack.c.b16 %v123, %v122
  %v139 = vpack.c.b16 %v125, %v124
  %v140 = vpack.c.b16 %v127, %v126
  %v141 = vpack.c.b16 %v129, %v128
  %v142 = vpack.c.b16 %v131, %v130
  %v143 = vpack.c.b16 %v133, %v132
  %v144 = vpack.c.b16 %v135, %v134
  %v145 = vpack.c.b16 %v137, %v136
  %v170 = vunpack.c.l.b16 %v83
  %v171 = vunpack.c.l.b16 %v84
  %v172 = vunpack.c.l.b16 %v85
  %v173 = vunpack.c.l.b16 %v86
  %v174 = vunpack.c.l.b16 %v87
  %v175 = vunpack.c.l.b16 %v88
  %v176 = vunpack.c.l.b16 %v89
  %v177 = vunpack.c.l.b16 %v90
  %v178 = vunpack.c.l.b16 %v91
  %v179 = vunpack.c.l.b16 %v92
  %v180 = vunpack.c.l.b16 %v93
  %v181 = vunpack.c.l.b16 %v94
  %v182 = vunpack.c.l.b16 %v95
  %v183 = vunpack.c.l.b16 %v96
  %v184 = vunpack.c.l.b16 %v97
  %v185 = vunpack.c.l.b16 %v98
  %v186 = vpack.c.b16 %v171, %v170
  %v187 = vpack.c.b16 %v173, %v172
  %v188 = vpack.c.b16 %v175, %v174
  %v189 = vpack.c.b16 %v177, %v176
  %v190 = vpack.c.b16 %v179, %v178
  %v191 = vpack.c.b16 %v181, %v180
  %v192 = vpack.c.b16 %v183, %v182
  %v193 = vpack.c.b16 %v185, %v184
  %202 = vmatprep.subr.bf16.mxu0 0
  %203 = vmatpush1.bf16.msra.mxu0 %v186
  %204 = vmatprep.subr.bf16.mxu0 0
  %205 = vmatpush1.bf16.msra.mxu0 %v187
  %206 = vmatprep.subr.bf16.mxu0 0
  %207 = vmatpush1.bf16.msra.mxu0 %v188
  %208 = vmatprep.subr.bf16.mxu0 0
  %209 = vmatpush1.bf16.msra.mxu0 %v189
  %210 = vmatprep.subr.bf16.mxu0 0
  %211 = vmatpush1.bf16.msra.mxu0 %v190
  %212 = vmatprep.subr.bf16.mxu0 0
  %213 = vmatpush1.bf16.msra.mxu0 %v191
  %214 = vmatprep.subr.bf16.mxu0 0
  %215 = vmatpush1.bf16.msra.mxu0 %v192
  %216 = vmatprep.subr.bf16.mxu0 0
  %217 = vmatpush1.bf16.msra.mxu0 %v193
  %218 = vmatprep.subr.bf16.mxu0 0
  %219 = vmatpush1.bf16.msra.mxu0 0
  %220 = vmatprep.subr.bf16.mxu0 0
  %221 = vmatpush1.bf16.msra.mxu0 0
  %222 = vmatprep.subr.bf16.mxu0 0
  %223 = vmatpush1.bf16.msra.mxu0 0
  %224 = vmatprep.subr.bf16.mxu0 0
  %225 = vmatpush1.bf16.msra.mxu0 0
  %226 = vmatprep.subr.bf16.mxu0 0
  %227 = vmatpush1.bf16.msra.mxu0 0
  %228 = vmatprep.subr.bf16.mxu0 0
  %229 = vmatpush1.bf16.msra.mxu0 0
  %230 = vmatprep.subr.bf16.mxu0 0
  %231 = vmatpush1.bf16.msra.mxu0 0
  %232 = vmatprep.subr.bf16.mxu0 0
  %233 = vmatpush1.bf16.msra.mxu0 0
  %234 = vmatprep.mubr.bf16.mxu0 0
  %235 = vmatmul.mubr.bf16.gmra.mrb[0].mxu0 %v138
  %v236 = vpop.f32.mrb[0].mxu0
  %v237 = vadd.f32 %v104, %v236
  %v238 = vpop.f32.mrb[0].mxu0
  %v239 = vpop.f32.mrb[0].mxu0
  %v240 = vadd.f32 %v104, %v239
  %v241 = vpop.f32.mrb[0].mxu0
  %242 = vmatprep.mubr.bf16.mxu0 0
  %243 = vmatmul.mubr.bf16.gmra.mrb[0].mxu0 %v139
  %v244 = vpop.f32.mrb[0].mxu0
  %v245 = vadd.f32 %v104, %v244
  %v246 = vpop.f32.mrb[0].mxu0
  %v247 = vpop.f32.mrb[0].mxu0
  %v248 = vadd.f32 %v104, %v247
  %v249 = vpop.f32.mrb[0].mxu0
  %250 = vmatprep.mubr.bf16.mxu0 0
  %251 = vmatmul.mubr.bf16.gmra.mrb[0].mxu0 %v140
  %v252 = vpop.f32.mrb[0].mxu0
  %v253 = vadd.f32 %v104, %v252
  %v254 = vpop.f32.mrb[0].mxu0
  %v255 = vpop.f32.mrb[0].mxu0
  %v256 = vadd.f32 %v104, %v255
  %v257 = vpop.f32.mrb[0].mxu0
  %258 = vmatprep.mubr.bf16.mxu0 0
  %259 = vmatmul.mubr.bf16.gmra.mrb[0].mxu0 %v141
  %v260 = vpop.f32.mrb[0].mxu0
  %v261 = vadd.f32 %v104, %v260
  %v262 = vpop.f32.mrb[0].mxu0
  %v263 = vpop.f32.mrb[0].mxu0
  %v264 = vadd.f32 %v104, %v263
  %v265 = vpop.f32.mrb[0].mxu0
  %266 = vmatprep.mubr.bf16.mxu0 0
  %267 = vmatmul.mubr.bf16.gmra.mrb[0].mxu0 %v142
  %v268 = vpop.f32.mrb[0].mxu0
  %v269 = vadd.f32 %v104, %v268
  %v270 = vpop.f32.mrb[0].mxu0
  %v271 = vpop.f32.mrb[0].mxu0
  %v272 = vadd.f32 %v104, %v271
  %v273 = vpop.f32.mrb[0].mxu0
  %274 = vmatprep.mubr.bf16.mxu0 0
  %275 = vmatmul.mubr.bf16.gmra.mrb[0].mxu0 %v143
  %v276 = vpop.f32.mrb[0].mxu0
  %v277 = vadd.f32 %v104, %v276
  %v278 = vpop.f32.mrb[0].mxu0
  %v279 = vpop.f32.mrb[0].mxu0
  %v280 = vadd.f32 %v104, %v279
  %v281 = vpop.f32.mrb[0].mxu0
  %282 = vmatprep.mubr.bf16.mxu0 0
  %283 = vmatmul.mubr.bf16.gmra.mrb[0].mxu0 %v144
  %v284 = vpop.f32.mrb[0].mxu0
  %v285 = vadd.f32 %v104, %v284
  %v286 = vpop.f32.mrb[0].mxu0
  %v287 = vpop.f32.mrb[0].mxu0
  %v288 = vadd.f32 %v104, %v287
  %v289 = vpop.f32.mrb[0].mxu0
  %290 = vmatprep.mubr.bf16.mxu0 0
  %291 = vmatmul.mubr.bf16.gmra.mrb[0].mxu0 %v145
  %v292 = vpop.f32.mrb[0].mxu0
  %v293 = vadd.f32 %v104, %v292
  %v294 = vpop.f32.mrb[0].mxu0
  %v295 = vpop.f32.mrb[0].mxu0
  %v296 = vadd.f32 %v104, %v295
  %v297 = vpop.f32.mrb[0].mxu0
  %298 = vdwg.mxu0
  %v299 = vpack.c.bf16 %v240, %v237
  %v300 = vpack.c.bf16 %v248, %v245
  %v301 = vpack.c.bf16 %v256, %v253
  %v302 = vpack.c.bf16 %v264, %v261
  %v303 = vpack.c.bf16 %v272, %v269
  %v304 = vpack.c.bf16 %v280, %v277
  %v305 = vpack.c.bf16 %v288, %v285
  %v306 = vpack.c.bf16 %v296, %v293
  %v315 = vunpack.c.l.b16 %v299
  %v316 = vunpack.c.h.b16 %v299
  %v317 = vunpack.c.l.b16 %v300
  %v318 = vunpack.c.h.b16 %v300
  %v319 = vunpack.c.l.b16 %v301
  %v320 = vunpack.c.h.b16 %v301
  %v321 = vunpack.c.l.b16 %v302
  %v322 = vunpack.c.h.b16 %v302
  %v323 = vunpack.c.l.b16 %v303
  %v324 = vunpack.c.h.b16 %v303
  %v325 = vunpack.c.l.b16 %v304
  %v326 = vunpack.c.h.b16 %v304
  %v327 = vunpack.c.l.b16 %v305
  %v328 = vunpack.c.h.b16 %v305
  %v329 = vunpack.c.l.b16 %v306
  %v330 = vunpack.c.h.b16 %v306
  %v331 = vpack.c.b16 %v315, %v315
  %v332 = vpack.c.b16 %v316, %v316
  %v333 = vpack.c.b16 %v317, %v317
  %v334 = vpack.c.b16 %v318, %v318
  %v335 = vpack.c.b16 %v319, %v319
  %v336 = vpack.c.b16 %v320, %v320
  %v337 = vpack.c.b16 %v321, %v321
  %v338 = vpack.c.b16 %v322, %v322
  %v339 = vpack.c.b16 %v323, %v323
  %v340 = vpack.c.b16 %v324, %v324
  %v341 = vpack.c.b16 %v325, %v325
  %v342 = vpack.c.b16 %v326, %v326
  %v343 = vpack.c.b16 %v327, %v327
  %v344 = vpack.c.b16 %v328, %v328
  %v345 = vpack.c.b16 %v329, %v329
  %v346 = vpack.c.b16 %v330, %v330
  %vm363 = vcmask 125952
  %364 = vst.msk [vmem:[%s3] sm:$0xf] %vm363, %v331
  %365 = vst.msk [vmem:[%s3 + $0x4] sm:$0xf] %vm363, %v332
  %366 = vst.msk [vmem:[%s3 + $0x8] sm:$0xf] %vm363, %v333
  %367 = vst.msk [vmem:[%s3 + $0xc] sm:$0xf] %vm363, %v334
  %368 = vst.msk [vmem:[%s3 + $0x10] sm:$0xf] %vm363, %v335
  %369 = vst.msk [vmem:[%s3 + $0x14] sm:$0xf] %vm363, %v336
  %370 = vst.msk [vmem:[%s3 + $0x18] sm:$0xf] %vm363, %v337
  %371 = vst.msk [vmem:[%s3 + $0x1c] sm:$0xf] %vm363, %v338
  %372 = vst.msk [vmem:[%s3 + $0x20] sm:$0xf] %vm363, %v339
  %373 = vst.msk [vmem:[%s3 + $0x24] sm:$0xf] %vm363, %v340
  %374 = vst.msk [vmem:[%s3 + $0x28] sm:$0xf] %vm363, %v341
  %375 = vst.msk [vmem:[%s3 + $0x2c] sm:$0xf] %vm363, %v342
  %376 = vst.msk [vmem:[%s3 + $0x30] sm:$0xf] %vm363, %v343
  %377 = vst.msk [vmem:[%s3 + $0x34] sm:$0xf] %vm363, %v344
  %378 = vst.msk [vmem:[%s3 + $0x38] sm:$0xf] %vm363, %v345
  %379 = vst.msk [vmem:[%s3 + $0x3c] sm:$0xf] %vm363, %v346
  %vm380 = vcmask 130048
  %v381 = vsel %vm380, %v237, 0.0
  %v382 = vsel %vm380, %v240, 0.0
  %v383 = vadd.f32 %v381, %v382
  %v384 = vsel %vm380, %v245, 0.0
  %v385 = vadd.f32 %v383, %v384
  %v386 = vsel %vm380, %v248, 0.0
  %v387 = vadd.f32 %v385, %v386
  %v388 = vsel %vm380, %v253, 0.0
  %v389 = vadd.f32 %v387, %v388
  %v390 = vsel %vm380, %v256, 0.0
  %v391 = vadd.f32 %v389, %v390
  %v392 = vsel %vm380, %v261, 0.0
  %v393 = vadd.f32 %v391, %v392
  %v394 = vsel %vm380, %v264, 0.0
  %v395 = vadd.f32 %v393, %v394
  %v396 = vsel %vm380, %v269, 0.0
  %v397 = vadd.f32 %v395, %v396
  %v398 = vsel %vm380, %v272, 0.0
  %v399 = vadd.f32 %v397, %v398
  %v400 = vsel %vm380, %v277, 0.0
  %v401 = vadd.f32 %v399, %v400
  %v402 = vsel %vm380, %v280, 0.0
  %v403 = vadd.f32 %v401, %v402
  %v404 = vsel %vm380, %v285, 0.0
  %v405 = vadd.f32 %v403, %v404
  %v406 = vsel %vm380, %v288, 0.0
  %v407 = vadd.f32 %v405, %v406
  %v408 = vsel %vm380, %v293, 0.0
  %v409 = vadd.f32 %v407, %v408
  %v410 = vsel %vm380, %v296, 0.0
  %v411 = vadd.f32 %v409, %v410
  %v412 = vrot.slane %v411, 4
  %v413 = vadd.f32 %v411, %v412
  %v414 = vrot.slane %v413, 2
  %v415 = vadd.f32 %v413, %v414
  %v416 = vrot.slane %v415, 1
  %v417 = vadd.f32 %v415, %v416
  %418 = vst.msk [vmem:[%s4] sm:$0xff] %vm380, %v417
  %v419 = vmul.f32 %v237, %v237
  %v420 = vmul.f32 %v240, %v240
  %v421 = vmul.f32 %v245, %v245
  %v422 = vmul.f32 %v248, %v248
  %v423 = vmul.f32 %v253, %v253
  %v424 = vmul.f32 %v256, %v256
  %v425 = vmul.f32 %v261, %v261
  %v426 = vmul.f32 %v264, %v264
  %v427 = vmul.f32 %v269, %v269
  %v428 = vmul.f32 %v272, %v272
  %v429 = vmul.f32 %v277, %v277
  %v430 = vmul.f32 %v280, %v280
  %v431 = vmul.f32 %v285, %v285
  %v432 = vmul.f32 %v288, %v288
  %v433 = vmul.f32 %v293, %v293
  %v434 = vmul.f32 %v296, %v296
  %v435 = vsel %vm380, %v419, 0.0
  %v436 = vsel %vm380, %v420, 0.0
  %v437 = vadd.f32 %v435, %v436
  %v438 = vsel %vm380, %v421, 0.0
  %v439 = vadd.f32 %v437, %v438
  %v440 = vsel %vm380, %v422, 0.0
  %v441 = vadd.f32 %v439, %v440
  %v442 = vsel %vm380, %v423, 0.0
  %v443 = vadd.f32 %v441, %v442
  %v444 = vsel %vm380, %v424, 0.0
  %v445 = vadd.f32 %v443, %v444
  %v446 = vsel %vm380, %v425, 0.0
  %v447 = vadd.f32 %v445, %v446
  %v448 = vsel %vm380, %v426, 0.0
  %v449 = vadd.f32 %v447, %v448
  %v450 = vsel %vm380, %v427, 0.0
  %v451 = vadd.f32 %v449, %v450
  %v452 = vsel %vm380, %v428, 0.0
  %v453 = vadd.f32 %v451, %v452
  %v454 = vsel %vm380, %v429, 0.0
  %v455 = vadd.f32 %v453, %v454
  %v456 = vsel %vm380, %v430, 0.0
  %v457 = vadd.f32 %v455, %v456
  %v458 = vsel %vm380, %v431, 0.0
  %v459 = vadd.f32 %v457, %v458
  %v460 = vsel %vm380, %v432, 0.0
  %v461 = vadd.f32 %v459, %v460
  %v462 = vsel %vm380, %v433, 0.0
  %v463 = vadd.f32 %v461, %v462
  %v464 = vsel %vm380, %v434, 0.0
  %v465 = vadd.f32 %v463, %v464
  %v466 = vrot.slane %v465, 4
  %v467 = vadd.f32 %v465, %v466
  %v468 = vrot.slane %v467, 2
  %v469 = vadd.f32 %v467, %v468
  %v470 = vrot.slane %v469, 1
  %v471 = vadd.f32 %v469, %v470
  %472 = vst.msk [vmem:[%s5] sm:$0xff] %vm380, %v471
  // Predicated region
  $region14: #{_lambda_.6} parent=0 // pred_check
    _
  $region15: #{_lambda_.6} parent=0 // pred_check_branch
    %474 = sbr.rel (0) target = $region17
  $region16: #{_lambda_.6} parent=0 // pred_region
    _
  $region17: #{_lambda_.6} parent=0 // pred_fallthru
    _
  // Predicated region
  $region18: #{_lambda_.6} parent=0 // pred_check
    _
  $region19: #{_lambda_.6} parent=0 // pred_check_branch
    %476 = sbr.rel (0) target = $region21
  $region20: #{_lambda_.6} parent=0 // pred_region
    _
  $region21: #{_lambda_.6} parent=0 // pred_fallthru
    _
  // Predicated region
  $region22: #{_lambda_.6} parent=0 // pred_check
    _
  $region23: #{_lambda_.6} parent=0 // pred_check_branch
    %478 = sbr.rel (0) target = $region25
  $region24: #{_lambda_.6} parent=0 // pred_region
    _
  $region25: #{_lambda_.6} parent=0 // pred_fallthru
    _
  // Predicated region
  $region26: #{_lambda_.6} parent=0 // pred_check
    _
  $region27: #{_lambda_.6} parent=0 // pred_check_branch
    %480 = sbr.rel (0) target = $region29
  $region28: #{_lambda_.6} parent=0 // pred_region
    _
  $region29: #{_lambda_.6} parent=0 // pred_fallthru
    _
  // Predicated region
  $region30: #{_lambda_.6} parent=0 // pred_check
    _
  $region31: #{_lambda_.6} parent=0 // pred_check_branch
    %482 = sbr.rel (0) target = $region33
  $region32: #{_lambda_.6} parent=0 // pred_region
    _
  $region33: #{_lambda_.6} parent=0 // pred_fallthru
    _
  // Predicated region
  $region34: #{_lambda_.6} parent=0 // pred_check
    _
  $region35: #{_lambda_.6} parent=0 // pred_check_branch
    %484 = sbr.rel (0) target = $region37
  $region36: #{_lambda_.6} parent=0 // pred_region
    _
  $region37: #{_lambda_.6} parent=0 // pred_fallthru
    _

// kernel: tile.15
$region0: #{tile.15}
  #allocation0 [shape = 's32[1]{0}', space=sflag, size = 0x4, scoped, tag = 'scoped memory for tile.15']
  %s0 = inlined_call_operand.<no memory space> [shape: f32[], index: 0, kind: input, shape index: {}]
  %s1 = inlined_call_operand.vmem [shape: f32[1,32], index: 1, kind: output, shape index: {}]
  %v2 = vstv %s0
  %3 = vst [vmem:[%s1] sm:$0x1] %v2

// kernel: tile.19
$region0: #{tile.19}
  #allocation0 [shape = 's32[1]{0}', space=sflag, size = 0x4, scoped, tag = 'scoped memory for tile.19']
  %s0 = inlined_call_operand.vmem [shape: f32[8], index: 0, kind: input, shape index: {}]
  %s1 = inlined_call_operand.vmem [shape: f32[16,8], index: 1, kind: output, shape index: {}]
  // Predicated region
  $region2: #{tile.19} parent=0 // pred_check
    _
  $region3: #{tile.19} parent=0 // pred_check_branch
    %3 = sbr.rel (0) target = $region5
  $region4: #{tile.19} parent=0 // pred_region
    _
  $region5: #{tile.19} parent=0 // pred_fallthru
    _
  %v4 = vld [vmem:[%s0] ss:$0 sm:$0xff]
  %5 = vst [vmem:[%s1] sm:$0xff] %v4
  %s6 = scalar_lea.vmem %s1, 8
  %7 = vst [vmem:[%s6] sm:$0xff] %v4

// kernel: tile.20
$region0: #{tile.20}
  %s0 = inlined_call_operand.vmem [shape: f32[16,8], index: 0, kind: input, shape index: {}]
  %s1 = inlined_call_operand.vmem [shape: f32[1,128], index: 1, kind: output, shape index: {}]
  $region1: #{tile.20} parent=0
    #allocation0 [shape = 'u8[4096]{0}', space=vmem, size = 0x1000, scoped, tag = 'scoped mem for output reshape']
    %v2 = vld [vmem:[%s0] sm:$0x1]
    %vm3 = vcmask 64512
    %4 = vst.msk [vmem:[#allocation0] sm:$0x1] %vm3, %v2
    %s5 = scalar_lea.vmem %s0, 15
    %v6 = vld [vmem:[%s5] sm:$0x1]
    %7 = vrot.lane.b32.xlu0 %v6, 120
    %v8 = vpop.permute.xlu0 %7
    %vm9 = vcmask 1048512
    %10 = vst.msk [vmem:[#allocation0] sm:$0x1] %vm9, %v8
    %s11 = scalar_lea.vmem %s0, 14
    %v12 = vld [vmem:[%s11] sm:$0x1]
    %13 = vrot.lane.b32.xlu0 %v12, 112
    %v14 = vpop.permute.xlu0 %13
    %vm15 = vcmask 982912
    %16 = vst.msk [vmem:[#allocation0] sm:$0x1] %vm15, %v14
    %s17 = scalar_lea.vmem %s0, 13
    %v18 = vld [vmem:[%s17] sm:$0x1]
    %19 = vrot.lane.b32.xlu0 %v18, 104
    %v20 = vpop.permute.xlu0 %19
    %vm21 = vcmask 917312
    %22 = vst.msk [vmem:[#allocation0] sm:$0x1] %vm21, %v20
    %s23 = scalar_lea.vmem %s0, 12
    %v24 = vld [vmem:[%s23] sm:$0x1]
    %25 = vrot.lane.b32.xlu0 %v24, 96
    %v26 = vpop.permute.xlu0 %25
    %vm27 = vcmask 851712
    %28 = vst.msk [vmem:[#allocation0] sm:$0x1] %vm27, %v26
    %s29 = scalar_lea.vmem %s0, 11
    %v30 = vld [vmem:[%s29] sm:$0x1]
    %31 = vrot.lane.b32.xlu0 %v30, 88
    %v32 = vpop.permute.xlu0 %31
    %vm33 = vcmask 786112
    %34 = vst.msk [vmem:[#allocation0] sm:$0x1] %vm33, %v32
    %s35 = scalar_lea.vmem %s0, 10
    %v36 = vld [vmem:[%s35] sm:$0x1]
    %37 = vrot.lane.b32.xlu0 %v36, 80
    %v38 = vpop.permute.xlu0 %37
    %vm39 = vcmask 720512
    %40 = vst.msk [vmem:[#allocation0] sm:$0x1] %vm39, %v38
    %s41 = scalar_lea.vmem %s0, 9
    %v42 = vld [vmem:[%s41] sm:$0x1]
    %43 = vrot.lane.b32.xlu0 %v42, 72
    %v44 = vpop.permute.xlu0 %43
    %vm45 = vcmask 654912
    %46 = vst.msk [vmem:[#allocation0] sm:$0x1] %vm45, %v44
    %s47 = scalar_lea.vmem %s0, 8
    %v48 = vld [vmem:[%s47] sm:$0x1]
    %49 = vrot.lane.b32.xlu0 %v48, 64
    %v50 = vpop.permute.xlu0 %49
    %vm51 = vcmask 589312
    %52 = vst.msk [vmem:[#allocation0] sm:$0x1] %vm51, %v50
    %s53 = scalar_lea.vmem %s0, 7
    %v54 = vld [vmem:[%s53] sm:$0x1]
    %55 = vrot.lane.b32.xlu0 %v54, 56
    %v56 = vpop.permute.xlu0 %55
    %vm57 = vcmask 523712
    %58 = vst.msk [vmem:[#allocation0] sm:$0x1] %vm57, %v56
    %s59 = scalar_lea.vmem %s0, 6
    %v60 = vld [vmem:[%s59] sm:$0x1]
    %61 = vrot.lane.b32.xlu0 %v60, 48
    %v62 = vpop.permute.xlu0 %61
    %vm63 = vcmask 458112
    %64 = vst.msk [vmem:[#allocation0] sm:$0x1] %vm63, %v62
    %s65 = scalar_lea.vmem %s0, 5
    %v66 = vld [vmem:[%s65] sm:$0x1]
    %67 = vrot.lane.b32.xlu0 %v66, 40
    %v68 = vpop.permute.xlu0 %67
    %vm69 = vcmask 392512
    %70 = vst.msk [vmem:[#allocation0] sm:$0x1] %vm69, %v68
    %s71 = scalar_lea.vmem %s0, 4
    %v72 = vld [vmem:[%s71] sm:$0x1]
    %73 = vrot.lane.b32.xlu0 %v72, 32
    %v74 = vpop.permute.xlu0 %73
    %vm75 = vcmask 326912
    %76 = vst.msk [vmem:[#allocation0] sm:$0x1] %vm75, %v74
    %s77 = scalar_lea.vmem %s0, 3
    %v78 = vld [vmem:[%s77] sm:$0x1]
    %79 = vrot.lane.b32.xlu0 %v78, 24
    %v80 = vpop.permute.xlu0 %79
    %vm81 = vcmask 261312
    %82 = vst.msk [vmem:[#allocation0] sm:$0x1] %vm81, %v80
    %s83 = scalar_lea.vmem %s0, 2
    %v84 = vld [vmem:[%s83] sm:$0x1]
    %85 = vrot.lane.b32.xlu0 %v84, 16
    %v86 = vpop.permute.xlu0 %85
    %vm87 = vcmask 195712
    %88 = vst.msk [vmem:[#allocation0] sm:$0x1] %vm87, %v86
    %s89 = scalar_lea.vmem %s0, 1
    %v90 = vld [vmem:[%s89] sm:$0x1]
    %91 = vrot.lane.b32.xlu0 %v90, 8
    %v92 = vpop.permute.xlu0 %91
    %vm93 = vcmask 130112
    %94 = vst.msk [vmem:[#allocation0] sm:$0x1] %vm93, %v92
    %s96 = sshllo.u32 0, 1
    %v98 = vld [vmem:[#allocation0] sm:%s96]
    %s99 = sshllo.u32 0, 1
    %100 = vst [vmem:[%s1] sm:%s99] %v98

// kernel: _lambda_.7
$region0: #{_lambda_.7}
  #allocation0 [shape = 'u32[]', space=smem, size = 0x4, offset = 0x4, fixed_abs, tag = 'smem constant byte address 0x4 - core index']
  #allocation1 [shape = 'u32[144,128]{1,0:T(1,128)}', space=vmem, size = 0x12000, scoped, tag = 'internal scratch']
  %s0 = inlined_call_operand.vmem [shape: bf16[128,288], index: 0, kind: input, shape index: {}]
  %s1 = inlined_call_operand.vmem [shape: bf16[288,32], index: 1, kind: input, shape index: {}]
  %s2 = inlined_call_operand.vmem [shape: f32[1,32], index: 2, kind: input, shape index: {}]
  %s3 = inlined_call_operand.vmem [shape: bf16[128,32], index: 3, kind: output, shape index: {0}]
  %s4 = inlined_call_operand.vmem [shape: f32[8,32], index: 4, kind: output, shape index: {1}]
  %s5 = inlined_call_operand.vmem [shape: f32[8,32], index: 5, kind: output, shape index: {2}]
  %6 = xla_tuple %s3, %s4, %s5
  %s7 = sld [smem:[#allocation0]]
  $region38: #{_lambda_.7} parent=0
    _
  %s9 = ssub.s32 1, %s7
  %s10 = scalar_select 0, %s9, %s7
  // Predicated region
  $region2: #{_lambda_.7} parent=0 // pred_check
    _
  $region3: #{_lambda_.7} parent=0 // pred_check_branch
    %12 = sbr.rel (0) target = $region5
  $region4: #{_lambda_.7} parent=0 // pred_region
    _
  $region5: #{_lambda_.7} parent=0 // pred_fallthru
    _
  // Predicated region
  $region6: #{_lambda_.7} parent=0 // pred_check
    _
  $region7: #{_lambda_.7} parent=0 // pred_check_branch
    %14 = sbr.rel (0) target = $region9
  $region8: #{_lambda_.7} parent=0 // pred_region
    _
  $region9: #{_lambda_.7} parent=0 // pred_fallthru
    _
  // Predicated region
  $region10: #{_lambda_.7} parent=0 // pred_check
    _
  $region11: #{_lambda_.7} parent=0 // pred_check_branch
    %16 = sbr.rel (0) target = $region13
  $region12: #{_lambda_.7} parent=0 // pred_region
    _
  $region13: #{_lambda_.7} parent=0 // pred_fallthru
    _
  %v18 = vld [vmem:[%s0] sm:$0xff]
  %v19 = vld [vmem:[%s0 + $0x8] sm:$0xf]
  %v20 = vld [vmem:[%s0 + $0xc] sm:$0xff]
  %v21 = vld [vmem:[%s0 + $0x14] sm:$0xf]
  %v22 = vld [vmem:[%s0 + $0x18] sm:$0xff]
  %v23 = vld [vmem:[%s0 + $0x20] sm:$0xf]
  %v24 = vld [vmem:[%s0 + $0x24] sm:$0xff]
  %v25 = vld [vmem:[%s0 + $0x2c] sm:$0xf]
  %v26 = vld [vmem:[%s0 + $0x30] sm:$0xff]
  %v27 = vld [vmem:[%s0 + $0x38] sm:$0xf]
  %v28 = vld [vmem:[%s0 + $0x3c] sm:$0xff]
  %v29 = vld [vmem:[%s0 + $0x44] sm:$0xf]
  %v30 = vld [vmem:[%s0 + $0x48] sm:$0xff]
  %v31 = vld [vmem:[%s0 + $0x50] sm:$0xf]
  %v32 = vld [vmem:[%s0 + $0x54] sm:$0xff]
  %v33 = vld [vmem:[%s0 + $0x5c] sm:$0xf]
  %v34 = vld [vmem:[%s0 + $0x60] sm:$0xff]
  %v35 = vld [vmem:[%s0 + $0x68] sm:$0xf]
  %v36 = vld [vmem:[%s0 + $0x6c] sm:$0xff]
  %v37 = vld [vmem:[%s0 + $0x74] sm:$0xf]
  %v38 = vld [vmem:[%s0 + $0x78] sm:$0xff]
  %v39 = vld [vmem:[%s0 + $0x80] sm:$0xf]
  %v40 = vld [vmem:[%s0 + $0x84] sm:$0xff]
  %v41 = vld [vmem:[%s0 + $0x8c] sm:$0xf]
  %v42 = vld [vmem:[%s0 + $0x90] sm:$0xff]
  %v43 = vld [vmem:[%s0 + $0x98] sm:$0xf]
  %v44 = vld [vmem:[%s0 + $0x9c] sm:$0xff]
  %v45 = vld [vmem:[%s0 + $0xa4] sm:$0xf]
  %v46 = vld [vmem:[%s0 + $0xa8] sm:$0xff]
  %v47 = vld [vmem:[%s0 + $0xb0] sm:$0xf]
  %v48 = vld [vmem:[%s0 + $0xb4] sm:$0xff]
  %v49 = vld [vmem:[%s0 + $0xbc] sm:$0xf]
  %v50 = vmax.bf16 %v18, 0
  %v51 = vmax.bf16 %v19, 0
  %v52 = vmax.bf16 %v20, 0
  %v53 = vmax.bf16 %v21, 0
  %v54 = vmax.bf16 %v22, 0
  %v55 = vmax.bf16 %v23, 0
  %v56 = vmax.bf16 %v24, 0
  %v57 = vmax.bf16 %v25, 0
  %v58 = vmax.bf16 %v26, 0
  %v59 = vmax.bf16 %v27, 0
  %v60 = vmax.bf16 %v28, 0
  %v61 = vmax.bf16 %v29, 0
  %v62 = vmax.bf16 %v30, 0
  %v63 = vmax.bf16 %v31, 0
  %v64 = vmax.bf16 %v32, 0
  %v65 = vmax.bf16 %v33, 0
  %v66 = vmax.bf16 %v34, 0
  %v67 = vmax.bf16 %v35, 0
  %v68 = vmax.bf16 %v36, 0
  %v69 = vmax.bf16 %v37, 0
  %v70 = vmax.bf16 %v38, 0
  %v71 = vmax.bf16 %v39, 0
  %v72 = vmax.bf16 %v40, 0
  %v73 = vmax.bf16 %v41, 0
  %v74 = vmax.bf16 %v42, 0
  %v75 = vmax.bf16 %v43, 0
  %v76 = vmax.bf16 %v44, 0
  %v77 = vmax.bf16 %v45, 0
  %v78 = vmax.bf16 %v46, 0
  %v79 = vmax.bf16 %v47, 0
  %v80 = vmax.bf16 %v48, 0
  %v81 = vmax.bf16 %v49, 0
  %v82 = vld [vmem:[%s1] sm:$0xf]
  %v83 = vld [vmem:[%s1 + $0x4] sm:$0xf]
  %v84 = vld [vmem:[%s1 + $0x8] sm:$0xf]
  %v85 = vld [vmem:[%s1 + $0xc] sm:$0xf]
  %v86 = vld [vmem:[%s1 + $0x10] sm:$0xf]
  %v87 = vld [vmem:[%s1 + $0x14] sm:$0xf]
  %v88 = vld [vmem:[%s1 + $0x18] sm:$0xf]
  %v89 = vld [vmem:[%s1 + $0x1c] sm:$0xf]
  %v90 = vld [vmem:[%s1 + $0x20] sm:$0xf]
  %v91 = vld [vmem:[%s1 + $0x24] sm:$0xf]
  %v92 = vld [vmem:[%s1 + $0x28] sm:$0xf]
  %v93 = vld [vmem:[%s1 + $0x2c] sm:$0xf]
  %v94 = vld [vmem:[%s1 + $0x30] sm:$0xf]
  %v95 = vld [vmem:[%s1 + $0x34] sm:$0xf]
  %v96 = vld [vmem:[%s1 + $0x38] sm:$0xf]
  %v97 = vld [vmem:[%s1 + $0x3c] sm:$0xf]
  %v98 = vld [vmem:[%s1 + $0x40] sm:$0xf]
  %v99 = vld [vmem:[%s1 + $0x44] sm:$0xf]
  %v100 = vld [vmem:[%s1 + $0x48] sm:$0xf]
  %v101 = vld [vmem:[%s1 + $0x4c] sm:$0xf]
  %v102 = vld [vmem:[%s1 + $0x50] sm:$0xf]
  %v103 = vld [vmem:[%s1 + $0x54] sm:$0xf]
  %v104 = vld [vmem:[%s1 + $0x58] sm:$0xf]
  %v105 = vld [vmem:[%s1 + $0x5c] sm:$0xf]
  %v106 = vld [vmem:[%s1 + $0x60] sm:$0xf]
  %v107 = vld [vmem:[%s1 + $0x64] sm:$0xf]
  %v108 = vld [vmem:[%s1 + $0x68] sm:$0xf]
  %v109 = vld [vmem:[%s1 + $0x6c] sm:$0xf]
  %v110 = vld [vmem:[%s1 + $0x70] sm:$0xf]
  %v111 = vld [vmem:[%s1 + $0x74] sm:$0xf]
  %v112 = vld [vmem:[%s1 + $0x78] sm:$0xf]
  %v113 = vld [vmem:[%s1 + $0x7c] sm:$0xf]
  %v114 = vld [vmem:[%s1 + $0x80] sm:$0xf]
  %v115 = vld [vmem:[%s1 + $0x84] sm:$0xf]
  %v116 = vld [vmem:[%s1 + $0x88] sm:$0xf]
  %v117 = vld [vmem:[%s1 + $0x8c] sm:$0xf]
  %v118 = vld [vmem:[%s2] sm:$0x1]
  %v120 = vlaneseq
  %v121 = vshrl.u32 %v120, 7
  %v122 = vsub.s32 0, %v121
  %v123 = vrot.slane %v118, %v122
  %v157 = vunpack.c.l.b16 %v50
  %v158 = vunpack.c.h.b16 %v50
  %v159 = vunpack.c.l.b16 %v51
  %v160 = vunpack.c.l.b16 %v52
  %v161 = vunpack.c.h.b16 %v52
  %v162 = vunpack.c.l.b16 %v53
  %v163 = vunpack.c.l.b16 %v54
  %v164 = vunpack.c.h.b16 %v54
  %v165 = vunpack.c.l.b16 %v55
  %v166 = vunpack.c.l.b16 %v56
  %v167 = vunpack.c.h.b16 %v56
  %v168 = vunpack.c.l.b16 %v57
  %v169 = vunpack.c.l.b16 %v58
  %v170 = vunpack.c.h.b16 %v58
  %v171 = vunpack.c.l.b16 %v59
  %v172 = vunpack.c.l.b16 %v60
  %v173 = vunpack.c.h.b16 %v60
  %v174 = vunpack.c.l.b16 %v61
  %v175 = vunpack.c.l.b16 %v62
  %v176 = vunpack.c.h.b16 %v62
  %v177 = vunpack.c.l.b16 %v63
  %v178 = vunpack.c.l.b16 %v64
  %v179 = vunpack.c.h.b16 %v64
  %v180 = vunpack.c.l.b16 %v65
  %v181 = vunpack.c.l.b16 %v66
  %v182 = vunpack.c.h.b16 %v66
  %v183 = vunpack.c.l.b16 %v67
  %v184 = vunpack.c.l.b16 %v68
  %v185 = vunpack.c.h.b16 %v68
  %v186 = vunpack.c.l.b16 %v69
  %v187 = vunpack.c.l.b16 %v70
  %v188 = vunpack.c.h.b16 %v70
  %v189 = vunpack.c.l.b16 %v71
  %v190 = vunpack.c.l.b16 %v72
  %v191 = vunpack.c.h.b16 %v72
  %v192 = vunpack.c.l.b16 %v73
  %v193 = vunpack.c.l.b16 %v74
  %v194 = vunpack.c.h.b16 %v74
  %v195 = vunpack.c.l.b16 %v75
  %v196 = vunpack.c.l.b16 %v76
  %v197 = vunpack.c.h.b16 %v76
  %v198 = vunpack.c.l.b16 %v77
  %v199 = vunpack.c.l.b16 %v78
  %v200 = vunpack.c.h.b16 %v78
  %v201 = vunpack.c.l.b16 %v79
  %v202 = vunpack.c.l.b16 %v80
  %v203 = vunpack.c.h.b16 %v80
  %v204 = vunpack.c.l.b16 %v81
  %v205 = vpack.c.b16 %v160, %v157
  %v206 = vpack.c.b16 %v161, %v158
  %v207 = vpack.c.b16 %v162, %v159
  %v208 = vpack.c.b16 %v166, %v163
  %v209 = vpack.c.b16 %v167, %v164
  %v210 = vpack.c.b16 %v168, %v165
  %v211 = vpack.c.b16 %v172, %v169
  %v212 = vpack.c.b16 %v173, %v170
  %v213 = vpack.c.b16 %v174, %v171
  %v214 = vpack.c.b16 %v178, %v175
  %v215 = vpack.c.b16 %v179, %v176
  %v216 = vpack.c.b16 %v180, %v177
  %v217 = vpack.c.b16 %v184, %v181
  %v218 = vpack.c.b16 %v185, %v182
  %v219 = vpack.c.b16 %v186, %v183
  %v220 = vpack.c.b16 %v190, %v187
  %v221 = vpack.c.b16 %v191, %v188
  %v222 = vpack.c.b16 %v192, %v189
  %v223 = vpack.c.b16 %v196, %v193
  %v224 = vpack.c.b16 %v197, %v194
  %v225 = vpack.c.b16 %v198, %v195
  %v226 = vpack.c.b16 %v202, %v199
  %v227 = vpack.c.b16 %v203, %v200
  %v228 = vpack.c.b16 %v204, %v201
  %v281 = vunpack.c.l.b16 %v82
  %v282 = vunpack.c.l.b16 %v83
  %v283 = vunpack.c.l.b16 %v84
  %v284 = vunpack.c.l.b16 %v85
  %v285 = vunpack.c.l.b16 %v86
  %v286 = vunpack.c.l.b16 %v87
  %v287 = vunpack.c.l.b16 %v88
  %v288 = vunpack.c.l.b16 %v89
  %v289 = vunpack.c.l.b16 %v90
  %v290 = vunpack.c.l.b16 %v91
  %v291 = vunpack.c.l.b16 %v92
  %v292 = vunpack.c.l.b16 %v93
  %v293 = vunpack.c.l.b16 %v94
  %v294 = vunpack.c.l.b16 %v95
  %v295 = vunpack.c.l.b16 %v96
  %v296 = vunpack.c.l.b16 %v97
  %v297 = vunpack.c.l.b16 %v98
  %v298 = vunpack.c.l.b16 %v99
  %v299 = vunpack.c.l.b16 %v100
  %v300 = vunpack.c.l.b16 %v101
  %v301 = vunpack.c.l.b16 %v102
  %v302 = vunpack.c.l.b16 %v103
  %v303 = vunpack.c.l.b16 %v104
  %v304 = vunpack.c.l.b16 %v105
  %v305 = vunpack.c.l.b16 %v106
  %v306 = vunpack.c.l.b16 %v107
  %v307 = vunpack.c.l.b16 %v108
  %v308 = vunpack.c.l.b16 %v109
  %v309 = vunpack.c.l.b16 %v110
  %v310 = vunpack.c.l.b16 %v111
  %v311 = vunpack.c.l.b16 %v112
  %v312 = vunpack.c.l.b16 %v113
  %v313 = vunpack.c.l.b16 %v114
  %v314 = vunpack.c.l.b16 %v115
  %v315 = vunpack.c.l.b16 %v116
  %v316 = vunpack.c.l.b16 %v117
  %v317 = vpack.c.b16 %v282, %v281
  %v318 = vpack.c.b16 %v284, %v283
  %v319 = vpack.c.b16 %v286, %v285
  %v320 = vpack.c.b16 %v288, %v287
  %v321 = vpack.c.b16 %v290, %v289
  %v322 = vpack.c.b16 %v292, %v291
  %v323 = vpack.c.b16 %v294, %v293
  %v324 = vpack.c.b16 %v296, %v295
  %v325 = vpack.c.b16 %v298, %v297
  %v326 = vpack.c.b16 %v300, %v299
  %v327 = vpack.c.b16 %v302, %v301
  %v328 = vpack.c.b16 %v304, %v303
  %v329 = vpack.c.b16 %v306, %v305
  %v330 = vpack.c.b16 %v308, %v307
  %v331 = vpack.c.b16 %v310, %v309
  %v332 = vpack.c.b16 %v312, %v311
  %v333 = vpack.c.b16 %v314, %v313
  %v334 = vpack.c.b16 %v316, %v315
  %vm353 = vcmask 261120
  %v355 = vsel %vm353, %v207, 0
  %v358 = vsel %vm353, %v210, 0
  %v361 = vsel %vm353, %v213, 0
  %v364 = vsel %vm353, %v216, 0
  %v367 = vsel %vm353, %v219, 0
  %v370 = vsel %vm353, %v222, 0
  %v373 = vsel %vm353, %v225, 0
  %v376 = vsel %vm353, %v228, 0
  %378 = vmatprep.subr.bf16.mxu0 0
  %379 = vmatpush1.bf16.msra.mxu0 %v317
  %380 = vmatprep.subr.bf16.mxu0 0
  %381 = vmatpush1.bf16.msra.mxu0 %v318
  %382 = vmatprep.subr.bf16.mxu0 0
  %383 = vmatpush1.bf16.msra.mxu0 %v319
  %384 = vmatprep.subr.bf16.mxu0 0
  %385 = vmatpush1.bf16.msra.mxu0 %v320
  %386 = vmatprep.subr.bf16.mxu0 0
  %387 = vmatpush1.bf16.msra.mxu0 %v321
  %388 = vmatprep.subr.bf16.mxu0 0
  %389 = vmatpush1.bf16.msra.mxu0 %v322
  %390 = vmatprep.subr.bf16.mxu0 0
  %391 = vmatpush1.bf16.msra.mxu0 %v323
  %392 = vmatprep.subr.bf16.mxu0 0
  %393 = vmatpush1.bf16.msra.mxu0 %v324
  %394 = vmatprep.subr.bf16.mxu0 0
  %395 = vmatpush1.bf16.msra.mxu0 %v325
  %396 = vmatprep.subr.bf16.mxu0 0
  %397 = vmatpush1.bf16.msra.mxu0 %v326
  %398 = vmatprep.subr.bf16.mxu0 0
  %399 = vmatpush1.bf16.msra.mxu0 %v327
  %400 = vmatprep.subr.bf16.mxu0 0
  %401 = vmatpush1.bf16.msra.mxu0 %v328
  %402 = vmatprep.subr.bf16.mxu0 0
  %403 = vmatpush1.bf16.msra.mxu0 %v329
  %404 = vmatprep.subr.bf16.mxu0 0
  %405 = vmatpush1.bf16.msra.mxu0 %v330
  %406 = vmatprep.subr.bf16.mxu0 0
  %407 = vmatpush1.bf16.msra.mxu0 %v331
  %408 = vmatprep.subr.bf16.mxu0 0
  %409 = vmatpush1.bf16.msra.mxu0 %v332
  %410 = vmatprep.mubr.bf16.mxu0 %v206
  %411 = vmatmul.mubr.bf16.gmra.mrb[0].mxu0 %v205
  %v412 = vpop.f32.mrb[0].mxu0
  %v413 = vadd.f32 %v123, %v412
  %v414 = vpop.f32.mrb[0].mxu0
  %v415 = vpop.f32.mrb[0].mxu0
  %v416 = vadd.f32 %v123, %v415
  %v417 = vpop.f32.mrb[0].mxu0
  %418 = vmatprep.mubr.bf16.mxu0 %v209
  %419 = vmatmul.mubr.bf16.gmra.mrb[0].mxu0 %v208
  %v420 = vpop.f32.mrb[0].mxu0
  %v421 = vadd.f32 %v123, %v420
  %v422 = vpop.f32.mrb[0].mxu0
  %v423 = vpop.f32.mrb[0].mxu0
  %v424 = vadd.f32 %v123, %v423
  %v425 = vpop.f32.mrb[0].mxu0
  %426 = vmatprep.mubr.bf16.mxu0 %v212
  %427 = vmatmul.mubr.bf16.gmra.mrb[0].mxu0 %v211
  %v428 = vpop.f32.mrb[0].mxu0
  %v429 = vadd.f32 %v123, %v428
  %v430 = vpop.f32.mrb[0].mxu0
  %v431 = vpop.f32.mrb[0].mxu0
  %v432 = vadd.f32 %v123, %v431
  %v433 = vpop.f32.mrb[0].mxu0
  %434 = vmatprep.mubr.bf16.mxu0 %v215
  %435 = vmatmul.mubr.bf16.gmra.mrb[0].mxu0 %v214
  %v436 = vpop.f32.mrb[0].mxu0
  %v437 = vadd.f32 %v123, %v436
  %v438 = vpop.f32.mrb[0].mxu0
  %v439 = vpop.f32.mrb[0].mxu0
  %v440 = vadd.f32 %v123, %v439
  %v441 = vpop.f32.mrb[0].mxu0
  %442 = vmatprep.mubr.bf16.mxu0 %v218
  %443 = vmatmul.mubr.bf16.gmra.mrb[0].mxu0 %v217
  %v444 = vpop.f32.mrb[0].mxu0
  %v445 = vadd.f32 %v123, %v444
  %v446 = vpop.f32.mrb[0].mxu0
  %v447 = vpop.f32.mrb[0].mxu0
  %v448 = vadd.f32 %v123, %v447
  %v449 = vpop.f32.mrb[0].mxu0
  %450 = vmatprep.mubr.bf16.mxu0 %v221
  %451 = vmatmul.mubr.bf16.gmra.mrb[0].mxu0 %v220
  %v452 = vpop.f32.mrb[0].mxu0
  %v453 = vadd.f32 %v123, %v452
  %v454 = vpop.f32.mrb[0].mxu0
  %v455 = vpop.f32.mrb[0].mxu0
  %v456 = vadd.f32 %v123, %v455
  %v457 = vpop.f32.mrb[0].mxu0
  %458 = vmatprep.mubr.bf16.mxu0 %v224
  %459 = vmatmul.mubr.bf16.gmra.mrb[0].mxu0 %v223
  %v460 = vpop.f32.mrb[0].mxu0
  %v461 = vadd.f32 %v123, %v460
  %v462 = vpop.f32.mrb[0].mxu0
  %v463 = vpop.f32.mrb[0].mxu0
  %v464 = vadd.f32 %v123, %v463
  %v465 = vpop.f32.mrb[0].mxu0
  %466 = vmatprep.mubr.bf16.mxu0 %v227
  %467 = vmatmul.mubr.bf16.gmra.mrb[0].mxu0 %v226
  %v468 = vpop.f32.mrb[0].mxu0
  %v469 = vadd.f32 %v123, %v468
  %v470 = vpop.f32.mrb[0].mxu0
  %v471 = vpop.f32.mrb[0].mxu0
  %v472 = vadd.f32 %v123, %v471
  %v473 = vpop.f32.mrb[0].mxu0
  %474 = vdwg.mxu0
  %475 = vmatprep.subr.bf16.mxu0 0
  %476 = vmatpush1.bf16.msra.mxu0 %v333
  %477 = vmatprep.subr.bf16.mxu0 0
  %478 = vmatpush1.bf16.msra.mxu0 %v334
  %479 = vmatprep.subr.bf16.mxu0 0
  %480 = vmatpush1.bf16.msra.mxu0 0
  %481 = vmatprep.subr.bf16.mxu0 0
  %482 = vmatpush1.bf16.msra.mxu0 0
  %483 = vmatprep.subr.bf16.mxu0 0
  %484 = vmatpush1.bf16.msra.mxu0 0
  %485 = vmatprep.subr.bf16.mxu0 0
  %486 = vmatpush1.bf16.msra.mxu0 0
  %487 = vmatprep.subr.bf16.mxu0 0
  %488 = vmatpush1.bf16.msra.mxu0 0
  %489 = vmatprep.subr.bf16.mxu0 0
  %490 = vmatpush1.bf16.msra.mxu0 0
  %491 = vmatprep.subr.bf16.mxu0 0
  %492 = vmatpush1.bf16.msra.mxu0 0
  %493 = vmatprep.subr.bf16.mxu0 0
  %494 = vmatpush1.bf16.msra.mxu0 0
  %495 = vmatprep.subr.bf16.mxu0 0
  %496 = vmatpush1.bf16.msra.mxu0 0
  %497 = vmatprep.subr.bf16.mxu0 0
  %498 = vmatpush1.bf16.msra.mxu0 0
  %499 = vmatprep.subr.bf16.mxu0 0
  %500 = vmatpush1.bf16.msra.mxu0 0
  %501 = vmatprep.subr.bf16.mxu0 0
  %502 = vmatpush1.bf16.msra.mxu0 0
  %503 = vmatprep.subr.bf16.mxu0 0
  %504 = vmatpush1.bf16.msra.mxu0 0
  %505 = vmatprep.subr.bf16.mxu0 0
  %506 = vmatpush1.bf16.msra.mxu0 0
  %507 = vmatprep.mubr.bf16.mxu0 0
  %508 = vmatmul.mubr.bf16.gmra.mrb[0].mxu0 %v355
  %v509 = vpop.f32.mrb[0].mxu0
  %v510 = vadd.f32 %v413, %v509
  %v511 = vpop.f32.mrb[0].mxu0
  %v512 = vpop.f32.mrb[0].mxu0
  %v513 = vadd.f32 %v416, %v512
  %v514 = vpop.f32.mrb[0].mxu0
  %515 = vmatprep.mubr.bf16.mxu0 0
  %516 = vmatmul.mubr.bf16.gmra.mrb[0].mxu0 %v358
  %v517 = vpop.f32.mrb[0].mxu0
  %v518 = vadd.f32 %v421, %v517
  %v519 = vpop.f32.mrb[0].mxu0
  %v520 = vpop.f32.mrb[0].mxu0
  %v521 = vadd.f32 %v424, %v520
  %v522 = vpop.f32.mrb[0].mxu0
  %523 = vmatprep.mubr.bf16.mxu0 0
  %524 = vmatmul.mubr.bf16.gmra.mrb[0].mxu0 %v361
  %v525 = vpop.f32.mrb[0].mxu0
  %v526 = vadd.f32 %v429, %v525
  %v527 = vpop.f32.mrb[0].mxu0
  %v528 = vpop.f32.mrb[0].mxu0
  %v529 = vadd.f32 %v432, %v528
  %v530 = vpop.f32.mrb[0].mxu0
  %531 = vmatprep.mubr.bf16.mxu0 0
  %532 = vmatmul.mubr.bf16.gmra.mrb[0].mxu0 %v364
  %v533 = vpop.f32.mrb[0].mxu0
  %v534 = vadd.f32 %v437, %v533
  %v535 = vpop.f32.mrb[0].mxu0
  %v536 = vpop.f32.mrb[0].mxu0
  %v537 = vadd.f32 %v440, %v536
  %v538 = vpop.f32.mrb[0].mxu0
  %539 = vmatprep.mubr.bf16.mxu0 0
  %540 = vmatmul.mubr.bf16.gmra.mrb[0].mxu0 %v367
  %v541 = vpop.f32.mrb[0].mxu0
  %v542 = vadd.f32 %v445, %v541
  %v543 = vpop.f32.mrb[0].mxu0
  %v544 = vpop.f32.mrb[0].mxu0
  %v545 = vadd.f32 %v448, %v544
  %v546 = vpop.f32.mrb[0].mxu0
  %547 = vmatprep.mubr.bf16.mxu0 0
  %548 = vmatmul.mubr.bf16.gmra.mrb[0].mxu0 %v370
  %v549 = vpop.f32.mrb[0].mxu0
  %v550 = vadd.f32 %v453, %v549
  %v551 = vpop.f32.mrb[0].mxu0
  %v552 = vpop.f32.mrb[0].mxu0
  %v553 = vadd.f32 %v456, %v552
  %v554 = vpop.f32.mrb[0].mxu0
  %555 = vmatprep.mubr.bf16.mxu0 0
  %556 = vmatmul.mubr.bf16.gmra.mrb[0].mxu0 %v373
  %v557 = vpop.f32.mrb[0].mxu0
  %v558 = vadd.f32 %v461, %v557
  %v559 = vpop.f32.mrb[0].mxu0
  %v560 = vpop.f32.mrb[0].mxu0
  %v561 = vadd.f32 %v464, %v560
  %v562 = vpop.f32.mrb[0].mxu0
  %563 = vmatprep.mubr.bf16.mxu0 0
  %564 = vmatmul.mubr.bf16.gmra.mrb[0].mxu0 %v376
  %v565 = vpop.f32.mrb[0].mxu0
  %v566 = vadd.f32 %v469, %v565
  %v567 = vpop.f32.mrb[0].mxu0
  %v568 = vpop.f32.mrb[0].mxu0
  %v569 = vadd.f32 %v472, %v568
  %v570 = vpop.f32.mrb[0].mxu0
  %571 = vdwg.mxu0
  %v572 = vpack.c.bf16 %v513, %v510
  %v573 = vpack.c.bf16 %v521, %v518
  %v574 = vpack.c.bf16 %v529, %v526
  %v575 = vpack.c.bf16 %v537, %v534
  %v576 = vpack.c.bf16 %v545, %v542
  %v577 = vpack.c.bf16 %v553, %v550
  %v578 = vpack.c.bf16 %v561, %v558
  %v579 = vpack.c.bf16 %v569, %v566
  %v588 = vunpack.c.l.b16 %v572
  %v589 = vunpack.c.h.b16 %v572
  %v590 = vunpack.c.l.b16 %v573
  %v591 = vunpack.c.h.b16 %v573
  %v592 = vunpack.c.l.b16 %v574
  %v593 = vunpack.c.h.b16 %v574
  %v594 = vunpack.c.l.b16 %v575
  %v595 = vunpack.c.h.b16 %v575
  %v596 = vunpack.c.l.b16 %v576
  %v597 = vunpack.c.h.b16 %v576
  %v598 = vunpack.c.l.b16 %v577
  %v599 = vunpack.c.h.b16 %v577
  %v600 = vunpack.c.l.b16 %v578
  %v601 = vunpack.c.h.b16 %v578
  %v602 = vunpack.c.l.b16 %v579
  %v603 = vunpack.c.h.b16 %v579
  %v604 = vpack.c.b16 %v588, %v588
  %v605 = vpack.c.b16 %v589, %v589
  %v606 = vpack.c.b16 %v590, %v590
  %v607 = vpack.c.b16 %v591, %v591
  %v608 = vpack.c.b16 %v592, %v592
  %v609 = vpack.c.b16 %v593, %v593
  %v610 = vpack.c.b16 %v594, %v594
  %v611 = vpack.c.b16 %v595, %v595
  %v612 = vpack.c.b16 %v596, %v596
  %v613 = vpack.c.b16 %v597, %v597
  %v614 = vpack.c.b16 %v598, %v598
  %v615 = vpack.c.b16 %v599, %v599
  %v616 = vpack.c.b16 %v600, %v600
  %v617 = vpack.c.b16 %v601, %v601
  %v618 = vpack.c.b16 %v602, %v602
  %v619 = vpack.c.b16 %v603, %v603
  %vm636 = vcmask 257024
  %637 = vst.msk [vmem:[%s3] sm:$0xf] %vm636, %v604
  %638 = vst.msk [vmem:[%s3 + $0x4] sm:$0xf] %vm636, %v605
  %639 = vst.msk [vmem:[%s3 + $0x8] sm:$0xf] %vm636, %v606
  %640 = vst.msk [vmem:[%s3 + $0xc] sm:$0xf] %vm636, %v607
  %641 = vst.msk [vmem:[%s3 + $0x10] sm:$0xf] %vm636, %v608
  %642 = vst.msk [vmem:[%s3 + $0x14] sm:$0xf] %vm636, %v609
  %643 = vst.msk [vmem:[%s3 + $0x18] sm:$0xf] %vm636, %v610
  %644 = vst.msk [vmem:[%s3 + $0x1c] sm:$0xf] %vm636, %v611
  %645 = vst.msk [vmem:[%s3 + $0x20] sm:$0xf] %vm636, %v612
  %646 = vst.msk [vmem:[%s3 + $0x24] sm:$0xf] %vm636, %v613
  %647 = vst.msk [vmem:[%s3 + $0x28] sm:$0xf] %vm636, %v614
  %648 = vst.msk [vmem:[%s3 + $0x2c] sm:$0xf] %vm636, %v615
  %649 = vst.msk [vmem:[%s3 + $0x30] sm:$0xf] %vm636, %v616
  %650 = vst.msk [vmem:[%s3 + $0x34] sm:$0xf] %vm636, %v617
  %651 = vst.msk [vmem:[%s3 + $0x38] sm:$0xf] %vm636, %v618
  %652 = vst.msk [vmem:[%s3 + $0x3c] sm:$0xf] %vm636, %v619
  %v653 = vsel %vm353, %v510, 0.0
  %v654 = vsel %vm353, %v513, 0.0
  %v655 = vadd.f32 %v653, %v654
  %v656 = vsel %vm353, %v518, 0.0
  %v657 = vadd.f32 %v655, %v656
  %v658 = vsel %vm353, %v521, 0.0
  %v659 = vadd.f32 %v657, %v658
  %v660 = vsel %vm353, %v526, 0.0
  %v661 = vadd.f32 %v659, %v660
  %v662 = vsel %vm353, %v529, 0.0
  %v663 = vadd.f32 %v661, %v662
  %v664 = vsel %vm353, %v534, 0.0
  %v665 = vadd.f32 %v663, %v664
  %v666 = vsel %vm353, %v537, 0.0
  %v667 = vadd.f32 %v665, %v666
  %v668 = vsel %vm353, %v542, 0.0
  %v669 = vadd.f32 %v667, %v668
  %v670 = vsel %vm353, %v545, 0.0
  %v671 = vadd.f32 %v669, %v670
  %v672 = vsel %vm353, %v550, 0.0
  %v673 = vadd.f32 %v671, %v672
  %v674 = vsel %vm353, %v553, 0.0
  %v675 = vadd.f32 %v673, %v674
  %v676 = vsel %vm353, %v558, 0.0
  %v677 = vadd.f32 %v675, %v676
  %v678 = vsel %vm353, %v561, 0.0
  %v679 = vadd.f32 %v677, %v678
  %v680 = vsel %vm353, %v566, 0.0
  %v681 = vadd.f32 %v679, %v680
  %v682 = vsel %vm353, %v569, 0.0
  %v683 = vadd.f32 %v681, %v682
  %v684 = vrot.slane %v683, 4
  %v685 = vadd.f32 %v683, %v684
  %v686 = vrot.slane %v685, 2
  %v687 = vadd.f32 %v685, %v686
  %v688 = vrot.slane %v687, 1
  %v689 = vadd.f32 %v687, %v688
  %690 = vst.msk [vmem:[%s4] sm:$0xff] %vm353, %v689
  %v691 = vmul.f32 %v510, %v510
  %v692 = vmul.f32 %v513, %v513
  %v693 = vmul.f32 %v518, %v518
  %v694 = vmul.f32 %v521, %v521
  %v695 = vmul.f32 %v526, %v526
  %v696 = vmul.f32 %v529, %v529
  %v697 = vmul.f32 %v534, %v534
  %v698 = vmul.f32 %v537, %v537
  %v699 = vmul.f32 %v542, %v542
  %v700 = vmul.f32 %v545, %v545
  %v701 = vmul.f32 %v550, %v550
  %v702 = vmul.f32 %v553, %v553
  %v703 = vmul.f32 %v558, %v558
  %v704 = vmul.f32 %v561, %v561
  %v705 = vmul.f32 %v566, %v566
  %v706 = vmul.f32 %v569, %v569
  %v707 = vsel %vm353, %v691, 0.0
  %v708 = vsel %vm353, %v692, 0.0
  %v709 = vadd.f32 %v707, %v708
  %v710 = vsel %vm353, %v693, 0.0
  %v711 = vadd.f32 %v709, %v710
  %v712 = vsel %vm353, %v694, 0.0
  %v713 = vadd.f32 %v711, %v712
  %v714 = vsel %vm353, %v695, 0.0
  %v715 = vadd.f32 %v713, %v714
  %v716 = vsel %vm353, %v696, 0.0
  %v717 = vadd.f32 %v715, %v716
  %v718 = vsel %vm353, %v697, 0.0
  %v719 = vadd.f32 %v717, %v718
  %v720 = vsel %vm353, %v698, 0.0
  %v721 = vadd.f32 %v719, %v720
  %v722 = vsel %vm353, %v699, 0.0
  %v723 = vadd.f32 %v721, %v722
  %v724 = vsel %vm353, %v700, 0.0
  %v725 = vadd.f32 %v723, %v724
  %v726 = vsel %vm353, %v701, 0.0
  %v727 = vadd.f32 %v725, %v726
  %v728 = vsel %vm353, %v702, 0.0
  %v729 = vadd.f32 %v727, %v728
  %v730 = vsel %vm353, %v703, 0.0
  %v731 = vadd.f32 %v729, %v730
  %v732 = vsel %vm353, %v704, 0.0
  %v733 = vadd.f32 %v731, %v732
  %v734 = vsel %vm353, %v705, 0.0
  %v735 = vadd.f32 %v733, %v734
  %v736 = vsel %vm353, %v706, 0.0
  %v737 = vadd.f32 %v735, %v736
  %v738 = vrot.slane %v737, 4
  %v739 = vadd.f32 %v737, %v738
  %v740 = vrot.slane %v739, 2
  %v741 = vadd.f32 %v739, %v740
  %v742 = vrot.slane %v741, 1
  %v743 = vadd.f32 %v741, %v742
  %744 = vst.msk [vmem:[%s5] sm:$0xff] %vm353, %v743
  // Predicated region
  $region14: #{_lambda_.7} parent=0 // pred_check
    _
  $region15: #{_lambda_.7} parent=0 // pred_check_branch
    %746 = sbr.rel (0) target = $region17
  $region16: #{_lambda_.7} parent=0 // pred_region
    _
  $region17: #{_lambda_.7} parent=0 // pred_fallthru
    _
  // Predicated region
  $region18: #{_lambda_.7} parent=0 // pred_check
    _
  $region19: #{_lambda_.7} parent=0 // pred_check_branch
    %748 = sbr.rel (0) target = $region21
  $region20: #{_lambda_.7} parent=0 // pred_region
    _
  $region21: #{_lambda_.7} parent=0 // pred_fallthru
    _
  // Predicated region
  $region22: #{_lambda_.7} parent=0 // pred_check
    _
  $region23: #{_lambda_.7} parent=0 // pred_check_branch
    %750 = sbr.rel (0) target = $region25
  $region24: #{_lambda_.7} parent=0 // pred_region
    _
  $region25: #{_lambda_.7} parent=0 // pred_fallthru
    _
  // Predicated region
  $region26: #{_lambda_.7} parent=0 // pred_check
    _
  $region27: #{_lambda_.7} parent=0 // pred_check_branch
    %752 = sbr.rel (0) target = $region29
  $region28: #{_lambda_.7} parent=0 // pred_region
    _
  $region29: #{_lambda_.7} parent=0 // pred_fallthru
    _
  // Predicated region
  $region30: #{_lambda_.7} parent=0 // pred_check
    _
  $region31: #{_lambda_.7} parent=0 // pred_check_branch
    %754 = sbr.rel (0) target = $region33
  $region32: #{_lambda_.7} parent=0 // pred_region
    _
  $region33: #{_lambda_.7} parent=0 // pred_fallthru
    _
  // Predicated region
  $region34: #{_lambda_.7} parent=0 // pred_check
    _
  $region35: #{_lambda_.7} parent=0 // pred_check_branch
    %756 = sbr.rel (0) target = $region37
  $region36: #{_lambda_.7} parent=0 // pred_region
    _
  $region37: #{_lambda_.7} parent=0 // pred_fallthru
    _

// kernel: _lambda_.8
$region0: #{_lambda_.8}
  #allocation0 [shape = 'u32[]', space=smem, size = 0x4, offset = 0x4, fixed_abs, tag = 'smem constant byte address 0x4 - core index']
  #allocation1 [shape = 'u32[144,128]{1,0:T(1,128)}', space=vmem, size = 0x12000, scoped, tag = 'internal scratch']
  %s0 = inlined_call_operand.vmem [shape: bf16[32,128], index: 0, kind: input, shape index: {}]
  %s1 = inlined_call_operand.vmem [shape: f32[1,128], index: 1, kind: input, shape index: {}]
  %s2 = inlined_call_operand.vmem [shape: f32[1,128], index: 2, kind: input, shape index: {}]
  %s3 = inlined_call_operand.vmem [shape: bf16[32,128], index: 3, kind: output, shape index: {}]
  %s4 = sld [smem:[#allocation0]]
  $region22: #{_lambda_.8} parent=0
    _
  %s6 = ssub.s32 1, %s4
  %s7 = scalar_select 0, %s6, %s4
  // Predicated region
  $region2: #{_lambda_.8} parent=0 // pred_check
    _
  $region3: #{_lambda_.8} parent=0 // pred_check_branch
    %9 = sbr.rel (0) target = $region5
  $region4: #{_lambda_.8} parent=0 // pred_region
    _
  $region5: #{_lambda_.8} parent=0 // pred_fallthru
    _
  // Predicated region
  $region6: #{_lambda_.8} parent=0 // pred_check
    _
  $region7: #{_lambda_.8} parent=0 // pred_check_branch
    %11 = sbr.rel (0) target = $region9
  $region8: #{_lambda_.8} parent=0 // pred_region
    _
  $region9: #{_lambda_.8} parent=0 // pred_fallthru
    _
  // Predicated region
  $region10: #{_lambda_.8} parent=0 // pred_check
    _
  $region11: #{_lambda_.8} parent=0 // pred_check_branch
    %13 = sbr.rel (0) target = $region13
  $region12: #{_lambda_.8} parent=0 // pred_region
    _
  $region13: #{_lambda_.8} parent=0 // pred_fallthru
    _
  %v14 = vld [vmem:[%s0] sm:$0xf]
  %v15 = vld [vmem:[%s0 + $0x4] sm:$0xf]
  %v16 = vld [vmem:[%s0 + $0x8] sm:$0xf]
  %v17 = vld [vmem:[%s0 + $0xc] sm:$0xf]
  %v18 = vunpack.c.l.bf16 %v14
  %v19 = vunpack.c.l.bf16 %v15
  %v20 = vunpack.c.l.bf16 %v16
  %v21 = vunpack.c.l.bf16 %v17
  %v22 = vld [vmem:[%s1] sm:$0x1]
  %v24 = vlaneseq
  %v25 = vshrl.u32 %v24, 7
  %v26 = vsub.s32 0, %v25
  %v27 = vrot.slane %v22, %v26
  %v29 = vmul.f32 %v18, %v27
  %v30 = vmul.f32 %v19, %v27
  %v31 = vmul.f32 %v20, %v27
  %v32 = vmul.f32 %v21, %v27
  %v33 = vld [vmem:[%s2] sm:$0x1]
  %v35 = vlaneseq
  %v36 = vshrl.u32 %v35, 7
  %v37 = vsub.s32 0, %v36
  %v38 = vrot.slane %v33, %v37
  %v40 = vadd.f32 %v29, %v38
  %v41 = vadd.f32 %v30, %v38
  %v42 = vadd.f32 %v31, %v38
  %v43 = vadd.f32 %v32, %v38
  %v44 = vpack.c.bf16 %v41, %v40
  %v45 = vpack.c.bf16 %v43, %v42
  %v48 = vunpack.c.l.b16 %v44
  %v49 = vunpack.c.h.b16 %v44
  %v50 = vunpack.c.l.b16 %v45
  %v51 = vunpack.c.h.b16 %v45
  %v52 = vpack.c.b16 %v48, %v48
  %v53 = vpack.c.b16 %v49, %v49
  %v54 = vpack.c.b16 %v50, %v50
  %v55 = vpack.c.b16 %v51, %v51
  %60 = vst [vmem:[%s3] sm:$0xf] %v52
  %61 = vst [vmem:[%s3 + $0x4] sm:$0xf] %v53
  %62 = vst [vmem:[%s3 + $0x8] sm:$0xf] %v54
  %63 = vst [vmem:[%s3 + $0xc] sm:$0xf] %v55
  // Predicated region
  $region14: #{_lambda_.8} parent=0 // pred_check
    _
  $region15: #{_lambda_.8} parent=0 // pred_check_branch
    %65 = sbr.rel (0) target = $region17
  $region16: #{_lambda_.8} parent=0 // pred_region
    _
  $region17: #{_lambda_.8} parent=0 // pred_fallthru
    _
  // Predicated region
  $region18: #{_lambda_.8} parent=0 // pred_check
    _
  $region19: #{_lambda_.8} parent=0 // pred_check_branch
    %67 = sbr.rel (0) target = $region21
  $region20: #{_lambda_.8} parent=0 // pred_region
    _
  $region21: #{_lambda_.8} parent=0 // pred_fallthru
    _

// kernel: tile.28
$region0: #{tile.28}
  #allocation0 [shape = 's32[1]{0}', space=sflag, size = 0x4, scoped, tag = 'scoped memory for tile.28']
  %s0 = inlined_call_operand.vmem [shape: f32[4], index: 0, kind: input, shape index: {}]
  %s1 = inlined_call_operand.vmem [shape: f32[4,4], index: 1, kind: output, shape index: {}]
  // Predicated region
  $region2: #{tile.28} parent=0 // pred_check
    _
  $region3: #{tile.28} parent=0 // pred_check_branch
    %3 = sbr.rel (0) target = $region5
  $region4: #{tile.28} parent=0 // pred_region
    _
  $region5: #{tile.28} parent=0 // pred_fallthru
    _
  %v4 = vld [vmem:[%s0] ss:$0 sm:$0xff]
  %5 = vst [vmem:[%s1] sm:$0xf] %v4

// kernel: tile.29
$region0: #{tile.29}
  %s0 = inlined_call_operand.vmem [shape: f32[4,4], index: 0, kind: input, shape index: {}]
  %s1 = inlined_call_operand.vmem [shape: f32[1,16], index: 1, kind: output, shape index: {}]
  $region1: #{tile.29} parent=0
    #allocation0 [shape = 'u8[4096]{0}', space=vmem, size = 0x1000, scoped, tag = 'scoped mem for output reshape']
    #allocation1 [shape = 'u8[4096]{0}', space=vmem, size = 0x1000, scoped, tag = 'scoped mem for input reshape']
    %s3 = sshllo.u32 0, 4
    %v4 = vld [vmem:[%s0] sm:%s3]
    %5 = vst [vmem:[#allocation1] sm:%s3] %v4
    %v6 = vld [vmem:[#allocation1] sm:$0x1]
    %vm7 = vcmask 31744
    %8 = vst.msk [vmem:[#allocation0] sm:$0x1] %vm7, %v6
    %s9 = scalar_lea.vmem [#allocation1], 3
    %v10 = vld [vmem:[%s9] sm:$0x1]
    %11 = vrot.lane.b32.xlu0 %v10, 12
    %v12 = vpop.permute.xlu0 %11
    %vm13 = vcmask 130144
    %14 = vst.msk [vmem:[#allocation0] sm:$0x1] %vm13, %v12
    %s15 = scalar_lea.vmem [#allocation1], 2
    %v16 = vld [vmem:[%s15] sm:$0x1]
    %17 = vrot.lane.b32.xlu0 %v16, 8
    %v18 = vpop.permute.xlu0 %17
    %vm19 = vcmask 97344
    %20 = vst.msk [vmem:[#allocation0] sm:$0x1] %vm19, %v18
    %s21 = scalar_lea.vmem [#allocation1], 1
    %v22 = vld [vmem:[%s21] sm:$0x1]
    %23 = vrot.lane.b32.xlu0 %v22, 4
    %v24 = vpop.permute.xlu0 %23
    %vm25 = vcmask 64544
    %26 = vst.msk [vmem:[#allocation0] sm:$0x1] %vm25, %v24
    %s28 = sshllo.u32 0, 1
    %v30 = vld [vmem:[#allocation0] sm:%s28]
    %s31 = sshllo.u32 0, 1
    %32 = vst [vmem:[%s1] sm:%s31] %v30

// kernel: _lambda_.9
$region0: #{_lambda_.9}
  #allocation0 [shape = 'u32[]', space=smem, size = 0x4, offset = 0x4, fixed_abs, tag = 'smem constant byte address 0x4 - core index']
  #allocation1 [shape = 'u32[144,128]{1,0:T(1,128)}', space=vmem, size = 0x12000, scoped, tag = 'internal scratch']
  %s0 = inlined_call_operand.vmem [shape: bf16[512,144], index: 0, kind: input, shape index: {}]
  %s1 = inlined_call_operand.vmem [shape: bf16[144,16], index: 1, kind: input, shape index: {}]
  %s2 = inlined_call_operand.vmem [shape: f32[1,16], index: 2, kind: input, shape index: {}]
  %s3 = inlined_call_operand.vmem [shape: f32[512,16], index: 3, kind: output, shape index: {}]
  %s4 = sld [smem:[#allocation0]]
  $region45: #{_lambda_.9} parent=0
    _
  %s6 = ssub.s32 1, %s4
  %s7 = scalar_select 0, %s6, %s4
  loop: start=0, step=1, limit=4
  $region2: #{_lambda_.9} parent=0 // loop_pre_header
    _
  $region3: #{_lambda_.9} parent=0 // loop_header
    %s9 = sphi 0, %s13
    %p10 = scmp.ge.s32.totalorder %s9, 4
    %s19 = sphi 0, %s21
    %s22 = sphi 0, %s19
    %s23 = sphi 0, %s22
    %s39 = sphi 0, %s23
    %s43 = sphi 0, %s43
    %s45 = sphi 0, %s43
    %s46 = sphi 0, %s45
    %s60 = sphi 0, %s46
    %s64 = sphi 0, %s64
    %s66 = sphi 0, %s64
    %s67 = sphi 0, %s66
    %s81 = sphi 0, %s67
    %s87 = sphi 0, %s89
    %s90 = sphi 0, %s87
    %s91 = sphi 0, %s90
    %s107 = sphi 0, %s91
  $region4: #{_lambda_.9} parent=0 // loop_header_branch
    %12 = sbr.rel (%p10) target = $region8
  $region5: #{_lambda_.9} parent=0 // loop_body
    %s14 = ssub.s32 %s9, 1
    %s15 = ssub.s32 %s9, 2
    %s16 = sadd.s32 %s9, 1
    %s17 = ssub.s32 %s9, %s16
    %p18 = scmp.eq.s32.totalorder %s17, 0
    %s20 = sadd.s32 %s19, 1
    %s21 = scalar_select %p18, %s19, %s20
    %p24 = pneg %p18
    %p25 = scmp.eq.s32.totalorder %s9, 1
    %p26 = por %p24, %p25
    %p27 = scmp.ne.s32.totalorder %s19, %s22
    %p28 = scmp.eq.s32.totalorder %s9, 0
    %p29 = por %p27, %p28
    %p30 = scmp.ne.s32.totalorder %s19, %s22
    %p31 = scmp.eq.s32.totalorder %s14, 1
    %p32 = por %p30, %p31
    %p33 = scmp.ne.s32.totalorder %s22, %s23
    %p34 = scmp.eq.s32.totalorder %s14, 0
    %p35 = por %p33, %p34
    %p36 = scmp.ne.s32.totalorder %s22, %s23
    %p37 = scmp.eq.s32.totalorder %s15, 1
    %p38 = por %p36, %p37
    %p40 = scmp.ne.s32.totalorder %s23, %s39
    %p41 = scmp.eq.s32.totalorder %s15, 0
    %p42 = por %p40, %p41
    %s44 = sadd.s32 %s43, 1
    %p47 = scmp.eq.s32.totalorder %s9, 1
    %p48 = scmp.ne.s32.totalorder %s43, %s45
    %p49 = scmp.eq.s32.totalorder %s9, 0
    %p50 = por %p48, %p49
    %p51 = scmp.ne.s32.totalorder %s43, %s45
    %p52 = scmp.eq.s32.totalorder %s14, 1
    %p53 = por %p51, %p52
    %p54 = scmp.ne.s32.totalorder %s45, %s46
    %p55 = scmp.eq.s32.totalorder %s14, 0
    %p56 = por %p54, %p55
    %p57 = scmp.ne.s32.totalorder %s45, %s46
    %p58 = scmp.eq.s32.totalorder %s15, 1
    %p59 = por %p57, %p58
    %p61 = scmp.ne.s32.totalorder %s46, %s60
    %p62 = scmp.eq.s32.totalorder %s15, 0
    %p63 = por %p61, %p62
    %s65 = sadd.s32 %s64, 1
    %p68 = scmp.eq.s32.totalorder %s9, 1
    %p69 = scmp.ne.s32.totalorder %s64, %s66
    %p70 = scmp.eq.s32.totalorder %s9, 0
    %p71 = por %p69, %p70
    %p72 = scmp.ne.s32.totalorder %s64, %s66
    %p73 = scmp.eq.s32.totalorder %s14, 1
    %p74 = por %p72, %p73
    %p75 = scmp.ne.s32.totalorder %s66, %s67
    %p76 = scmp.eq.s32.totalorder %s14, 0
    %p77 = por %p75, %p76
    %p78 = scmp.ne.s32.totalorder %s66, %s67
    %p79 = scmp.eq.s32.totalorder %s15, 1
    %p80 = por %p78, %p79
    %p82 = scmp.ne.s32.totalorder %s67, %s81
    %p83 = scmp.eq.s32.totalorder %s15, 0
    %p84 = por %p82, %p83
    %s85 = ssub.s32 %s9, %s16
    %p86 = scmp.eq.s32.totalorder %s85, 0
    %s88 = sadd.s32 %s87, 1
    %s89 = scalar_select %p86, %s87, %s88
    %p92 = pneg %p86
    %p93 = scmp.eq.s32.totalorder %s9, 1
    %p94 = por %p92, %p93
    %p95 = scmp.ne.s32.totalorder %s87, %s90
    %p96 = scmp.eq.s32.totalorder %s9, 0
    %p97 = por %p95, %p96
    %p98 = scmp.ne.s32.totalorder %s87, %s90
    %p99 = scmp.eq.s32.totalorder %s14, 1
    %p100 = por %p98, %p99
    %p101 = scmp.ne.s32.totalorder %s90, %s91
    %p102 = scmp.eq.s32.totalorder %s14, 0
    %p103 = por %p101, %p102
    %p104 = scmp.ne.s32.totalorder %s90, %s91
    %p105 = scmp.eq.s32.totalorder %s15, 1
    %p106 = por %p104, %p105
    %p108 = scmp.ne.s32.totalorder %s91, %s107
    %p109 = scmp.eq.s32.totalorder %s15, 0
    %p110 = por %p108, %p109
    %p111 = scmp.le.s32.totalorder 1, %s9
    %p112 = scmp.lt.s32.totalorder %s9, 3
    %p113 = pnand %p111, %p112
    %p114 = pneg %p113
    // Predicated region
    $region9: #{_lambda_.9} parent=5 // pred_check
      _
    $region10: #{_lambda_.9} parent=5 // pred_check_branch
      %116 = sbr.rel (%p113) target = $region12
    $region11: #{_lambda_.9} parent=5 // pred_region
      %s117 = ssub.s32 %s9, 1
      // Predicated region
      $region13: #{_lambda_.9} parent=11 // pred_check
        %p118 = pneg %p56
      $region14: #{_lambda_.9} parent=11 // pred_check_branch
        %120 = sbr.rel (%p118) target = $region16
      $region15: #{_lambda_.9} parent=11 // pred_region
        _
      $region16: #{_lambda_.9} parent=11 // pred_fallthru
        _
      // Predicated region
      $region17: #{_lambda_.9} parent=11 // pred_check
        %p121 = pneg %p77
      $region18: #{_lambda_.9} parent=11 // pred_check_branch
        %123 = sbr.rel (%p121) target = $region20
      $region19: #{_lambda_.9} parent=11 // pred_region
        _
      $region20: #{_lambda_.9} parent=11 // pred_fallthru
        _
    $region12: #{_lambda_.9} parent=5 // pred_fallthru
      _
    %p124 = scmp.lt.s32.totalorder %s9, 2
    // Predicated region
    $region21: #{_lambda_.9} parent=5 // pred_check
      %p125 = pneg %p124
    $region22: #{_lambda_.9} parent=5 // pred_check_branch
      %127 = sbr.rel (%p125) target = $region24
    $region23: #{_lambda_.9} parent=5 // pred_region
      // Predicated region
      $region25: #{_lambda_.9} parent=23 // pred_check
        %p128 = pneg %p29
      $region26: #{_lambda_.9} parent=23 // pred_check_branch
        %130 = sbr.rel (%p128) target = $region28
      $region27: #{_lambda_.9} parent=23 // pred_region
        %s131 = smul.u32 32, %s9
        %p132 = scmp.lt.s32.totalorder %s131, 63
        %s133 = scalar_select %p132, %s131, 63
        %s134 = smul.addr %s133, 2
        %s135 = smul.addr %s134, 4
        %s136 = scalar_lea.vmem %s0, %s135
        %s137 = smul.u32 32, %s9
      $region28: #{_lambda_.9} parent=23 // pred_fallthru
        _
    $region24: #{_lambda_.9} parent=5 // pred_fallthru
      _
    %p138 = scmp.le.s32.totalorder 1, %s9
    %p139 = scmp.lt.s32.totalorder %s9, 3
    %p140 = pnand %p138, %p139
    %p141 = pneg %p140
    // Predicated region
    $region29: #{_lambda_.9} parent=5 // pred_check
      _
    $region30: #{_lambda_.9} parent=5 // pred_check_branch
      %143 = sbr.rel (%p140) target = $region32
    $region31: #{_lambda_.9} parent=5 // pred_region
      %s144 = ssub.s32 %s9, 1
      %s145 = smul.u32 32, %s14
      %p146 = scmp.lt.s32.totalorder %s145, 63
      %s147 = scalar_select %p146, %s145, 63
      %s148 = smul.addr %s147, 2
      %s149 = smul.addr %s148, 4
      %s150 = scalar_lea.vmem %s0, %s149
      %p151 = pneg %p35
      %p152 = pneg %p32
      %p153 = pneg %p56
      %p154 = pneg %p53
      %p155 = pneg %p77
      %p156 = pneg %p74
      %p157 = pneg %p103
      %p158 = pneg %p100
      %s159 = smul.u32 32, %s14
      %p160 = scmp.lt.s32.totalorder %s159, 63
      %s161 = scalar_select %p160, %s159, 63
      %s162 = smul.addr %s161, 8
      %s163 = scalar_lea.vmem %s3, %s162
      %s164 = smul.u32 32, %s14
      %p165 = scmp.lt.s32.totalorder %s164, 63
      %s166 = scalar_select %p165, %s164, 63
      %s167 = smul.addr %s166, 2
      %s168 = smul.addr %s167, 4
      %s169 = scalar_lea.vmem %s0, %s168
      %s170 = smul.u32 32, %s14
      %s171 = smul.u32 32, %s14
      %p172 = scmp.lt.s32.totalorder %s171, 63
      %s173 = scalar_select %p172, %s171, 63
      %s174 = smul.addr %s173, 8
      %s175 = scalar_lea.vmem %s3, %s174
      %s176 = smul.u32 32, %s14
      %v178 = vld [vmem:[%s169] sm:$0xff]
      %v179 = vld [vmem:[%s169 + $0x8] sm:$0xff]
      %v180 = vld [vmem:[%s169 + $0x10] sm:$0xff]
      %v181 = vld [vmem:[%s169 + $0x18] sm:$0xff]
      %v182 = vld [vmem:[%s169 + $0x20] sm:$0xff]
      %v183 = vld [vmem:[%s169 + $0x28] sm:$0xff]
      %v184 = vld [vmem:[%s169 + $0x30] sm:$0xff]
      %v185 = vld [vmem:[%s169 + $0x38] sm:$0xff]
      %v186 = vld [vmem:[%s169 + $0x40] sm:$0xff]
      %v187 = vld [vmem:[%s169 + $0x48] sm:$0xff]
      %v188 = vld [vmem:[%s169 + $0x50] sm:$0xff]
      %v189 = vld [vmem:[%s169 + $0x58] sm:$0xff]
      %v190 = vld [vmem:[%s169 + $0x60] sm:$0xff]
      %v191 = vld [vmem:[%s169 + $0x68] sm:$0xff]
      %v192 = vld [vmem:[%s169 + $0x70] sm:$0xff]
      %v193 = vld [vmem:[%s169 + $0x78] sm:$0xff]
      %v194 = vld [vmem:[%s169 + $0x80] sm:$0xff]
      %v195 = vld [vmem:[%s169 + $0x88] sm:$0xff]
      %v196 = vld [vmem:[%s169 + $0x90] sm:$0xff]
      %v197 = vld [vmem:[%s169 + $0x98] sm:$0xff]
      %v198 = vld [vmem:[%s169 + $0xa0] sm:$0xff]
      %v199 = vld [vmem:[%s169 + $0xa8] sm:$0xff]
      %v200 = vld [vmem:[%s169 + $0xb0] sm:$0xff]
      %v201 = vld [vmem:[%s169 + $0xb8] sm:$0xff]
      %v202 = vld [vmem:[%s169 + $0xc0] sm:$0xff]
      %v203 = vld [vmem:[%s169 + $0xc8] sm:$0xff]
      %v204 = vld [vmem:[%s169 + $0xd0] sm:$0xff]
      %v205 = vld [vmem:[%s169 + $0xd8] sm:$0xff]
      %v206 = vld [vmem:[%s169 + $0xe0] sm:$0xff]
      %v207 = vld [vmem:[%s169 + $0xe8] sm:$0xff]
      %v208 = vld [vmem:[%s169 + $0xf0] sm:$0xff]
      %v209 = vld [vmem:[%s169 + $0xf8] sm:$0xff]
      %v210 = vmax.bf16 %v178, 0
      %v211 = vmax.bf16 %v179, 0
      %v212 = vmax.bf16 %v180, 0
      %v213 = vmax.bf16 %v181, 0
      %v214 = vmax.bf16 %v182, 0
      %v215 = vmax.bf16 %v183, 0
      %v216 = vmax.bf16 %v184, 0
      %v217 = vmax.bf16 %v185, 0
      %v218 = vmax.bf16 %v186, 0
      %v219 = vmax.bf16 %v187, 0
      %v220 = vmax.bf16 %v188, 0
      %v221 = vmax.bf16 %v189, 0
      %v222 = vmax.bf16 %v190, 0
      %v223 = vmax.bf16 %v191, 0
      %v224 = vmax.bf16 %v192, 0
      %v225 = vmax.bf16 %v193, 0
      %v226 = vmax.bf16 %v194, 0
      %v227 = vmax.bf16 %v195, 0
      %v228 = vmax.bf16 %v196, 0
      %v229 = vmax.bf16 %v197, 0
      %v230 = vmax.bf16 %v198, 0
      %v231 = vmax.bf16 %v199, 0
      %v232 = vmax.bf16 %v200, 0
      %v233 = vmax.bf16 %v201, 0
      %v234 = vmax.bf16 %v202, 0
      %v235 = vmax.bf16 %v203, 0
      %v236 = vmax.bf16 %v204, 0
      %v237 = vmax.bf16 %v205, 0
      %v238 = vmax.bf16 %v206, 0
      %v239 = vmax.bf16 %v207, 0
      %v240 = vmax.bf16 %v208, 0
      %v241 = vmax.bf16 %v209, 0
      %v242 = vld [vmem:[%s1] sm:$0xf]
      %v243 = vld [vmem:[%s1 + $0x4] sm:$0xf]
      %v244 = vld [vmem:[%s1 + $0x8] sm:$0xf]
      %v245 = vld [vmem:[%s1 + $0xc] sm:$0xf]
      %v246 = vld [vmem:[%s1 + $0x10] sm:$0xf]
      %v247 = vld [vmem:[%s1 + $0x14] sm:$0xf]
      %v248 = vld [vmem:[%s1 + $0x18] sm:$0xf]
      %v249 = vld [vmem:[%s1 + $0x1c] sm:$0xf]
      %v250 = vld [vmem:[%s1 + $0x20] sm:$0xf]
      %v251 = vld [vmem:[%s1 + $0x24] sm:$0xf]
      %v252 = vld [vmem:[%s1 + $0x28] sm:$0xf]
      %v253 = vld [vmem:[%s1 + $0x2c] sm:$0xf]
      %v254 = vld [vmem:[%s1 + $0x30] sm:$0xf]
      %v255 = vld [vmem:[%s1 + $0x34] sm:$0xf]
      %v256 = vld [vmem:[%s1 + $0x38] sm:$0xf]
      %v257 = vld [vmem:[%s1 + $0x3c] sm:$0xf]
      %v258 = vld [vmem:[%s1 + $0x40] sm:$0xf]
      %v259 = vld [vmem:[%s1 + $0x44] sm:$0xf]
      %v260 = vld [vmem:[%s2] sm:$0x1]
      %v262 = vlaneseq
      %v263 = vshrl.u32 %v262, 7
      %v264 = vsub.s32 0, %v263
      %v265 = vrot.slane %v260, %v264
      %v299 = vunpack.c.l.b16 %v210
      %v300 = vunpack.c.h.b16 %v210
      %v301 = vunpack.c.l.b16 %v211
      %v302 = vunpack.c.h.b16 %v211
      %v303 = vunpack.c.l.b16 %v212
      %v304 = vunpack.c.h.b16 %v212
      %v305 = vunpack.c.l.b16 %v213
      %v306 = vunpack.c.h.b16 %v213
      %v307 = vunpack.c.l.b16 %v214
      %v308 = vunpack.c.h.b16 %v214
      %v309 = vunpack.c.l.b16 %v215
      %v310 = vunpack.c.h.b16 %v215
      %v311 = vunpack.c.l.b16 %v216
      %v312 = vunpack.c.h.b16 %v216
      %v313 = vunpack.c.l.b16 %v217
      %v314 = vunpack.c.h.b16 %v217
      %v315 = vunpack.c.l.b16 %v218
      %v316 = vunpack.c.h.b16 %v218
      %v317 = vunpack.c.l.b16 %v219
      %v318 = vunpack.c.h.b16 %v219
      %v319 = vunpack.c.l.b16 %v220
      %v320 = vunpack.c.h.b16 %v220
      %v321 = vunpack.c.l.b16 %v221
      %v322 = vunpack.c.h.b16 %v221
      %v323 = vunpack.c.l.b16 %v222
      %v324 = vunpack.c.h.b16 %v222
      %v325 = vunpack.c.l.b16 %v223
      %v326 = vunpack.c.h.b16 %v223
      %v327 = vunpack.c.l.b16 %v224
      %v328 = vunpack.c.h.b16 %v224
      %v329 = vunpack.c.l.b16 %v225
      %v330 = vunpack.c.h.b16 %v225
      %v331 = vunpack.c.l.b16 %v226
      %v332 = vunpack.c.h.b16 %v226
      %v333 = vunpack.c.l.b16 %v227
      %v334 = vunpack.c.h.b16 %v227
      %v335 = vunpack.c.l.b16 %v228
      %v336 = vunpack.c.h.b16 %v228
      %v337 = vunpack.c.l.b16 %v229
      %v338 = vunpack.c.h.b16 %v229
      %v339 = vunpack.c.l.b16 %v230
      %v340 = vunpack.c.h.b16 %v230
      %v341 = vunpack.c.l.b16 %v231
      %v342 = vunpack.c.h.b16 %v231
      %v343 = vunpack.c.l.b16 %v232
      %v344 = vunpack.c.h.b16 %v232
      %v345 = vunpack.c.l.b16 %v233
      %v346 = vunpack.c.h.b16 %v233
      %v347 = vunpack.c.l.b16 %v234
      %v348 = vunpack.c.h.b16 %v234
      %v349 = vunpack.c.l.b16 %v235
      %v350 = vunpack.c.h.b16 %v235
      %v351 = vunpack.c.l.b16 %v236
      %v352 = vunpack.c.h.b16 %v236
      %v353 = vunpack.c.l.b16 %v237
      %v354 = vunpack.c.h.b16 %v237
      %v355 = vunpack.c.l.b16 %v238
      %v356 = vunpack.c.h.b16 %v238
      %v357 = vunpack.c.l.b16 %v239
      %v358 = vunpack.c.h.b16 %v239
      %v359 = vunpack.c.l.b16 %v240
      %v360 = vunpack.c.h.b16 %v240
      %v361 = vunpack.c.l.b16 %v241
      %v362 = vunpack.c.h.b16 %v241
      %v363 = vpack.c.b16 %v301, %v299
      %v364 = vpack.c.b16 %v302, %v300
      %v365 = vpack.c.b16 %v305, %v303
      %v366 = vpack.c.b16 %v306, %v304
      %v367 = vpack.c.b16 %v309, %v307
      %v368 = vpack.c.b16 %v310, %v308
      %v369 = vpack.c.b16 %v313, %v311
      %v370 = vpack.c.b16 %v314, %v312
      %v371 = vpack.c.b16 %v317, %v315
      %v372 = vpack.c.b16 %v318, %v316
      %v373 = vpack.c.b16 %v321, %v319
      %v374 = vpack.c.b16 %v322, %v320
      %v375 = vpack.c.b16 %v325, %v323
      %v376 = vpack.c.b16 %v326, %v324
      %v377 = vpack.c.b16 %v329, %v327
      %v378 = vpack.c.b16 %v330, %v328
      %v379 = vpack.c.b16 %v333, %v331
      %v380 = vpack.c.b16 %v334, %v332
      %v381 = vpack.c.b16 %v337, %v335
      %v382 = vpack.c.b16 %v338, %v336
      %v383 = vpack.c.b16 %v341, %v339
      %v384 = vpack.c.b16 %v342, %v340
      %v385 = vpack.c.b16 %v345, %v343
      %v386 = vpack.c.b16 %v346, %v344
      %v387 = vpack.c.b16 %v349, %v347
      %v388 = vpack.c.b16 %v350, %v348
      %v389 = vpack.c.b16 %v353, %v351
      %v390 = vpack.c.b16 %v354, %v352
      %v391 = vpack.c.b16 %v357, %v355
      %v392 = vpack.c.b16 %v358, %v356
      %v393 = vpack.c.b16 %v361, %v359
      %v394 = vpack.c.b16 %v362, %v360
      %v429 = vunpack.c.l.b16 %v242
      %v430 = vunpack.c.l.b16 %v243
      %v431 = vunpack.c.l.b16 %v244
      %v432 = vunpack.c.l.b16 %v245
      %v433 = vunpack.c.l.b16 %v246
      %v434 = vunpack.c.l.b16 %v247
      %v435 = vunpack.c.l.b16 %v248
      %v436 = vunpack.c.l.b16 %v249
      %v437 = vunpack.c.l.b16 %v250
      %v438 = vunpack.c.l.b16 %v251
      %v439 = vunpack.c.l.b16 %v252
      %v440 = vunpack.c.l.b16 %v253
      %v441 = vunpack.c.l.b16 %v254
      %v442 = vunpack.c.l.b16 %v255
      %v443 = vunpack.c.l.b16 %v256
      %v444 = vunpack.c.l.b16 %v257
      %v445 = vunpack.c.l.b16 %v258
      %v446 = vunpack.c.l.b16 %v259
      %v447 = vpack.c.b16 %v430, %v429
      %v448 = vpack.c.b16 %v432, %v431
      %v449 = vpack.c.b16 %v434, %v433
      %v450 = vpack.c.b16 %v436, %v435
      %v451 = vpack.c.b16 %v438, %v437
      %v452 = vpack.c.b16 %v440, %v439
      %v453 = vpack.c.b16 %v442, %v441
      %v454 = vpack.c.b16 %v444, %v443
      %v455 = vpack.c.b16 %v446, %v445
      %vm465 = vcmask 130048
      %v467 = vsel %vm465, %v364, 0
      %v470 = vsel %vm465, %v366, 0
      %v473 = vsel %vm465, %v368, 0
      %v476 = vsel %vm465, %v370, 0
      %v479 = vsel %vm465, %v372, 0
      %v482 = vsel %vm465, %v374, 0
      %v485 = vsel %vm465, %v376, 0
      %v488 = vsel %vm465, %v378, 0
      %v491 = vsel %vm465, %v380, 0
      %v494 = vsel %vm465, %v382, 0
      %v497 = vsel %vm465, %v384, 0
      %v500 = vsel %vm465, %v386, 0
      %v503 = vsel %vm465, %v388, 0
      %v506 = vsel %vm465, %v390, 0
      %v509 = vsel %vm465, %v392, 0
      %v512 = vsel %vm465, %v394, 0
      %514 = vmatprep.subr.bf16.mxu0 0
      %515 = vmatpush1.bf16.msra.mxu0 %v447
      %516 = vmatprep.subr.bf16.mxu0 0
      %517 = vmatpush1.bf16.msra.mxu0 %v448
      %518 = vmatprep.subr.bf16.mxu0 0
      %519 = vmatpush1.bf16.msra.mxu0 %v449
      %520 = vmatprep.subr.bf16.mxu0 0
      %521 = vmatpush1.bf16.msra.mxu0 %v450
      %522 = vmatprep.subr.bf16.mxu0 0
      %523 = vmatpush1.bf16.msra.mxu0 %v451
      %524 = vmatprep.subr.bf16.mxu0 0
      %525 = vmatpush1.bf16.msra.mxu0 %v452
      %526 = vmatprep.subr.bf16.mxu0 0
      %527 = vmatpush1.bf16.msra.mxu0 %v453
      %528 = vmatprep.subr.bf16.mxu0 0
      %529 = vmatpush1.bf16.msra.mxu0 %v454
      %530 = vmatprep.subr.bf16.mxu0 0
      %531 = vmatpush1.bf16.msra.mxu0 %v455
      %532 = vmatprep.subr.bf16.mxu0 0
      %533 = vmatpush1.bf16.msra.mxu0 0
      %534 = vmatprep.subr.bf16.mxu0 0
      %535 = vmatpush1.bf16.msra.mxu0 0
      %536 = vmatprep.subr.bf16.mxu0 0
      %537 = vmatpush1.bf16.msra.mxu0 0
      %538 = vmatprep.subr.bf16.mxu0 0
      %539 = vmatpush1.bf16.msra.mxu0 0
      %540 = vmatprep.subr.bf16.mxu0 0
      %541 = vmatpush1.bf16.msra.mxu0 0
      %542 = vmatprep.subr.bf16.mxu0 0
      %543 = vmatpush1.bf16.msra.mxu0 0
      %544 = vmatprep.subr.bf16.mxu0 0
      %545 = vmatpush1.bf16.msra.mxu0 0
      %546 = vmatprep.mubr.bf16.mxu0 %v467
      %547 = vmatmul.mubr.bf16.gmra.mrb[0].mxu0 %v363
      %v548 = vpop.f32.mrb[0].mxu0
      %v549 = vadd.f32 %v265, %v548
      %v550 = vpop.f32.mrb[0].mxu0
      %v551 = vpop.f32.mrb[0].mxu0
      %v552 = vadd.f32 %v265, %v551
      %v553 = vpop.f32.mrb[0].mxu0
      %554 = vmatprep.mubr.bf16.mxu0 %v470
      %555 = vmatmul.mubr.bf16.gmra.mrb[0].mxu0 %v365
      %v556 = vpop.f32.mrb[0].mxu0
      %v557 = vadd.f32 %v265, %v556
      %v558 = vpop.f32.mrb[0].mxu0
      %v559 = vpop.f32.mrb[0].mxu0
      %v560 = vadd.f32 %v265, %v559
      %v561 = vpop.f32.mrb[0].mxu0
      %562 = vmatprep.mubr.bf16.mxu0 %v473
      %563 = vmatmul.mubr.bf16.gmra.mrb[0].mxu0 %v367
      %v564 = vpop.f32.mrb[0].mxu0
      %v565 = vadd.f32 %v265, %v564
      %v566 = vpop.f32.mrb[0].mxu0
      %v567 = vpop.f32.mrb[0].mxu0
      %v568 = vadd.f32 %v265, %v567
      %v569 = vpop.f32.mrb[0].mxu0
      %570 = vmatprep.mubr.bf16.mxu0 %v476
      %571 = vmatmul.mubr.bf16.gmra.mrb[0].mxu0 %v369
      %v572 = vpop.f32.mrb[0].mxu0
      %v573 = vadd.f32 %v265, %v572
      %v574 = vpop.f32.mrb[0].mxu0
      %v575 = vpop.f32.mrb[0].mxu0
      %v576 = vadd.f32 %v265, %v575
      %v577 = vpop.f32.mrb[0].mxu0
      %578 = vmatprep.mubr.bf16.mxu0 %v479
      %579 = vmatmul.mubr.bf16.gmra.mrb[0].mxu0 %v371
      %v580 = vpop.f32.mrb[0].mxu0
      %v581 = vadd.f32 %v265, %v580
      %v582 = vpop.f32.mrb[0].mxu0
      %v583 = vpop.f32.mrb[0].mxu0
      %v584 = vadd.f32 %v265, %v583
      %v585 = vpop.f32.mrb[0].mxu0
      %586 = vmatprep.mubr.bf16.mxu0 %v482
      %587 = vmatmul.mubr.bf16.gmra.mrb[0].mxu0 %v373
      %v588 = vpop.f32.mrb[0].mxu0
      %v589 = vadd.f32 %v265, %v588
      %v590 = vpop.f32.mrb[0].mxu0
      %v591 = vpop.f32.mrb[0].mxu0
      %v592 = vadd.f32 %v265, %v591
      %v593 = vpop.f32.mrb[0].mxu0
      %594 = vmatprep.mubr.bf16.mxu0 %v485
      %595 = vmatmul.mubr.bf16.gmra.mrb[0].mxu0 %v375
      %v596 = vpop.f32.mrb[0].mxu0
      %v597 = vadd.f32 %v265, %v596
      %v598 = vpop.f32.mrb[0].mxu0
      %v599 = vpop.f32.mrb[0].mxu0
      %v600 = vadd.f32 %v265, %v599
      %v601 = vpop.f32.mrb[0].mxu0
      %602 = vmatprep.mubr.bf16.mxu0 %v488
      %603 = vmatmul.mubr.bf16.gmra.mrb[0].mxu0 %v377
      %v604 = vpop.f32.mrb[0].mxu0
      %v605 = vadd.f32 %v265, %v604
      %v606 = vpop.f32.mrb[0].mxu0
      %v607 = vpop.f32.mrb[0].mxu0
      %v608 = vadd.f32 %v265, %v607
      %v609 = vpop.f32.mrb[0].mxu0
      %610 = vmatprep.mubr.bf16.mxu0 %v491
      %611 = vmatmul.mubr.bf16.gmra.mrb[0].mxu0 %v379
      %v612 = vpop.f32.mrb[0].mxu0
      %v613 = vadd.f32 %v265, %v612
      %v614 = vpop.f32.mrb[0].mxu0
      %v615 = vpop.f32.mrb[0].mxu0
      %v616 = vadd.f32 %v265, %v615
      %v617 = vpop.f32.mrb[0].mxu0
      %618 = vmatprep.mubr.bf16.mxu0 %v494
      %619 = vmatmul.mubr.bf16.gmra.mrb[0].mxu0 %v381
      %v620 = vpop.f32.mrb[0].mxu0
      %v621 = vadd.f32 %v265, %v620
      %v622 = vpop.f32.mrb[0].mxu0
      %v623 = vpop.f32.mrb[0].mxu0
      %v624 = vadd.f32 %v265, %v623
      %v625 = vpop.f32.mrb[0].mxu0
      %626 = vmatprep.mubr.bf16.mxu0 %v497
      %627 = vmatmul.mubr.bf16.gmra.mrb[0].mxu0 %v383
      %v628 = vpop.f32.mrb[0].mxu0
      %v629 = vadd.f32 %v265, %v628
      %v630 = vpop.f32.mrb[0].mxu0
      %v631 = vpop.f32.mrb[0].mxu0
      %v632 = vadd.f32 %v265, %v631
      %v633 = vpop.f32.mrb[0].mxu0
      %634 = vmatprep.mubr.bf16.mxu0 %v500
      %635 = vmatmul.mubr.bf16.gmra.mrb[0].mxu0 %v385
      %v636 = vpop.f32.mrb[0].mxu0
      %v637 = vadd.f32 %v265, %v636
      %v638 = vpop.f32.mrb[0].mxu0
      %v639 = vpop.f32.mrb[0].mxu0
      %v640 = vadd.f32 %v265, %v639
      %v641 = vpop.f32.mrb[0].mxu0
      %642 = vmatprep.mubr.bf16.mxu0 %v503
      %643 = vmatmul.mubr.bf16.gmra.mrb[0].mxu0 %v387
      %v644 = vpop.f32.mrb[0].mxu0
      %v645 = vadd.f32 %v265, %v644
      %v646 = vpop.f32.mrb[0].mxu0
      %v647 = vpop.f32.mrb[0].mxu0
      %v648 = vadd.f32 %v265, %v647
      %v649 = vpop.f32.mrb[0].mxu0
      %650 = vmatprep.mubr.bf16.mxu0 %v506
      %651 = vmatmul.mubr.bf16.gmra.mrb[0].mxu0 %v389
      %v652 = vpop.f32.mrb[0].mxu0
      %v653 = vadd.f32 %v265, %v652
      %v654 = vpop.f32.mrb[0].mxu0
      %v655 = vpop.f32.mrb[0].mxu0
      %v656 = vadd.f32 %v265, %v655
      %v657 = vpop.f32.mrb[0].mxu0
      %658 = vmatprep.mubr.bf16.mxu0 %v509
      %659 = vmatmul.mubr.bf16.gmra.mrb[0].mxu0 %v391
      %v660 = vpop.f32.mrb[0].mxu0
      %v661 = vadd.f32 %v265, %v660
      %v662 = vpop.f32.mrb[0].mxu0
      %v663 = vpop.f32.mrb[0].mxu0
      %v664 = vadd.f32 %v265, %v663
      %v665 = vpop.f32.mrb[0].mxu0
      %666 = vmatprep.mubr.bf16.mxu0 %v512
      %667 = vmatmul.mubr.bf16.gmra.mrb[0].mxu0 %v393
      %v668 = vpop.f32.mrb[0].mxu0
      %v669 = vadd.f32 %v265, %v668
      %v670 = vpop.f32.mrb[0].mxu0
      %v671 = vpop.f32.mrb[0].mxu0
      %v672 = vadd.f32 %v265, %v671
      %v673 = vpop.f32.mrb[0].mxu0
      %674 = vdwg.mxu0
      %v675 = vtanh.pop %v549
      %v676 = vtanh.pop %v552
      %v677 = vtanh.pop %v557
      %v678 = vtanh.pop %v560
      %v679 = vtanh.pop %v565
      %v680 = vtanh.pop %v568
      %v681 = vtanh.pop %v573
      %v682 = vtanh.pop %v576
      %v683 = vtanh.pop %v581
      %v684 = vtanh.pop %v584
      %v685 = vtanh.pop %v589
      %v686 = vtanh.pop %v592
      %v687 = vtanh.pop %v597
      %v688 = vtanh.pop %v600
      %v689 = vtanh.pop %v605
      %v690 = vtanh.pop %v608
      %v691 = vtanh.pop %v613
      %v692 = vtanh.pop %v616
      %v693 = vtanh.pop %v621
      %v694 = vtanh.pop %v624
      %v695 = vtanh.pop %v629
      %v696 = vtanh.pop %v632
      %v697 = vtanh.pop %v637
      %v698 = vtanh.pop %v640
      %v699 = vtanh.pop %v645
      %v700 = vtanh.pop %v648
      %v701 = vtanh.pop %v653
      %v702 = vtanh.pop %v656
      %v703 = vtanh.pop %v661
      %v704 = vtanh.pop %v664
      %v705 = vtanh.pop %v669
      %v706 = vtanh.pop %v672
      %707 = vst.msk [vmem:[%s175] sm:$0xff] %vm465, %v675
      %708 = vst.msk [vmem:[%s175 + $0x8] sm:$0xff] %vm465, %v676
      %709 = vst.msk [vmem:[%s175 + $0x10] sm:$0xff] %vm465, %v677
      %710 = vst.msk [vmem:[%s175 + $0x18] sm:$0xff] %vm465, %v678
      %711 = vst.msk [vmem:[%s175 + $0x20] sm:$0xff] %vm465, %v679
      %712 = vst.msk [vmem:[%s175 + $0x28] sm:$0xff] %vm465, %v680
      %713 = vst.msk [vmem:[%s175 + $0x30] sm:$0xff] %vm465, %v681
      %714 = vst.msk [vmem:[%s175 + $0x38] sm:$0xff] %vm465, %v682
      %715 = vst.msk [vmem:[%s175 + $0x40] sm:$0xff] %vm465, %v683
      %716 = vst.msk [vmem:[%s175 + $0x48] sm:$0xff] %vm465, %v684
      %717 = vst.msk [vmem:[%s175 + $0x50] sm:$0xff] %vm465, %v685
      %718 = vst.msk [vmem:[%s175 + $0x58] sm:$0xff] %vm465, %v686
      %719 = vst.msk [vmem:[%s175 + $0x60] sm:$0xff] %vm465, %v687
      %720 = vst.msk [vmem:[%s175 + $0x68] sm:$0xff] %vm465, %v688
      %721 = vst.msk [vmem:[%s175 + $0x70] sm:$0xff] %vm465, %v689
      %722 = vst.msk [vmem:[%s175 + $0x78] sm:$0xff] %vm465, %v690
      %723 = vst.msk [vmem:[%s175 + $0x80] sm:$0xff] %vm465, %v691
      %724 = vst.msk [vmem:[%s175 + $0x88] sm:$0xff] %vm465, %v692
      %725 = vst.msk [vmem:[%s175 + $0x90] sm:$0xff] %vm465, %v693
      %726 = vst.msk [vmem:[%s175 + $0x98] sm:$0xff] %vm465, %v694
      %727 = vst.msk [vmem:[%s175 + $0xa0] sm:$0xff] %vm465, %v695
      %728 = vst.msk [vmem:[%s175 + $0xa8] sm:$0xff] %vm465, %v696
      %729 = vst.msk [vmem:[%s175 + $0xb0] sm:$0xff] %vm465, %v697
      %730 = vst.msk [vmem:[%s175 + $0xb8] sm:$0xff] %vm465, %v698
      %731 = vst.msk [vmem:[%s175 + $0xc0] sm:$0xff] %vm465, %v699
      %732 = vst.msk [vmem:[%s175 + $0xc8] sm:$0xff] %vm465, %v700
      %733 = vst.msk [vmem:[%s175 + $0xd0] sm:$0xff] %vm465, %v701
      %734 = vst.msk [vmem:[%s175 + $0xd8] sm:$0xff] %vm465, %v702
      %735 = vst.msk [vmem:[%s175 + $0xe0] sm:$0xff] %vm465, %v703
      %736 = vst.msk [vmem:[%s175 + $0xe8] sm:$0xff] %vm465, %v704
      %737 = vst.msk [vmem:[%s175 + $0xf0] sm:$0xff] %vm465, %v705
      %738 = vst.msk [vmem:[%s175 + $0xf8] sm:$0xff] %vm465, %v706
      %s739 = smul.u32 32, %s14
      %p740 = scmp.lt.s32.totalorder %s739, 63
      %s741 = scalar_select %p740, %s739, 63
      %s742 = smul.addr %s741, 8
      %s743 = scalar_lea.vmem %s3, %s742
      // Predicated region
      $region33: #{_lambda_.9} parent=31 // pred_check
        %p744 = pneg %p100
      $region34: #{_lambda_.9} parent=31 // pred_check_branch
        %746 = sbr.rel (%p744) target = $region36
      $region35: #{_lambda_.9} parent=31 // pred_region
        %s747 = smul.u32 32, %s14
      $region36: #{_lambda_.9} parent=31 // pred_fallthru
        _
    $region32: #{_lambda_.9} parent=5 // pred_fallthru
      _
    %p748 = scmp.le.s32.totalorder 2, %s9
    // Predicated region
    $region37: #{_lambda_.9} parent=5 // pred_check
      %p749 = pneg %p748
    $region38: #{_lambda_.9} parent=5 // pred_check_branch
      %751 = sbr.rel (%p749) target = $region40
    $region39: #{_lambda_.9} parent=5 // pred_region
      %s752 = ssub.s32 %s9, 2
      // Predicated region
      $region41: #{_lambda_.9} parent=39 // pred_check
        %p753 = pneg %p106
      $region42: #{_lambda_.9} parent=39 // pred_check_branch
        %755 = sbr.rel (%p753) target = $region44
      $region43: #{_lambda_.9} parent=39 // pred_region
        %s756 = smul.u32 32, %s15
        %p757 = scmp.lt.s32.totalorder %s756, 63
        %s758 = scalar_select %p757, %s756, 63
        %s759 = smul.addr %s758, 8
        %s760 = scalar_lea.vmem %s3, %s759
      $region44: #{_lambda_.9} parent=39 // pred_fallthru
        _
    $region40: #{_lambda_.9} parent=5 // pred_fallthru
      _
  $region6: #{_lambda_.9} parent=0 // loop_footer
    %s13 = sadd.s32 1, %s9
  $region7: #{_lambda_.9} parent=0 // loop_footer_branch
    %8 = sbr.rel target = $region3
  $region8: #{_lambda_.9} parent=0 // loop_exit
    _

</llo_original>
